<compile_context>
chip_gen: v7x
topology: tpu7x:2x2x1
jax: 0.10.0
libtpu: 0.0.40
codegen_flags: <defaults>
</compile_context>

<pallas_src>
import functools

import jax
import jax.numpy as jnp
from jax.experimental import pallas as pl
from jax.experimental.pallas import tpu as pltpu


# ----------------------------------------------------------------------------
# Fully fused kernel: conv3x3 + ReLU + avgpool + pre_fc + PReLU + fc
# ----------------------------------------------------------------------------
def fused_imagecnn_kernel(x_ref, wc_ref, bc_ref, w1_ref, b1_ref,
                          w2_ref, b2_ref, a_ref, o_ref):
    # x_ref : (1, H+2, W+2, Cin)  bf16  zero-padded NHWC image (SAME, 3x3)
    # wc_ref: (9, Cin, Cp)        bf16  conv taps, Cout zero-padded to Cp
    # bc_ref: (1, Cp)             f32   conv bias (zero-padded)
    # w1_ref: (Cp, Cp), b1_ref: (1, Cp) f32 pre_fc (zero-padded rows/cols)
    # w2_ref: (Cp, D),  b2_ref: (1, D)  f32 fc (zero-padded rows)
    # a_ref : (1, 1)  SMEM        f32   PReLU alpha
    # o_ref : (1, 8, D)           f32   output row replicated over 8 sublanes
    hp, wp, cin = x_ref.shape[1], x_ref.shape[2], x_ref.shape[3]
    h, w = hp - 2, wp - 2
    cp = wc_ref.shape[2]

    xb = x_ref[0]                                     # (H+2, W+2, Cin) bf16
    acc = jnp.zeros((h * w, cp), jnp.float32)
    for ky in range(3):                               # 9 shifted taps -> 9 MXU dots
        for kx in range(3):
            patch = xb[ky:ky + h, kx:kx + w, :].reshape(h * w, cin)
            acc = acc + jnp.dot(patch, wc_ref[ky * 3 + kx],
                                preferred_element_type=jnp.float32)

    feat = jnp.maximum(acc + bc_ref[...], 0.0)        # conv bias + ReLU
    # AdaptiveAvgPool2d(1) + flatten(1): reduce spatial positions inside VMEM.
    pooled = jnp.sum(feat, axis=0, keepdims=True) * (1.0 / (h * w))   # (1, Cp)

    hv = jnp.dot(pooled, w1_ref[...],
                 preferred_element_type=jnp.float32) + b1_ref[...]    # pre_fc
    alpha = a_ref[0, 0]
    hv = jnp.where(hv >= 0.0, hv, alpha * hv)         # PReLU (single shared param)
    # TODO(synk): dropout is implemented as eval-mode identity (deterministic fwd).
    out = jnp.dot(hv, w2_ref[...],
                  preferred_element_type=jnp.float32) + b2_ref[...]   # fc  (1, D)
    o_ref[...] = jnp.broadcast_to(out[:, None, :], o_ref.shape).astype(o_ref.dtype)


def _round_up(x, m):
    return ((x + m - 1) // m) * m


@jax.jit
def image_cnn_forward(x, params):
    """x: (N, Cin, H, W) float32 NCHW. Returns (N, output_dim) float32."""
    n, cin, h, w = x.shape
    inter_dim = params["conv_w"].shape[0]
    out_dim = params["w2"].shape[1]
    cp = _round_up(inter_dim, 128)                    # lane-dense channel dim

    # NCHW -> NHWC, SAME pad for 3x3, bf16 at the kernel boundary.
    x_pad = jnp.pad(jnp.transpose(x, (0, 2, 3, 1)),
                    ((0, 0), (1, 1), (1, 1), (0, 0))).astype(jnp.bfloat16)

    # Conv weight (Cout, Cin, 3, 3) -> 9 taps (9, Cin, Cp), zero-padded, bf16.
    wc = jnp.transpose(params["conv_w"], (2, 3, 1, 0)).reshape(9, cin, inter_dim)
    wc = jnp.pad(wc, ((0, 0), (0, 0), (0, cp - inter_dim))).astype(jnp.bfloat16)
    bc = jnp.pad(params["conv_b"], (0, cp - inter_dim)).reshape(1, cp)

    # Head params, zero-padded so padded channels contribute exactly zero.
    w1 = jnp.pad(params["w1"], ((0, cp - inter_dim), (0, cp - inter_dim)))
    b1 = jnp.pad(params["b1"], (0, cp - inter_dim)).reshape(1, cp)
    w2 = jnp.pad(params["w2"], ((0, cp - inter_dim), (0, 0)))
    b2 = params["b2"].reshape(1, out_dim)
    alpha = params["prelu_a"].reshape(1, 1)

    flops = n * (2 * h * w * 9 * cin * cp + 2 * cp * cp + 2 * cp * out_dim)
    bytes_accessed = (x_pad.size * 2 + wc.size * 2
                      + (bc.size + w1.size + b1.size + w2.size + b2.size + alpha.size) * 4
                      + n * 8 * out_dim * 4)

    out = pl.pallas_call(
        fused_imagecnn_kernel,
        out_shape=jax.ShapeDtypeStruct((n, 8, out_dim), jnp.float32),
        grid=(n,),
        in_specs=[
            pl.BlockSpec((1, h + 2, w + 2, cin), lambda i: (i, 0, 0, 0)),
            pl.BlockSpec((9, cin, cp), lambda i: (0, 0, 0)),
            pl.BlockSpec((1, cp), lambda i: (0, 0)),
            pl.BlockSpec((cp, cp), lambda i: (0, 0)),
            pl.BlockSpec((1, cp), lambda i: (0, 0)),
            pl.BlockSpec((cp, out_dim), lambda i: (0, 0)),
            pl.BlockSpec((1, out_dim), lambda i: (0, 0)),
            pl.BlockSpec(memory_space=pltpu.MemorySpace.SMEM),   # PReLU alpha
        ],
        out_specs=pl.BlockSpec((1, 8, out_dim), lambda i: (i, 0, 0)),
        compiler_params=pltpu.CompilerParams(
            dimension_semantics=("parallel",)),
        cost_estimate=pl.CostEstimate(
            flops=flops, transcendentals=0, bytes_accessed=bytes_accessed),
    )(x_pad, wc, bc, w1, b1, w2, b2, alpha)

    return out[:, 0, :]                               # drop sublane replication


# ----------------------------------------------------------------------------
# Parameters + pure-JAX reference (for a sanity check)
# ----------------------------------------------------------------------------
def init_params(key, c_in, inter_dim, output_dim):
    ks = jax.random.split(key, 6)
    scale = 0.05
    return dict(
        conv_w=scale * jax.random.normal(ks[0], (inter_dim, c_in, 3, 3), jnp.float32),
        conv_b=scale * jax.random.normal(ks[1], (inter_dim,), jnp.float32),
        w1=scale * jax.random.normal(ks[2], (inter_dim, inter_dim), jnp.float32),
        b1=scale * jax.random.normal(ks[3], (inter_dim,), jnp.float32),
        w2=scale * jax.random.normal(ks[4], (inter_dim, output_dim), jnp.float32),
        b2=scale * jax.random.normal(ks[5], (output_dim,), jnp.float32),
        prelu_a=jnp.array([[0.25]], jnp.float32),     # nn.PReLU() default init
    )


def reference_forward(x, params):
    # Same bf16 rounding of the conv inputs as the kernel, rest in f32.
    xb = x.astype(jnp.bfloat16).astype(jnp.float32)
    wb = params["conv_w"].astype(jnp.bfloat16).astype(jnp.float32)
    feat = jax.lax.conv_general_dilated(
        xb, wb, window_strides=(1, 1), padding="SAME",
        dimension_numbers=("NCHW", "OIHW", "NCHW"))
    feat = jnp.maximum(feat + params["conv_b"][None, :, None, None], 0.0)
    pooled = feat.mean(axis=(2, 3))                   # avgpool(1) + flatten
    hv = pooled @ params["w1"] + params["b1"]
    a = params["prelu_a"][0, 0]
    hv = jnp.where(hv >= 0.0, hv, a * hv)
    return hv @ params["w2"] + params["b2"]


if __name__ == "__main__":
    N, C_IN, H, W = 2, 4, 16, 16
    INTER_DIM, OUTPUT_DIM = 32, 8

    key = jax.random.PRNGKey(0)
    k_x, k_p = jax.random.split(key)
    x = jax.random.normal(k_x, (N, C_IN, H, W), jnp.float32)
    params = init_params(k_p, C_IN, INTER_DIM, OUTPUT_DIM)

    out = image_cnn_forward(x, params)
    jax.block_until_ready(out)
    assert out.shape == (N, OUTPUT_DIM), out.shape

    ref = reference_forward(x, params)
    assert jnp.allclose(out, ref, rtol=1e-2, atol=1e-3), (
        "mismatch vs reference", jnp.max(jnp.abs(out - ref)))

    print("KERNEL_OK")
</pallas_src>

<mosaic_0001>
module attributes {stable_mosaic.version = 11 : i64} {
  func.func @fused_imagecnn_kernel(%arg0: i32, %arg1: memref<1x18x18x4xbf16, #tpu.memory_space<vmem>>, %arg2: memref<9x4x128xbf16, #tpu.memory_space<vmem>>, %arg3: memref<1x128xf32, #tpu.memory_space<vmem>>, %arg4: memref<128x128xf32, #tpu.memory_space<vmem>>, %arg5: memref<1x128xf32, #tpu.memory_space<vmem>>, %arg6: memref<128x8xf32, #tpu.memory_space<vmem>>, %arg7: memref<1x8xf32, #tpu.memory_space<vmem>>, %arg8: memref<1x1xf32, #tpu.memory_space<smem>>, %arg9: memref<1x8x8xf32, #tpu.memory_space<vmem>>) attributes {dimension_semantics = [#tpu.dimension_semantics<parallel>], iteration_bounds = array<i64: 2>, scalar_prefetch = 0 : i64, scratch_operands = 0 : i64, tpu.core_type = #tpu.core_type<tc>, window_params = [{transform_indices = @transform_0, window_bounds = array<i64: 1, 18, 18, 4>}, {pipeline_mode = #tpu.pipeline_mode<synchronous>, transform_indices = @transform_1, window_bounds = array<i64: 9, 4, 128>}, {pipeline_mode = #tpu.pipeline_mode<synchronous>, transform_indices = @transform_2, window_bounds = array<i64: 1, 128>}, {pipeline_mode = #tpu.pipeline_mode<synchronous>, transform_indices = @transform_3, window_bounds = array<i64: 128, 128>}, {pipeline_mode = #tpu.pipeline_mode<synchronous>, transform_indices = @transform_4, window_bounds = array<i64: 1, 128>}, {pipeline_mode = #tpu.pipeline_mode<synchronous>, transform_indices = @transform_5, window_bounds = array<i64: 128, 8>}, {pipeline_mode = #tpu.pipeline_mode<synchronous>, transform_indices = @transform_6, window_bounds = array<i64: 1, 8>}, {transform_indices = @transform_7, window_bounds = array<i64: 1, 1>}, {transform_indices = @transform_8, window_bounds = array<i64: 1, 8, 8>}]} {
    %c0 = arith.constant 0 : index
    %c0_0 = arith.constant 0 : index
    %c0_1 = arith.constant 0 : index
    %c0_2 = arith.constant 0 : index
    %0 = vector.load %arg1[%c0, %c0_0, %c0_1, %c0_2] : memref<1x18x18x4xbf16, #tpu.memory_space<vmem>>, vector<1x18x18x4xbf16>
    %1 = vector.shape_cast %0 : vector<1x18x18x4xbf16> to vector<18x18x4xbf16>
    %cst = arith.constant 0.000000e+00 : f32
    %2 = vector.broadcast %cst : f32 to vector<256x128xf32>
    %3 = vector.extract_strided_slice %1 {offsets = [0, 0, 0], sizes = [16, 16, 4], strides = [1, 1, 1]} : vector<18x18x4xbf16> to vector<16x16x4xbf16>
    %4 = vector.shape_cast %3 : vector<16x16x4xbf16> to vector<256x4xbf16>
    %c0_3 = arith.constant 0 : index
    %c0_4 = arith.constant 0 : index
    %c0_5 = arith.constant 0 : index
    %5 = vector.load %arg2[%c0_3, %c0_4, %c0_5] : memref<9x4x128xbf16, #tpu.memory_space<vmem>>, vector<1x4x128xbf16>
    %6 = vector.shape_cast %5 : vector<1x4x128xbf16> to vector<4x128xbf16>
    %cst_6 = arith.constant dense<0.000000e+00> : vector<256x128xf32>
    %7 = tpu.matmul %4, %6, %cst_6 {dimension_numbers = #tpu.dot_dimension_numbers<[1], [0], [0], [1], [0, 0, 1, 1], [], []>} : vector<256x4xbf16>, vector<4x128xbf16>, vector<256x128xf32> -> vector<256x128xf32>
    %8 = arith.addf %2, %7 : vector<256x128xf32>
    %9 = vector.extract_strided_slice %1 {offsets = [0, 1, 0], sizes = [16, 16, 4], strides = [1, 1, 1]} : vector<18x18x4xbf16> to vector<16x16x4xbf16>
    %10 = vector.shape_cast %9 : vector<16x16x4xbf16> to vector<256x4xbf16>
    %c1 = arith.constant 1 : index
    %c0_7 = arith.constant 0 : index
    %c0_8 = arith.constant 0 : index
    %11 = vector.load %arg2[%c1, %c0_7, %c0_8] : memref<9x4x128xbf16, #tpu.memory_space<vmem>>, vector<1x4x128xbf16>
    %12 = vector.shape_cast %11 : vector<1x4x128xbf16> to vector<4x128xbf16>
    %cst_9 = arith.constant dense<0.000000e+00> : vector<256x128xf32>
    %13 = tpu.matmul %10, %12, %cst_9 {dimension_numbers = #tpu.dot_dimension_numbers<[1], [0], [0], [1], [0, 0, 1, 1], [], []>} : vector<256x4xbf16>, vector<4x128xbf16>, vector<256x128xf32> -> vector<256x128xf32>
    %14 = arith.addf %8, %13 : vector<256x128xf32>
    %15 = vector.extract_strided_slice %1 {offsets = [0, 2, 0], sizes = [16, 16, 4], strides = [1, 1, 1]} : vector<18x18x4xbf16> to vector<16x16x4xbf16>
    %16 = vector.shape_cast %15 : vector<16x16x4xbf16> to vector<256x4xbf16>
    %c2 = arith.constant 2 : index
    %c0_10 = arith.constant 0 : index
    %c0_11 = arith.constant 0 : index
    %17 = vector.load %arg2[%c2, %c0_10, %c0_11] : memref<9x4x128xbf16, #tpu.memory_space<vmem>>, vector<1x4x128xbf16>
    %18 = vector.shape_cast %17 : vector<1x4x128xbf16> to vector<4x128xbf16>
    %cst_12 = arith.constant dense<0.000000e+00> : vector<256x128xf32>
    %19 = tpu.matmul %16, %18, %cst_12 {dimension_numbers = #tpu.dot_dimension_numbers<[1], [0], [0], [1], [0, 0, 1, 1], [], []>} : vector<256x4xbf16>, vector<4x128xbf16>, vector<256x128xf32> -> vector<256x128xf32>
    %20 = arith.addf %14, %19 : vector<256x128xf32>
    %21 = vector.extract_strided_slice %1 {offsets = [1, 0, 0], sizes = [16, 16, 4], strides = [1, 1, 1]} : vector<18x18x4xbf16> to vector<16x16x4xbf16>
    %22 = vector.shape_cast %21 : vector<16x16x4xbf16> to vector<256x4xbf16>
    %c3 = arith.constant 3 : index
    %c0_13 = arith.constant 0 : index
    %c0_14 = arith.constant 0 : index
    %23 = vector.load %arg2[%c3, %c0_13, %c0_14] : memref<9x4x128xbf16, #tpu.memory_space<vmem>>, vector<1x4x128xbf16>
    %24 = vector.shape_cast %23 : vector<1x4x128xbf16> to vector<4x128xbf16>
    %cst_15 = arith.constant dense<0.000000e+00> : vector<256x128xf32>
    %25 = tpu.matmul %22, %24, %cst_15 {dimension_numbers = #tpu.dot_dimension_numbers<[1], [0], [0], [1], [0, 0, 1, 1], [], []>} : vector<256x4xbf16>, vector<4x128xbf16>, vector<256x128xf32> -> vector<256x128xf32>
    %26 = arith.addf %20, %25 : vector<256x128xf32>
    %27 = vector.extract_strided_slice %1 {offsets = [1, 1, 0], sizes = [16, 16, 4], strides = [1, 1, 1]} : vector<18x18x4xbf16> to vector<16x16x4xbf16>
    %28 = vector.shape_cast %27 : vector<16x16x4xbf16> to vector<256x4xbf16>
    %c4 = arith.constant 4 : index
    %c0_16 = arith.constant 0 : index
    %c0_17 = arith.constant 0 : index
    %29 = vector.load %arg2[%c4, %c0_16, %c0_17] : memref<9x4x128xbf16, #tpu.memory_space<vmem>>, vector<1x4x128xbf16>
    %30 = vector.shape_cast %29 : vector<1x4x128xbf16> to vector<4x128xbf16>
    %cst_18 = arith.constant dense<0.000000e+00> : vector<256x128xf32>
    %31 = tpu.matmul %28, %30, %cst_18 {dimension_numbers = #tpu.dot_dimension_numbers<[1], [0], [0], [1], [0, 0, 1, 1], [], []>} : vector<256x4xbf16>, vector<4x128xbf16>, vector<256x128xf32> -> vector<256x128xf32>
    %32 = arith.addf %26, %31 : vector<256x128xf32>
    %33 = vector.extract_strided_slice %1 {offsets = [1, 2, 0], sizes = [16, 16, 4], strides = [1, 1, 1]} : vector<18x18x4xbf16> to vector<16x16x4xbf16>
    %34 = vector.shape_cast %33 : vector<16x16x4xbf16> to vector<256x4xbf16>
    %c5 = arith.constant 5 : index
    %c0_19 = arith.constant 0 : index
    %c0_20 = arith.constant 0 : index
    %35 = vector.load %arg2[%c5, %c0_19, %c0_20] : memref<9x4x128xbf16, #tpu.memory_space<vmem>>, vector<1x4x128xbf16>
    %36 = vector.shape_cast %35 : vector<1x4x128xbf16> to vector<4x128xbf16>
    %cst_21 = arith.constant dense<0.000000e+00> : vector<256x128xf32>
    %37 = tpu.matmul %34, %36, %cst_21 {dimension_numbers = #tpu.dot_dimension_numbers<[1], [0], [0], [1], [0, 0, 1, 1], [], []>} : vector<256x4xbf16>, vector<4x128xbf16>, vector<256x128xf32> -> vector<256x128xf32>
    %38 = arith.addf %32, %37 : vector<256x128xf32>
    %39 = vector.extract_strided_slice %1 {offsets = [2, 0, 0], sizes = [16, 16, 4], strides = [1, 1, 1]} : vector<18x18x4xbf16> to vector<16x16x4xbf16>
    %40 = vector.shape_cast %39 : vector<16x16x4xbf16> to vector<256x4xbf16>
    %c6 = arith.constant 6 : index
    %c0_22 = arith.constant 0 : index
    %c0_23 = arith.constant 0 : index
    %41 = vector.load %arg2[%c6, %c0_22, %c0_23] : memref<9x4x128xbf16, #tpu.memory_space<vmem>>, vector<1x4x128xbf16>
    %42 = vector.shape_cast %41 : vector<1x4x128xbf16> to vector<4x128xbf16>
    %cst_24 = arith.constant dense<0.000000e+00> : vector<256x128xf32>
    %43 = tpu.matmul %40, %42, %cst_24 {dimension_numbers = #tpu.dot_dimension_numbers<[1], [0], [0], [1], [0, 0, 1, 1], [], []>} : vector<256x4xbf16>, vector<4x128xbf16>, vector<256x128xf32> -> vector<256x128xf32>
    %44 = arith.addf %38, %43 : vector<256x128xf32>
    %45 = vector.extract_strided_slice %1 {offsets = [2, 1, 0], sizes = [16, 16, 4], strides = [1, 1, 1]} : vector<18x18x4xbf16> to vector<16x16x4xbf16>
    %46 = vector.shape_cast %45 : vector<16x16x4xbf16> to vector<256x4xbf16>
    %c7 = arith.constant 7 : index
    %c0_25 = arith.constant 0 : index
    %c0_26 = arith.constant 0 : index
    %47 = vector.load %arg2[%c7, %c0_25, %c0_26] : memref<9x4x128xbf16, #tpu.memory_space<vmem>>, vector<1x4x128xbf16>
    %48 = vector.shape_cast %47 : vector<1x4x128xbf16> to vector<4x128xbf16>
    %cst_27 = arith.constant dense<0.000000e+00> : vector<256x128xf32>
    %49 = tpu.matmul %46, %48, %cst_27 {dimension_numbers = #tpu.dot_dimension_numbers<[1], [0], [0], [1], [0, 0, 1, 1], [], []>} : vector<256x4xbf16>, vector<4x128xbf16>, vector<256x128xf32> -> vector<256x128xf32>
    %50 = arith.addf %44, %49 : vector<256x128xf32>
    %51 = vector.extract_strided_slice %1 {offsets = [2, 2, 0], sizes = [16, 16, 4], strides = [1, 1, 1]} : vector<18x18x4xbf16> to vector<16x16x4xbf16>
    %52 = vector.shape_cast %51 : vector<16x16x4xbf16> to vector<256x4xbf16>
    %c8 = arith.constant 8 : index
    %c0_28 = arith.constant 0 : index
    %c0_29 = arith.constant 0 : index
    %53 = vector.load %arg2[%c8, %c0_28, %c0_29] : memref<9x4x128xbf16, #tpu.memory_space<vmem>>, vector<1x4x128xbf16>
    %54 = vector.shape_cast %53 : vector<1x4x128xbf16> to vector<4x128xbf16>
    %cst_30 = arith.constant dense<0.000000e+00> : vector<256x128xf32>
    %55 = tpu.matmul %52, %54, %cst_30 {dimension_numbers = #tpu.dot_dimension_numbers<[1], [0], [0], [1], [0, 0, 1, 1], [], []>} : vector<256x4xbf16>, vector<4x128xbf16>, vector<256x128xf32> -> vector<256x128xf32>
    %56 = arith.addf %50, %55 : vector<256x128xf32>
    %c0_31 = arith.constant 0 : index
    %c0_32 = arith.constant 0 : index
    %57 = vector.load %arg3[%c0_31, %c0_32] : memref<1x128xf32, #tpu.memory_space<vmem>>, vector<1x128xf32>
    %58 = vector.broadcast %57 : vector<1x128xf32> to vector<256x128xf32>
    %59 = arith.addf %56, %58 : vector<256x128xf32>
    %cst_33 = arith.constant 0.000000e+00 : f32
    %60 = vector.broadcast %cst_33 : f32 to vector<256x128xf32>
    %61 = arith.maximumf %59, %60 : vector<256x128xf32>
    %cst_34 = arith.constant dense<0.000000e+00> : vector<128xf32>
    %62 = vector.multi_reduction <add>, %61, %cst_34 [0] : vector<256x128xf32> to vector<128xf32>
    %63 = vector.shape_cast %62 : vector<128xf32> to vector<1x128xf32>
    %cst_35 = arith.constant 3.906250e-03 : f32
    %64 = vector.broadcast %cst_35 : f32 to vector<1x128xf32>
    %65 = arith.mulf %63, %64 : vector<1x128xf32>
    %c0_36 = arith.constant 0 : index
    %c0_37 = arith.constant 0 : index
    %66 = vector.load %arg4[%c0_36, %c0_37] : memref<128x128xf32, #tpu.memory_space<vmem>>, vector<128x128xf32>
    %cst_38 = arith.constant dense<0.000000e+00> : vector<1x128xf32>
    %67 = tpu.matmul %65, %66, %cst_38 {dimension_numbers = #tpu.dot_dimension_numbers<[1], [0], [0], [1], [0, 0, 1, 1], [], []>} : vector<1x128xf32>, vector<128x128xf32>, vector<1x128xf32> -> vector<1x128xf32>
    %c0_39 = arith.constant 0 : index
    %c0_40 = arith.constant 0 : index
    %68 = vector.load %arg5[%c0_39, %c0_40] : memref<1x128xf32, #tpu.memory_space<vmem>>, vector<1x128xf32>
    %69 = arith.addf %67, %68 : vector<1x128xf32>
    %c0_41 = arith.constant 0 : index
    %c0_42 = arith.constant 0 : index
    %70 = memref.load %arg8[%c0_41, %c0_42] : memref<1x1xf32, #tpu.memory_space<smem>>
    %cst_43 = arith.constant 0.000000e+00 : f32
    %71 = vector.broadcast %cst_43 : f32 to vector<1x128xf32>
    %72 = arith.cmpf oge, %69, %71 : vector<1x128xf32>
    %73 = vector.broadcast %70 : f32 to vector<1x128xf32>
    %74 = arith.mulf %73, %69 : vector<1x128xf32>
    %75 = arith.select %72, %69, %74 : vector<1x128xi1>, vector<1x128xf32>
    %c0_44 = arith.constant 0 : index
    %c0_45 = arith.constant 0 : index
    %76 = vector.load %arg6[%c0_44, %c0_45] : memref<128x8xf32, #tpu.memory_space<vmem>>, vector<128x8xf32>
    %cst_46 = arith.constant dense<0.000000e+00> : vector<1x8xf32>
    %77 = tpu.matmul %75, %76, %cst_46 {dimension_numbers = #tpu.dot_dimension_numbers<[1], [0], [0], [1], [0, 0, 1, 1], [], []>} : vector<1x128xf32>, vector<128x8xf32>, vector<1x8xf32> -> vector<1x8xf32>
    %c0_47 = arith.constant 0 : index
    %c0_48 = arith.constant 0 : index
    %78 = vector.load %arg7[%c0_47, %c0_48] : memref<1x8xf32, #tpu.memory_space<vmem>>, vector<1x8xf32>
    %79 = arith.addf %77, %78 : vector<1x8xf32>
    %80 = vector.shape_cast %79 : vector<1x8xf32> to vector<1x1x8xf32>
    %81 = vector.shape_cast %80 : vector<1x1x8xf32> to vector<1x1x8xf32>
    %82 = vector.broadcast %81 : vector<1x1x8xf32> to vector<1x8x8xf32>
    %c0_49 = arith.constant 0 : index
    %c0_50 = arith.constant 0 : index
    %c0_51 = arith.constant 0 : index
    %83 = vector.load %arg9[%c0_49, %c0_50, %c0_51] : memref<1x8x8xf32, #tpu.memory_space<vmem>>, vector<1x8x8xf32>
    tpu.vector_store %arg9[%c0_49, %c0_50, %c0_51], %82 {strides = array<i32>} : memref<1x8x8xf32, #tpu.memory_space<vmem>>, vector<1x8x8xf32>,
    return
  }
  func.func @transform_0(%arg0: i32) -> (i32, i32, i32, i32) {
    %c0_i32 = arith.constant 0 : i32
    %c0_i32_0 = arith.constant 0 : i32
    %c0_i32_1 = arith.constant 0 : i32
    %c0_i32_2 = arith.constant 0 : i32
    return %arg0, %c0_i32, %c0_i32_0, %c0_i32_1 : i32, i32, i32, i32
  }
  func.func @transform_1(%arg0: i32) -> (i32, i32, i32) {
    %c0_i32 = arith.constant 0 : i32
    %c0_i32_0 = arith.constant 0 : i32
    %c0_i32_1 = arith.constant 0 : i32
    %c0_i32_2 = arith.constant 0 : i32
    return %c0_i32, %c0_i32_0, %c0_i32_1 : i32, i32, i32
  }
  func.func @transform_2(%arg0: i32) -> (i32, i32) {
    %c0_i32 = arith.constant 0 : i32
    %c0_i32_0 = arith.constant 0 : i32
    %c0_i32_1 = arith.constant 0 : i32
    return %c0_i32, %c0_i32_0 : i32, i32
  }
  func.func @transform_3(%arg0: i32) -> (i32, i32) {
    %c0_i32 = arith.constant 0 : i32
    %c0_i32_0 = arith.constant 0 : i32
    %c0_i32_1 = arith.constant 0 : i32
    return %c0_i32, %c0_i32_0 : i32, i32
  }
  func.func @transform_4(%arg0: i32) -> (i32, i32) {
    %c0_i32 = arith.constant 0 : i32
    %c0_i32_0 = arith.constant 0 : i32
    %c0_i32_1 = arith.constant 0 : i32
    return %c0_i32, %c0_i32_0 : i32, i32
  }
  func.func @transform_5(%arg0: i32) -> (i32, i32) {
    %c0_i32 = arith.constant 0 : i32
    %c0_i32_0 = arith.constant 0 : i32
    %c0_i32_1 = arith.constant 0 : i32
    return %c0_i32, %c0_i32_0 : i32, i32
  }
  func.func @transform_6(%arg0: i32) -> (i32, i32) {
    %c0_i32 = arith.constant 0 : i32
    %c0_i32_0 = arith.constant 0 : i32
    %c0_i32_1 = arith.constant 0 : i32
    return %c0_i32, %c0_i32_0 : i32, i32
  }
  func.func @transform_7(%arg0: i32) -> (i32, i32) {
    %c0_i32 = arith.constant 0 : i32
    %c0_i32_0 = arith.constant 0 : i32
    %c0_i32_1 = arith.constant 0 : i32
    return %c0_i32, %c0_i32_0 : i32, i32
  }
  func.func @transform_8(%arg0: i32) -> (i32, i32, i32) {
    %c0_i32 = arith.constant 0 : i32
    %c0_i32_0 = arith.constant 0 : i32
    %c0_i32_1 = arith.constant 0 : i32
    return %arg0, %c0_i32, %c0_i32_0 : i32, i32, i32
  }
}

</mosaic_0001>

<llo_original>
// kernel: image_cnn_forward.1
$region0: #{image_cnn_forward.1}
  #allocation0 [shape = 'u32[]', space=smem, size = 0x4, offset = 0x4, fixed_abs, tag = 'smem constant byte address 0x4 - core index']
  #allocation1 [shape = 'u32[144,128]{1,0:T(1,128)}', space=vmem, size = 0x12000, scoped, tag = 'internal scratch']
  #allocation2 [shape = 'f32[1,1]{1,0:T(1,128)S(6)}', space=smem, size = 0x200, scoped, tag = 'scoped memory for image_cnn_forward.1']
  %s0 = inlined_call_operand.vmem [shape: bf16[2,18,18,4], index: 0, kind: input, shape index: {}]
  %s1 = inlined_call_operand.vmem [shape: bf16[9,4,128], index: 1, kind: input, shape index: {}]
  %s2 = inlined_call_operand.vmem [shape: f32[1,128], index: 2, kind: input, shape index: {}]
  %s3 = inlined_call_operand.vmem [shape: f32[128,128], index: 3, kind: input, shape index: {}]
  %s4 = inlined_call_operand.vmem [shape: f32[1,128], index: 4, kind: input, shape index: {}]
  %s5 = inlined_call_operand.vmem [shape: f32[128,8], index: 5, kind: input, shape index: {}]
  %s6 = inlined_call_operand.vmem [shape: f32[1,8], index: 6, kind: input, shape index: {}]
  %s7 = inlined_call_operand.<no memory space> [shape: f32[1,1], index: 7, kind: input, shape index: {}]
  %s8 = inlined_call_operand.vmem [shape: f32[2,8,8], index: 8, kind: output, shape index: {}]
  %s9 = sld [smem:[#allocation0]]
  $region65: #{image_cnn_forward.1} parent=0
    _
  %s11 = ssub.s32 1, %s9
  %s12 = scalar_select 0, %s11, %s9
  %13 = sst [smem:[#allocation2]] %s7
  loop: start=0, step=1, limit=4
  $region2: #{image_cnn_forward.1} parent=0 // loop_pre_header
    _
  $region3: #{image_cnn_forward.1} parent=0 // loop_header
    %s15 = sphi 0, %s19
    %p16 = scmp.ge.s32.totalorder %s15, 4
    %s25 = sphi 0, %s27
    %s28 = sphi 0, %s25
    %s29 = sphi 0, %s28
    %s45 = sphi 0, %s29
    %s49 = sphi 0, %s49
    %s51 = sphi 0, %s49
    %s52 = sphi 0, %s51
    %s66 = sphi 0, %s52
    %s70 = sphi 0, %s70
    %s72 = sphi 0, %s70
    %s73 = sphi 0, %s72
    %s87 = sphi 0, %s73
    %s91 = sphi 0, %s91
    %s93 = sphi 0, %s91
    %s94 = sphi 0, %s93
    %s108 = sphi 0, %s94
    %s112 = sphi 0, %s112
    %s114 = sphi 0, %s112
    %s115 = sphi 0, %s114
    %s129 = sphi 0, %s115
    %s133 = sphi 0, %s133
    %s135 = sphi 0, %s133
    %s136 = sphi 0, %s135
    %s150 = sphi 0, %s136
    %s154 = sphi 0, %s154
    %s156 = sphi 0, %s154
    %s157 = sphi 0, %s156
    %s171 = sphi 0, %s157
    %s175 = sphi 0, %s175
    %s177 = sphi 0, %s175
    %s178 = sphi 0, %s177
    %s192 = sphi 0, %s178
    %s198 = sphi 0, %s200
    %s201 = sphi 0, %s198
    %s202 = sphi 0, %s201
    %s218 = sphi 0, %s202
  $region4: #{image_cnn_forward.1} parent=0 // loop_header_branch
    %18 = sbr.rel (%p16) target = $region8
  $region5: #{image_cnn_forward.1} parent=0 // loop_body
    %s20 = ssub.s32 %s15, 1
    %s21 = ssub.s32 %s15, 2
    %s22 = sadd.s32 %s15, 1
    %s23 = ssub.s32 %s15, %s22
    %p24 = scmp.eq.s32.totalorder %s23, 0
    %s26 = sadd.s32 %s25, 1
    %s27 = scalar_select %p24, %s25, %s26
    %p30 = pneg %p24
    %p31 = scmp.eq.s32.totalorder %s15, 1
    %p32 = por %p30, %p31
    %p33 = scmp.ne.s32.totalorder %s25, %s28
    %p34 = scmp.eq.s32.totalorder %s15, 0
    %p35 = por %p33, %p34
    %p36 = scmp.ne.s32.totalorder %s25, %s28
    %p37 = scmp.eq.s32.totalorder %s20, 1
    %p38 = por %p36, %p37
    %p39 = scmp.ne.s32.totalorder %s28, %s29
    %p40 = scmp.eq.s32.totalorder %s20, 0
    %p41 = por %p39, %p40
    %p42 = scmp.ne.s32.totalorder %s28, %s29
    %p43 = scmp.eq.s32.totalorder %s21, 1
    %p44 = por %p42, %p43
    %p46 = scmp.ne.s32.totalorder %s29, %s45
    %p47 = scmp.eq.s32.totalorder %s21, 0
    %p48 = por %p46, %p47
    %s50 = sadd.s32 %s49, 1
    %p53 = scmp.eq.s32.totalorder %s15, 1
    %p54 = scmp.ne.s32.totalorder %s49, %s51
    %p55 = scmp.eq.s32.totalorder %s15, 0
    %p56 = por %p54, %p55
    %p57 = scmp.ne.s32.totalorder %s49, %s51
    %p58 = scmp.eq.s32.totalorder %s20, 1
    %p59 = por %p57, %p58
    %p60 = scmp.ne.s32.totalorder %s51, %s52
    %p61 = scmp.eq.s32.totalorder %s20, 0
    %p62 = por %p60, %p61
    %p63 = scmp.ne.s32.totalorder %s51, %s52
    %p64 = scmp.eq.s32.totalorder %s21, 1
    %p65 = por %p63, %p64
    %p67 = scmp.ne.s32.totalorder %s52, %s66
    %p68 = scmp.eq.s32.totalorder %s21, 0
    %p69 = por %p67, %p68
    %s71 = sadd.s32 %s70, 1
    %p74 = scmp.eq.s32.totalorder %s15, 1
    %p75 = scmp.ne.s32.totalorder %s70, %s72
    %p76 = scmp.eq.s32.totalorder %s15, 0
    %p77 = por %p75, %p76
    %p78 = scmp.ne.s32.totalorder %s70, %s72
    %p79 = scmp.eq.s32.totalorder %s20, 1
    %p80 = por %p78, %p79
    %p81 = scmp.ne.s32.totalorder %s72, %s73
    %p82 = scmp.eq.s32.totalorder %s20, 0
    %p83 = por %p81, %p82
    %p84 = scmp.ne.s32.totalorder %s72, %s73
    %p85 = scmp.eq.s32.totalorder %s21, 1
    %p86 = por %p84, %p85
    %p88 = scmp.ne.s32.totalorder %s73, %s87
    %p89 = scmp.eq.s32.totalorder %s21, 0
    %p90 = por %p88, %p89
    %s92 = sadd.s32 %s91, 1
    %p95 = scmp.eq.s32.totalorder %s15, 1
    %p96 = scmp.ne.s32.totalorder %s91, %s93
    %p97 = scmp.eq.s32.totalorder %s15, 0
    %p98 = por %p96, %p97
    %p99 = scmp.ne.s32.totalorder %s91, %s93
    %p100 = scmp.eq.s32.totalorder %s20, 1
    %p101 = por %p99, %p100
    %p102 = scmp.ne.s32.totalorder %s93, %s94
    %p103 = scmp.eq.s32.totalorder %s20, 0
    %p104 = por %p102, %p103
    %p105 = scmp.ne.s32.totalorder %s93, %s94
    %p106 = scmp.eq.s32.totalorder %s21, 1
    %p107 = por %p105, %p106
    %p109 = scmp.ne.s32.totalorder %s94, %s108
    %p110 = scmp.eq.s32.totalorder %s21, 0
    %p111 = por %p109, %p110
    %s113 = sadd.s32 %s112, 1
    %p116 = scmp.eq.s32.totalorder %s15, 1
    %p117 = scmp.ne.s32.totalorder %s112, %s114
    %p118 = scmp.eq.s32.totalorder %s15, 0
    %p119 = por %p117, %p118
    %p120 = scmp.ne.s32.totalorder %s112, %s114
    %p121 = scmp.eq.s32.totalorder %s20, 1
    %p122 = por %p120, %p121
    %p123 = scmp.ne.s32.totalorder %s114, %s115
    %p124 = scmp.eq.s32.totalorder %s20, 0
    %p125 = por %p123, %p124
    %p126 = scmp.ne.s32.totalorder %s114, %s115
    %p127 = scmp.eq.s32.totalorder %s21, 1
    %p128 = por %p126, %p127
    %p130 = scmp.ne.s32.totalorder %s115, %s129
    %p131 = scmp.eq.s32.totalorder %s21, 0
    %p132 = por %p130, %p131
    %s134 = sadd.s32 %s133, 1
    %p137 = scmp.eq.s32.totalorder %s15, 1
    %p138 = scmp.ne.s32.totalorder %s133, %s135
    %p139 = scmp.eq.s32.totalorder %s15, 0
    %p140 = por %p138, %p139
    %p141 = scmp.ne.s32.totalorder %s133, %s135
    %p142 = scmp.eq.s32.totalorder %s20, 1
    %p143 = por %p141, %p142
    %p144 = scmp.ne.s32.totalorder %s135, %s136
    %p145 = scmp.eq.s32.totalorder %s20, 0
    %p146 = por %p144, %p145
    %p147 = scmp.ne.s32.totalorder %s135, %s136
    %p148 = scmp.eq.s32.totalorder %s21, 1
    %p149 = por %p147, %p148
    %p151 = scmp.ne.s32.totalorder %s136, %s150
    %p152 = scmp.eq.s32.totalorder %s21, 0
    %p153 = por %p151, %p152
    %s155 = sadd.s32 %s154, 1
    %p158 = scmp.eq.s32.totalorder %s15, 1
    %p159 = scmp.ne.s32.totalorder %s154, %s156
    %p160 = scmp.eq.s32.totalorder %s15, 0
    %p161 = por %p159, %p160
    %p162 = scmp.ne.s32.totalorder %s154, %s156
    %p163 = scmp.eq.s32.totalorder %s20, 1
    %p164 = por %p162, %p163
    %p165 = scmp.ne.s32.totalorder %s156, %s157
    %p166 = scmp.eq.s32.totalorder %s20, 0
    %p167 = por %p165, %p166
    %p168 = scmp.ne.s32.totalorder %s156, %s157
    %p169 = scmp.eq.s32.totalorder %s21, 1
    %p170 = por %p168, %p169
    %p172 = scmp.ne.s32.totalorder %s157, %s171
    %p173 = scmp.eq.s32.totalorder %s21, 0
    %p174 = por %p172, %p173
    %s176 = sadd.s32 %s175, 1
    %p179 = scmp.eq.s32.totalorder %s15, 1
    %p180 = scmp.ne.s32.totalorder %s175, %s177
    %p181 = scmp.eq.s32.totalorder %s15, 0
    %p182 = por %p180, %p181
    %p183 = scmp.ne.s32.totalorder %s175, %s177
    %p184 = scmp.eq.s32.totalorder %s20, 1
    %p185 = por %p183, %p184
    %p186 = scmp.ne.s32.totalorder %s177, %s178
    %p187 = scmp.eq.s32.totalorder %s20, 0
    %p188 = por %p186, %p187
    %p189 = scmp.ne.s32.totalorder %s177, %s178
    %p190 = scmp.eq.s32.totalorder %s21, 1
    %p191 = por %p189, %p190
    %p193 = scmp.ne.s32.totalorder %s178, %s192
    %p194 = scmp.eq.s32.totalorder %s21, 0
    %p195 = por %p193, %p194
    %s196 = ssub.s32 %s15, %s22
    %p197 = scmp.eq.s32.totalorder %s196, 0
    %s199 = sadd.s32 %s198, 1
    %s200 = scalar_select %p197, %s198, %s199
    %p203 = pneg %p197
    %p204 = scmp.eq.s32.totalorder %s15, 1
    %p205 = por %p203, %p204
    %p206 = scmp.ne.s32.totalorder %s198, %s201
    %p207 = scmp.eq.s32.totalorder %s15, 0
    %p208 = por %p206, %p207
    %p209 = scmp.ne.s32.totalorder %s198, %s201
    %p210 = scmp.eq.s32.totalorder %s20, 1
    %p211 = por %p209, %p210
    %p212 = scmp.ne.s32.totalorder %s201, %s202
    %p213 = scmp.eq.s32.totalorder %s20, 0
    %p214 = por %p212, %p213
    %p215 = scmp.ne.s32.totalorder %s201, %s202
    %p216 = scmp.eq.s32.totalorder %s21, 1
    %p217 = por %p215, %p216
    %p219 = scmp.ne.s32.totalorder %s202, %s218
    %p220 = scmp.eq.s32.totalorder %s21, 0
    %p221 = por %p219, %p220
    %p222 = scmp.le.s32.totalorder 1, %s15
    %p223 = scmp.lt.s32.totalorder %s15, 3
    %p224 = pnand %p222, %p223
    %p225 = pneg %p224
    // Predicated region
    $region9: #{image_cnn_forward.1} parent=5 // pred_check
      _
    $region10: #{image_cnn_forward.1} parent=5 // pred_check_branch
      %227 = sbr.rel (%p224) target = $region12
    $region11: #{image_cnn_forward.1} parent=5 // pred_region
      %s228 = ssub.s32 %s15, 1
      // Predicated region
      $region13: #{image_cnn_forward.1} parent=11 // pred_check
        %p229 = pneg %p62
      $region14: #{image_cnn_forward.1} parent=11 // pred_check_branch
        %231 = sbr.rel (%p229) target = $region16
      $region15: #{image_cnn_forward.1} parent=11 // pred_region
        _
      $region16: #{image_cnn_forward.1} parent=11 // pred_fallthru
        _
      // Predicated region
      $region17: #{image_cnn_forward.1} parent=11 // pred_check
        %p232 = pneg %p83
      $region18: #{image_cnn_forward.1} parent=11 // pred_check_branch
        %234 = sbr.rel (%p232) target = $region20
      $region19: #{image_cnn_forward.1} parent=11 // pred_region
        _
      $region20: #{image_cnn_forward.1} parent=11 // pred_fallthru
        _
      // Predicated region
      $region21: #{image_cnn_forward.1} parent=11 // pred_check
        %p235 = pneg %p104
      $region22: #{image_cnn_forward.1} parent=11 // pred_check_branch
        %237 = sbr.rel (%p235) target = $region24
      $region23: #{image_cnn_forward.1} parent=11 // pred_region
        _
      $region24: #{image_cnn_forward.1} parent=11 // pred_fallthru
        _
      // Predicated region
      $region25: #{image_cnn_forward.1} parent=11 // pred_check
        %p238 = pneg %p125
      $region26: #{image_cnn_forward.1} parent=11 // pred_check_branch
        %240 = sbr.rel (%p238) target = $region28
      $region27: #{image_cnn_forward.1} parent=11 // pred_region
        _
      $region28: #{image_cnn_forward.1} parent=11 // pred_fallthru
        _
      // Predicated region
      $region29: #{image_cnn_forward.1} parent=11 // pred_check
        %p241 = pneg %p146
      $region30: #{image_cnn_forward.1} parent=11 // pred_check_branch
        %243 = sbr.rel (%p241) target = $region32
      $region31: #{image_cnn_forward.1} parent=11 // pred_region
        _
      $region32: #{image_cnn_forward.1} parent=11 // pred_fallthru
        _
      // Predicated region
      $region33: #{image_cnn_forward.1} parent=11 // pred_check
        %p244 = pneg %p167
      $region34: #{image_cnn_forward.1} parent=11 // pred_check_branch
        %246 = sbr.rel (%p244) target = $region36
      $region35: #{image_cnn_forward.1} parent=11 // pred_region
        _
      $region36: #{image_cnn_forward.1} parent=11 // pred_fallthru
        _
      // Predicated region
      $region37: #{image_cnn_forward.1} parent=11 // pred_check
        %p247 = pneg %p188
      $region38: #{image_cnn_forward.1} parent=11 // pred_check_branch
        %249 = sbr.rel (%p247) target = $region40
      $region39: #{image_cnn_forward.1} parent=11 // pred_region
        _
      $region40: #{image_cnn_forward.1} parent=11 // pred_fallthru
        _
    $region12: #{image_cnn_forward.1} parent=5 // pred_fallthru
      _
    %p250 = scmp.lt.s32.totalorder %s15, 2
    // Predicated region
    $region41: #{image_cnn_forward.1} parent=5 // pred_check
      %p251 = pneg %p250
    $region42: #{image_cnn_forward.1} parent=5 // pred_check_branch
      %253 = sbr.rel (%p251) target = $region44
    $region43: #{image_cnn_forward.1} parent=5 // pred_region
      // Predicated region
      $region45: #{image_cnn_forward.1} parent=43 // pred_check
        %p254 = pneg %p35
      $region46: #{image_cnn_forward.1} parent=43 // pred_check_branch
        %256 = sbr.rel (%p254) target = $region48
      $region47: #{image_cnn_forward.1} parent=43 // pred_region
        %p257 = scmp.lt.s32.totalorder %s15, 1
        %s258 = scalar_select %p257, %s15, 1
        %s259 = smul.addr %s258, 54
        %s260 = smul.addr %s259, 4
        %s261 = scalar_lea.vmem %s0, %s260
      $region48: #{image_cnn_forward.1} parent=43 // pred_fallthru
        _
    $region44: #{image_cnn_forward.1} parent=5 // pred_fallthru
      _
    %p262 = scmp.le.s32.totalorder 1, %s15
    %p263 = scmp.lt.s32.totalorder %s15, 3
    %p264 = pnand %p262, %p263
    %p265 = pneg %p264
    // Predicated region
    $region49: #{image_cnn_forward.1} parent=5 // pred_check
      _
    $region50: #{image_cnn_forward.1} parent=5 // pred_check_branch
      %267 = sbr.rel (%p264) target = $region52
    $region51: #{image_cnn_forward.1} parent=5 // pred_region
      %s268 = ssub.s32 %s15, 1
      %p269 = scmp.lt.s32.totalorder %s20, 1
      %s270 = scalar_select %p269, %s20, 1
      %s271 = smul.addr %s270, 54
      %s272 = smul.addr %s271, 4
      %s273 = scalar_lea.vmem %s0, %s272
      %p274 = pneg %p41
      %p275 = pneg %p38
      %p276 = pneg %p62
      %p277 = pneg %p59
      %p278 = pneg %p83
      %p279 = pneg %p80
      %p280 = pneg %p104
      %p281 = pneg %p101
      %p282 = pneg %p125
      %p283 = pneg %p122
      %p284 = pneg %p146
      %p285 = pneg %p143
      %p286 = pneg %p167
      %p287 = pneg %p164
      %p288 = pneg %p188
      %p289 = pneg %p185
      %p290 = pneg %p214
      %p291 = pneg %p211
      %p292 = scmp.lt.s32.totalorder %s20, 1
      %s293 = scalar_select %p292, %s20, 1
      %s294 = smul.addr %s293, 8
      %s295 = scalar_lea.vmem %s8, %s294
      %p296 = scmp.lt.s32.totalorder %s20, 1
      %s297 = scalar_select %p296, %s20, 1
      %s298 = smul.addr %s297, 54
      %s299 = smul.addr %s298, 4
      %s300 = scalar_lea.vmem %s0, %s299
      %p301 = scmp.lt.s32.totalorder %s20, 1
      %s302 = scalar_select %p301, %s20, 1
      %s303 = smul.addr %s302, 8
      %s304 = scalar_lea.vmem %s8, %s303
      %v306 = vld [vmem:[%s300] sm:$0xf]
      %v307 = vld [vmem:[%s300 + $0x4] sm:$0xf]
      %v308 = vld [vmem:[%s300 + $0x8] sm:$0x1]
      %v309 = vld [vmem:[%s300 + $0xc] sm:$0xf]
      %v310 = vld [vmem:[%s300 + $0x10] sm:$0xf]
      %v311 = vld [vmem:[%s300 + $0x14] sm:$0x1]
      %v312 = vld [vmem:[%s300 + $0x18] sm:$0xf]
      %v313 = vld [vmem:[%s300 + $0x1c] sm:$0xf]
      %v314 = vld [vmem:[%s300 + $0x20] sm:$0x1]
      %v315 = vld [vmem:[%s300 + $0x24] sm:$0xf]
      %v316 = vld [vmem:[%s300 + $0x28] sm:$0xf]
      %v317 = vld [vmem:[%s300 + $0x2c] sm:$0x1]
      %v318 = vld [vmem:[%s300 + $0x30] sm:$0xf]
      %v319 = vld [vmem:[%s300 + $0x34] sm:$0xf]
      %v320 = vld [vmem:[%s300 + $0x38] sm:$0x1]
      %v321 = vld [vmem:[%s300 + $0x3c] sm:$0xf]
      %v322 = vld [vmem:[%s300 + $0x40] sm:$0xf]
      %v323 = vld [vmem:[%s300 + $0x44] sm:$0x1]
      %v324 = vld [vmem:[%s300 + $0x48] sm:$0xf]
      %v325 = vld [vmem:[%s300 + $0x4c] sm:$0xf]
      %v326 = vld [vmem:[%s300 + $0x50] sm:$0x1]
      %v327 = vld [vmem:[%s300 + $0x54] sm:$0xf]
      %v328 = vld [vmem:[%s300 + $0x58] sm:$0xf]
      %v329 = vld [vmem:[%s300 + $0x5c] sm:$0x1]
      %v330 = vld [vmem:[%s300 + $0x60] sm:$0xf]
      %v331 = vld [vmem:[%s300 + $0x64] sm:$0xf]
      %v332 = vld [vmem:[%s300 + $0x68] sm:$0x1]
      %v333 = vld [vmem:[%s300 + $0x6c] sm:$0xf]
      %v334 = vld [vmem:[%s300 + $0x70] sm:$0xf]
      %v335 = vld [vmem:[%s300 + $0x74] sm:$0x1]
      %v336 = vld [vmem:[%s300 + $0x78] sm:$0xf]
      %v337 = vld [vmem:[%s300 + $0x7c] sm:$0xf]
      %v338 = vld [vmem:[%s300 + $0x80] sm:$0x1]
      %v339 = vld [vmem:[%s300 + $0x84] sm:$0xf]
      %v340 = vld [vmem:[%s300 + $0x88] sm:$0xf]
      %v341 = vld [vmem:[%s300 + $0x8c] sm:$0x1]
      %v342 = vld [vmem:[%s300 + $0x90] sm:$0xf]
      %v343 = vld [vmem:[%s300 + $0x94] sm:$0xf]
      %v344 = vld [vmem:[%s300 + $0x98] sm:$0x1]
      %v345 = vld [vmem:[%s300 + $0x9c] sm:$0xf]
      %v346 = vld [vmem:[%s300 + $0xa0] sm:$0xf]
      %v347 = vld [vmem:[%s300 + $0xa4] sm:$0x1]
      %v348 = vld [vmem:[%s300 + $0xa8] sm:$0xf]
      %v349 = vld [vmem:[%s300 + $0xac] sm:$0xf]
      %v350 = vld [vmem:[%s300 + $0xb0] sm:$0x1]
      %v351 = vld [vmem:[%s300 + $0xb4] sm:$0xf]
      %v352 = vld [vmem:[%s300 + $0xb8] sm:$0xf]
      %v353 = vld [vmem:[%s300 + $0xbc] sm:$0x1]
      %v354 = vld [vmem:[%s300 + $0xc0] sm:$0xf]
      %v355 = vld [vmem:[%s300 + $0xc4] sm:$0xf]
      %v356 = vld [vmem:[%s300 + $0xc8] sm:$0x1]
      %v357 = vld [vmem:[%s300 + $0xcc] sm:$0xf]
      %v358 = vld [vmem:[%s300 + $0xd0] sm:$0xf]
      %v359 = vld [vmem:[%s300 + $0xd4] sm:$0x1]
      %v360 = vld [vmem:[%s1] sm:$0x3]
      %vm361 = vsmask.f32 3328
      %vm362 = vsmask.f32 7440
      %vm363 = vmor %vm361, %vm362
      %v365 = vshrl.u32 %v306, 16
      %v367 = vrot.slane %v365, 4
      %v368 = vshll.u32 %v306, 16
      %v370 = vrot.slane %v368, 5
      %v371 = vor.u32 %v367, %v370
      %v372 = vrot.slane %v371, 4
      %v374 = vshll.u32 %v307, 16
      %v376 = vrot.slane %v374, 5
      %v377 = vsel %vm363, %v372, %v376
      %v378 = vshrl.u32 %v307, 16
      %v380 = vrot.slane %v378, 4
      %v381 = vor.u32 %v380, %v376
      %v382 = vrot.slane %v381, 4
      %v384 = vshll.u32 %v308, 16
      %v386 = vrot.slane %v384, 5
      %v387 = vsel %vm363, %v382, %v386
      %v389 = vshrl.u32 %v309, 16
      %v391 = vrot.slane %v389, 4
      %v392 = vshll.u32 %v309, 16
      %v394 = vrot.slane %v392, 5
      %v395 = vor.u32 %v391, %v394
      %v396 = vrot.slane %v395, 4
      %v398 = vshll.u32 %v310, 16
      %v400 = vrot.slane %v398, 5
      %v401 = vsel %vm363, %v396, %v400
      %v402 = vshrl.u32 %v310, 16
      %v404 = vrot.slane %v402, 4
      %v405 = vor.u32 %v404, %v400
      %v406 = vrot.slane %v405, 4
      %v408 = vshll.u32 %v311, 16
      %v410 = vrot.slane %v408, 5
      %v411 = vsel %vm363, %v406, %v410
      %v413 = vshrl.u32 %v312, 16
      %v415 = vrot.slane %v413, 4
      %v416 = vshll.u32 %v312, 16
      %v418 = vrot.slane %v416, 5
      %v419 = vor.u32 %v415, %v418
      %v420 = vrot.slane %v419, 4
      %v422 = vshll.u32 %v313, 16
      %v424 = vrot.slane %v422, 5
      %v425 = vsel %vm363, %v420, %v424
      %v426 = vshrl.u32 %v313, 16
      %v428 = vrot.slane %v426, 4
      %v429 = vor.u32 %v428, %v424
      %v430 = vrot.slane %v429, 4
      %v432 = vshll.u32 %v314, 16
      %v434 = vrot.slane %v432, 5
      %v435 = vsel %vm363, %v430, %v434
      %v437 = vshrl.u32 %v315, 16
      %v439 = vrot.slane %v437, 4
      %v440 = vshll.u32 %v315, 16
      %v442 = vrot.slane %v440, 5
      %v443 = vor.u32 %v439, %v442
      %v444 = vrot.slane %v443, 4
      %v446 = vshll.u32 %v316, 16
      %v448 = vrot.slane %v446, 5
      %v449 = vsel %vm363, %v444, %v448
      %v450 = vshrl.u32 %v316, 16
      %v452 = vrot.slane %v450, 4
      %v453 = vor.u32 %v452, %v448
      %v454 = vrot.slane %v453, 4
      %v456 = vshll.u32 %v317, 16
      %v458 = vrot.slane %v456, 5
      %v459 = vsel %vm363, %v454, %v458
      %v461 = vshrl.u32 %v318, 16
      %v463 = vrot.slane %v461, 4
      %v464 = vshll.u32 %v318, 16
      %v466 = vrot.slane %v464, 5
      %v467 = vor.u32 %v463, %v466
      %v468 = vrot.slane %v467, 4
      %v470 = vshll.u32 %v319, 16
      %v472 = vrot.slane %v470, 5
      %v473 = vsel %vm363, %v468, %v472
      %v474 = vshrl.u32 %v319, 16
      %v476 = vrot.slane %v474, 4
      %v477 = vor.u32 %v476, %v472
      %v478 = vrot.slane %v477, 4
      %v480 = vshll.u32 %v320, 16
      %v482 = vrot.slane %v480, 5
      %v483 = vsel %vm363, %v478, %v482
      %v485 = vshrl.u32 %v321, 16
      %v487 = vrot.slane %v485, 4
      %v488 = vshll.u32 %v321, 16
      %v490 = vrot.slane %v488, 5
      %v491 = vor.u32 %v487, %v490
      %v492 = vrot.slane %v491, 4
      %v494 = vshll.u32 %v322, 16
      %v496 = vrot.slane %v494, 5
      %v497 = vsel %vm363, %v492, %v496
      %v498 = vshrl.u32 %v322, 16
      %v500 = vrot.slane %v498, 4
      %v501 = vor.u32 %v500, %v496
      %v502 = vrot.slane %v501, 4
      %v504 = vshll.u32 %v323, 16
      %v506 = vrot.slane %v504, 5
      %v507 = vsel %vm363, %v502, %v506
      %v509 = vshrl.u32 %v324, 16
      %v511 = vrot.slane %v509, 4
      %v512 = vshll.u32 %v324, 16
      %v514 = vrot.slane %v512, 5
      %v515 = vor.u32 %v511, %v514
      %v516 = vrot.slane %v515, 4
      %v518 = vshll.u32 %v325, 16
      %v520 = vrot.slane %v518, 5
      %v521 = vsel %vm363, %v516, %v520
      %v522 = vshrl.u32 %v325, 16
      %v524 = vrot.slane %v522, 4
      %v525 = vor.u32 %v524, %v520
      %v526 = vrot.slane %v525, 4
      %v528 = vshll.u32 %v326, 16
      %v530 = vrot.slane %v528, 5
      %v531 = vsel %vm363, %v526, %v530
      %v533 = vshrl.u32 %v327, 16
      %v535 = vrot.slane %v533, 4
      %v536 = vshll.u32 %v327, 16
      %v538 = vrot.slane %v536, 5
      %v539 = vor.u32 %v535, %v538
      %v540 = vrot.slane %v539, 4
      %v542 = vshll.u32 %v328, 16
      %v544 = vrot.slane %v542, 5
      %v545 = vsel %vm363, %v540, %v544
      %v546 = vshrl.u32 %v328, 16
      %v548 = vrot.slane %v546, 4
      %v549 = vor.u32 %v548, %v544
      %v550 = vrot.slane %v549, 4
      %v552 = vshll.u32 %v329, 16
      %v554 = vrot.slane %v552, 5
      %v555 = vsel %vm363, %v550, %v554
      %v557 = vshrl.u32 %v330, 16
      %v559 = vrot.slane %v557, 4
      %v560 = vshll.u32 %v330, 16
      %v562 = vrot.slane %v560, 5
      %v563 = vor.u32 %v559, %v562
      %v564 = vrot.slane %v563, 4
      %v566 = vshll.u32 %v331, 16
      %v568 = vrot.slane %v566, 5
      %v569 = vsel %vm363, %v564, %v568
      %v570 = vshrl.u32 %v331, 16
      %v572 = vrot.slane %v570, 4
      %v573 = vor.u32 %v572, %v568
      %v574 = vrot.slane %v573, 4
      %v576 = vshll.u32 %v332, 16
      %v578 = vrot.slane %v576, 5
      %v579 = vsel %vm363, %v574, %v578
      %v581 = vshrl.u32 %v333, 16
      %v583 = vrot.slane %v581, 4
      %v584 = vshll.u32 %v333, 16
      %v586 = vrot.slane %v584, 5
      %v587 = vor.u32 %v583, %v586
      %v588 = vrot.slane %v587, 4
      %v590 = vshll.u32 %v334, 16
      %v592 = vrot.slane %v590, 5
      %v593 = vsel %vm363, %v588, %v592
      %v594 = vshrl.u32 %v334, 16
      %v596 = vrot.slane %v594, 4
      %v597 = vor.u32 %v596, %v592
      %v598 = vrot.slane %v597, 4
      %v600 = vshll.u32 %v335, 16
      %v602 = vrot.slane %v600, 5
      %v603 = vsel %vm363, %v598, %v602
      %v605 = vshrl.u32 %v336, 16
      %v607 = vrot.slane %v605, 4
      %v608 = vshll.u32 %v336, 16
      %v610 = vrot.slane %v608, 5
      %v611 = vor.u32 %v607, %v610
      %v612 = vrot.slane %v611, 4
      %v614 = vshll.u32 %v337, 16
      %v616 = vrot.slane %v614, 5
      %v617 = vsel %vm363, %v612, %v616
      %v618 = vshrl.u32 %v337, 16
      %v620 = vrot.slane %v618, 4
      %v621 = vor.u32 %v620, %v616
      %v622 = vrot.slane %v621, 4
      %v624 = vshll.u32 %v338, 16
      %v626 = vrot.slane %v624, 5
      %v627 = vsel %vm363, %v622, %v626
      %v629 = vshrl.u32 %v339, 16
      %v631 = vrot.slane %v629, 4
      %v632 = vshll.u32 %v339, 16
      %v634 = vrot.slane %v632, 5
      %v635 = vor.u32 %v631, %v634
      %v636 = vrot.slane %v635, 4
      %v638 = vshll.u32 %v340, 16
      %v640 = vrot.slane %v638, 5
      %v641 = vsel %vm363, %v636, %v640
      %v642 = vshrl.u32 %v340, 16
      %v644 = vrot.slane %v642, 4
      %v645 = vor.u32 %v644, %v640
      %v646 = vrot.slane %v645, 4
      %v648 = vshll.u32 %v341, 16
      %v650 = vrot.slane %v648, 5
      %v651 = vsel %vm363, %v646, %v650
      %v653 = vshrl.u32 %v342, 16
      %v655 = vrot.slane %v653, 4
      %v656 = vshll.u32 %v342, 16
      %v658 = vrot.slane %v656, 5
      %v659 = vor.u32 %v655, %v658
      %v660 = vrot.slane %v659, 4
      %v662 = vshll.u32 %v343, 16
      %v664 = vrot.slane %v662, 5
      %v665 = vsel %vm363, %v660, %v664
      %v666 = vshrl.u32 %v343, 16
      %v668 = vrot.slane %v666, 4
      %v669 = vor.u32 %v668, %v664
      %v670 = vrot.slane %v669, 4
      %v672 = vshll.u32 %v344, 16
      %v674 = vrot.slane %v672, 5
      %v675 = vsel %vm363, %v670, %v674
      %v677 = vshrl.u32 %v345, 16
      %v679 = vrot.slane %v677, 4
      %v680 = vshll.u32 %v345, 16
      %v682 = vrot.slane %v680, 5
      %v683 = vor.u32 %v679, %v682
      %v684 = vrot.slane %v683, 4
      %v686 = vshll.u32 %v346, 16
      %v688 = vrot.slane %v686, 5
      %v689 = vsel %vm363, %v684, %v688
      %v690 = vshrl.u32 %v346, 16
      %v692 = vrot.slane %v690, 4
      %v693 = vor.u32 %v692, %v688
      %v694 = vrot.slane %v693, 4
      %v696 = vshll.u32 %v347, 16
      %v698 = vrot.slane %v696, 5
      %v699 = vsel %vm363, %v694, %v698
      %v701 = vshrl.u32 %v348, 16
      %v703 = vrot.slane %v701, 4
      %v704 = vshll.u32 %v348, 16
      %v706 = vrot.slane %v704, 5
      %v707 = vor.u32 %v703, %v706
      %v708 = vrot.slane %v707, 4
      %v710 = vshll.u32 %v349, 16
      %v712 = vrot.slane %v710, 5
      %v713 = vsel %vm363, %v708, %v712
      %v714 = vshrl.u32 %v349, 16
      %v716 = vrot.slane %v714, 4
      %v717 = vor.u32 %v716, %v712
      %v718 = vrot.slane %v717, 4
      %v720 = vshll.u32 %v350, 16
      %v722 = vrot.slane %v720, 5
      %v723 = vsel %vm363, %v718, %v722
      %v725 = vshrl.u32 %v351, 16
      %v727 = vrot.slane %v725, 4
      %v728 = vshll.u32 %v351, 16
      %v730 = vrot.slane %v728, 5
      %v731 = vor.u32 %v727, %v730
      %v732 = vrot.slane %v731, 4
      %v734 = vshll.u32 %v352, 16
      %v736 = vrot.slane %v734, 5
      %v737 = vsel %vm363, %v732, %v736
      %v738 = vshrl.u32 %v352, 16
      %v740 = vrot.slane %v738, 4
      %v741 = vor.u32 %v740, %v736
      %v742 = vrot.slane %v741, 4
      %v744 = vshll.u32 %v353, 16
      %v746 = vrot.slane %v744, 5
      %v747 = vsel %vm363, %v742, %v746
      %s748 = scalar_lea.vmem %s1, 2
      %v749 = vld [vmem:[%s748] sm:$0x3]
      %v750 = vunpack.c.l.b16 %v377
      %v751 = vunpack.c.l.b16 %v387
      %v752 = vunpack.c.l.b16 %v401
      %v753 = vunpack.c.l.b16 %v411
      %v754 = vunpack.c.l.b16 %v425
      %v755 = vunpack.c.l.b16 %v435
      %v756 = vunpack.c.l.b16 %v449
      %v757 = vunpack.c.l.b16 %v459
      %v758 = vunpack.c.l.b16 %v473
      %v759 = vunpack.c.l.b16 %v483
      %v760 = vunpack.c.l.b16 %v497
      %v761 = vunpack.c.l.b16 %v507
      %v762 = vunpack.c.l.b16 %v521
      %v763 = vunpack.c.l.b16 %v531
      %v764 = vunpack.c.l.b16 %v545
      %v765 = vunpack.c.l.b16 %v555
      %v766 = vunpack.c.l.b16 %v569
      %v767 = vunpack.c.l.b16 %v579
      %v768 = vunpack.c.l.b16 %v593
      %v769 = vunpack.c.l.b16 %v603
      %v770 = vunpack.c.l.b16 %v617
      %v771 = vunpack.c.l.b16 %v627
      %v772 = vunpack.c.l.b16 %v641
      %v773 = vunpack.c.l.b16 %v651
      %v774 = vunpack.c.l.b16 %v665
      %v775 = vunpack.c.l.b16 %v675
      %v776 = vunpack.c.l.b16 %v689
      %v777 = vunpack.c.l.b16 %v699
      %v778 = vunpack.c.l.b16 %v713
      %v779 = vunpack.c.l.b16 %v723
      %v780 = vunpack.c.l.b16 %v737
      %v781 = vunpack.c.l.b16 %v747
      %v782 = vpack.c.b16 %v751, %v750
      %v783 = vpack.c.b16 %v753, %v752
      %v784 = vpack.c.b16 %v755, %v754
      %v785 = vpack.c.b16 %v757, %v756
      %v786 = vpack.c.b16 %v759, %v758
      %v787 = vpack.c.b16 %v761, %v760
      %v788 = vpack.c.b16 %v763, %v762
      %v789 = vpack.c.b16 %v765, %v764
      %v790 = vpack.c.b16 %v767, %v766
      %v791 = vpack.c.b16 %v769, %v768
      %v792 = vpack.c.b16 %v771, %v770
      %v793 = vpack.c.b16 %v773, %v772
      %v794 = vpack.c.b16 %v775, %v774
      %v795 = vpack.c.b16 %v777, %v776
      %v796 = vpack.c.b16 %v779, %v778
      %v797 = vpack.c.b16 %v781, %v780
      %vm798 = vcmask 31744
      %v800 = vsel %vm798, %v782, 0
      %v803 = vsel %vm798, %v783, 0
      %v806 = vsel %vm798, %v784, 0
      %v809 = vsel %vm798, %v785, 0
      %v812 = vsel %vm798, %v786, 0
      %v815 = vsel %vm798, %v787, 0
      %v818 = vsel %vm798, %v788, 0
      %v821 = vsel %vm798, %v789, 0
      %v824 = vsel %vm798, %v790, 0
      %v827 = vsel %vm798, %v791, 0
      %v830 = vsel %vm798, %v792, 0
      %v833 = vsel %vm798, %v793, 0
      %v836 = vsel %vm798, %v794, 0
      %v839 = vsel %vm798, %v795, 0
      %v842 = vsel %vm798, %v796, 0
      %v845 = vsel %vm798, %v797, 0
      %vm847 = vcmask 1041408
      %v849 = vsel %vm847, %v749, 0
      %851 = vmatprep.subr.bf16.mxu0 0
      %852 = vmatpush1.bf16.msra.mxu0 %v849
      %853 = vmatprep.subr.bf16.mxu0 0
      %854 = vmatpush1.bf16.msra.mxu0 0
      %855 = vmatprep.subr.bf16.mxu0 0
      %856 = vmatpush1.bf16.msra.mxu0 0
      %857 = vmatprep.subr.bf16.mxu0 0
      %858 = vmatpush1.bf16.msra.mxu0 0
      %859 = vmatprep.subr.bf16.mxu0 0
      %860 = vmatpush1.bf16.msra.mxu0 0
      %861 = vmatprep.subr.bf16.mxu0 0
      %862 = vmatpush1.bf16.msra.mxu0 0
      %863 = vmatprep.subr.bf16.mxu0 0
      %864 = vmatpush1.bf16.msra.mxu0 0
      %865 = vmatprep.subr.bf16.mxu0 0
      %866 = vmatpush1.bf16.msra.mxu0 0
      %867 = vmatprep.subr.bf16.mxu0 0
      %868 = vmatpush1.bf16.msra.mxu0 0
      %869 = vmatprep.subr.bf16.mxu0 0
      %870 = vmatpush1.bf16.msra.mxu0 0
      %871 = vmatprep.subr.bf16.mxu0 0
      %872 = vmatpush1.bf16.msra.mxu0 0
      %873 = vmatprep.subr.bf16.mxu0 0
      %874 = vmatpush1.bf16.msra.mxu0 0
      %875 = vmatprep.subr.bf16.mxu0 0
      %876 = vmatpush1.bf16.msra.mxu0 0
      %877 = vmatprep.subr.bf16.mxu0 0
      %878 = vmatpush1.bf16.msra.mxu0 0
      %879 = vmatprep.subr.bf16.mxu0 0
      %880 = vmatpush1.bf16.msra.mxu0 0
      %881 = vmatprep.subr.bf16.mxu0 0
      %882 = vmatpush1.bf16.msra.mxu0 0
      %883 = vmatprep.mubr.bf16.mxu0 0
      %884 = vmatmul.mubr.bf16.gmra.mrb[0].mxu0 %v800
      %v885 = vpop.f32.mrb[0].mxu0
      %v886 = vadd.f32 0.0, %v885
      %v887 = vpop.f32.mrb[0].mxu0
      %v888 = vpop.f32.mrb[0].mxu0
      %v889 = vadd.f32 0.0, %v888
      %v890 = vpop.f32.mrb[0].mxu0
      %891 = vmatprep.mubr.bf16.mxu0 0
      %892 = vmatmul.mubr.bf16.gmra.mrb[0].mxu0 %v803
      %v893 = vpop.f32.mrb[0].mxu0
      %v894 = vadd.f32 0.0, %v893
      %v895 = vpop.f32.mrb[0].mxu0
      %v896 = vpop.f32.mrb[0].mxu0
      %v897 = vadd.f32 0.0, %v896
      %v898 = vpop.f32.mrb[0].mxu0
      %899 = vmatprep.mubr.bf16.mxu0 0
      %900 = vmatmul.mubr.bf16.gmra.mrb[0].mxu0 %v806
      %v901 = vpop.f32.mrb[0].mxu0
      %v902 = vadd.f32 0.0, %v901
      %v903 = vpop.f32.mrb[0].mxu0
      %v904 = vpop.f32.mrb[0].mxu0
      %v905 = vadd.f32 0.0, %v904
      %v906 = vpop.f32.mrb[0].mxu0
      %907 = vmatprep.mubr.bf16.mxu0 0
      %908 = vmatmul.mubr.bf16.gmra.mrb[0].mxu0 %v809
      %v909 = vpop.f32.mrb[0].mxu0
      %v910 = vadd.f32 0.0, %v909
      %v911 = vpop.f32.mrb[0].mxu0
      %v912 = vpop.f32.mrb[0].mxu0
      %v913 = vadd.f32 0.0, %v912
      %v914 = vpop.f32.mrb[0].mxu0
      %915 = vmatprep.mubr.bf16.mxu0 0
      %916 = vmatmul.mubr.bf16.gmra.mrb[0].mxu0 %v812
      %v917 = vpop.f32.mrb[0].mxu0
      %v918 = vadd.f32 0.0, %v917
      %v919 = vpop.f32.mrb[0].mxu0
      %v920 = vpop.f32.mrb[0].mxu0
      %v921 = vadd.f32 0.0, %v920
      %v922 = vpop.f32.mrb[0].mxu0
      %923 = vmatprep.mubr.bf16.mxu0 0
      %924 = vmatmul.mubr.bf16.gmra.mrb[0].mxu0 %v815
      %v925 = vpop.f32.mrb[0].mxu0
      %v926 = vadd.f32 0.0, %v925
      %v927 = vpop.f32.mrb[0].mxu0
      %v928 = vpop.f32.mrb[0].mxu0
      %v929 = vadd.f32 0.0, %v928
      %v930 = vpop.f32.mrb[0].mxu0
      %931 = vmatprep.mubr.bf16.mxu0 0
      %932 = vmatmul.mubr.bf16.gmra.mrb[0].mxu0 %v818
      %v933 = vpop.f32.mrb[0].mxu0
      %v934 = vadd.f32 0.0, %v933
      %v935 = vpop.f32.mrb[0].mxu0
      %v936 = vpop.f32.mrb[0].mxu0
      %v937 = vadd.f32 0.0, %v936
      %v938 = vpop.f32.mrb[0].mxu0
      %939 = vmatprep.mubr.bf16.mxu0 0
      %940 = vmatmul.mubr.bf16.gmra.mrb[0].mxu0 %v821
      %v941 = vpop.f32.mrb[0].mxu0
      %v942 = vadd.f32 0.0, %v941
      %v943 = vpop.f32.mrb[0].mxu0
      %v944 = vpop.f32.mrb[0].mxu0
      %v945 = vadd.f32 0.0, %v944
      %v946 = vpop.f32.mrb[0].mxu0
      %947 = vmatprep.mubr.bf16.mxu0 0
      %948 = vmatmul.mubr.bf16.gmra.mrb[0].mxu0 %v824
      %v949 = vpop.f32.mrb[0].mxu0
      %v950 = vadd.f32 0.0, %v949
      %v951 = vpop.f32.mrb[0].mxu0
      %v952 = vpop.f32.mrb[0].mxu0
      %v953 = vadd.f32 0.0, %v952
      %v954 = vpop.f32.mrb[0].mxu0
      %955 = vmatprep.mubr.bf16.mxu0 0
      %956 = vmatmul.mubr.bf16.gmra.mrb[0].mxu0 %v827
      %v957 = vpop.f32.mrb[0].mxu0
      %v958 = vadd.f32 0.0, %v957
      %v959 = vpop.f32.mrb[0].mxu0
      %v960 = vpop.f32.mrb[0].mxu0
      %v961 = vadd.f32 0.0, %v960
      %v962 = vpop.f32.mrb[0].mxu0
      %963 = vmatprep.mubr.bf16.mxu0 0
      %964 = vmatmul.mubr.bf16.gmra.mrb[0].mxu0 %v830
      %v965 = vpop.f32.mrb[0].mxu0
      %v966 = vadd.f32 0.0, %v965
      %v967 = vpop.f32.mrb[0].mxu0
      %v968 = vpop.f32.mrb[0].mxu0
      %v969 = vadd.f32 0.0, %v968
      %v970 = vpop.f32.mrb[0].mxu0
      %971 = vmatprep.mubr.bf16.mxu0 0
      %972 = vmatmul.mubr.bf16.gmra.mrb[0].mxu0 %v833
      %v973 = vpop.f32.mrb[0].mxu0
      %v974 = vadd.f32 0.0, %v973
      %v975 = vpop.f32.mrb[0].mxu0
      %v976 = vpop.f32.mrb[0].mxu0
      %v977 = vadd.f32 0.0, %v976
      %v978 = vpop.f32.mrb[0].mxu0
      %979 = vmatprep.mubr.bf16.mxu0 0
      %980 = vmatmul.mubr.bf16.gmra.mrb[0].mxu0 %v836
      %v981 = vpop.f32.mrb[0].mxu0
      %v982 = vadd.f32 0.0, %v981
      %v983 = vpop.f32.mrb[0].mxu0
      %v984 = vpop.f32.mrb[0].mxu0
      %v985 = vadd.f32 0.0, %v984
      %v986 = vpop.f32.mrb[0].mxu0
      %987 = vmatprep.mubr.bf16.mxu0 0
      %988 = vmatmul.mubr.bf16.gmra.mrb[0].mxu0 %v839
      %v989 = vpop.f32.mrb[0].mxu0
      %v990 = vadd.f32 0.0, %v989
      %v991 = vpop.f32.mrb[0].mxu0
      %v992 = vpop.f32.mrb[0].mxu0
      %v993 = vadd.f32 0.0, %v992
      %v994 = vpop.f32.mrb[0].mxu0
      %995 = vmatprep.mubr.bf16.mxu0 0
      %996 = vmatmul.mubr.bf16.gmra.mrb[0].mxu0 %v842
      %v997 = vpop.f32.mrb[0].mxu0
      %v998 = vadd.f32 0.0, %v997
      %v999 = vpop.f32.mrb[0].mxu0
      %v1000 = vpop.f32.mrb[0].mxu0
      %v1001 = vadd.f32 0.0, %v1000
      %v1002 = vpop.f32.mrb[0].mxu0
      %1003 = vmatprep.mubr.bf16.mxu0 0
      %1004 = vmatmul.mubr.bf16.gmra.mrb[0].mxu0 %v845
      %v1005 = vpop.f32.mrb[0].mxu0
      %v1006 = vadd.f32 0.0, %v1005
      %v1007 = vpop.f32.mrb[0].mxu0
      %v1008 = vpop.f32.mrb[0].mxu0
      %v1009 = vadd.f32 0.0, %v1008
      %v1010 = vpop.f32.mrb[0].mxu0
      %1011 = vdwg.mxu0
      %v1044 = vunpack.c.l.b16 %v306
      %v1045 = vunpack.c.l.b16 %v307
      %v1046 = vunpack.c.l.b16 %v309
      %v1047 = vunpack.c.l.b16 %v310
      %v1048 = vunpack.c.l.b16 %v312
      %v1049 = vunpack.c.l.b16 %v313
      %v1050 = vunpack.c.l.b16 %v315
      %v1051 = vunpack.c.l.b16 %v316
      %v1052 = vunpack.c.l.b16 %v318
      %v1053 = vunpack.c.l.b16 %v319
      %v1054 = vunpack.c.l.b16 %v321
      %v1055 = vunpack.c.l.b16 %v322
      %v1056 = vunpack.c.l.b16 %v324
      %v1057 = vunpack.c.l.b16 %v325
      %v1058 = vunpack.c.l.b16 %v327
      %v1059 = vunpack.c.l.b16 %v328
      %v1060 = vunpack.c.l.b16 %v330
      %v1061 = vunpack.c.l.b16 %v331
      %v1062 = vunpack.c.l.b16 %v333
      %v1063 = vunpack.c.l.b16 %v334
      %v1064 = vunpack.c.l.b16 %v336
      %v1065 = vunpack.c.l.b16 %v337
      %v1066 = vunpack.c.l.b16 %v339
      %v1067 = vunpack.c.l.b16 %v340
      %v1068 = vunpack.c.l.b16 %v342
      %v1069 = vunpack.c.l.b16 %v343
      %v1070 = vunpack.c.l.b16 %v345
      %v1071 = vunpack.c.l.b16 %v346
      %v1072 = vunpack.c.l.b16 %v348
      %v1073 = vunpack.c.l.b16 %v349
      %v1074 = vunpack.c.l.b16 %v351
      %v1075 = vunpack.c.l.b16 %v352
      %v1076 = vpack.c.b16 %v1045, %v1044
      %v1077 = vpack.c.b16 %v1047, %v1046
      %v1078 = vpack.c.b16 %v1049, %v1048
      %v1079 = vpack.c.b16 %v1051, %v1050
      %v1080 = vpack.c.b16 %v1053, %v1052
      %v1081 = vpack.c.b16 %v1055, %v1054
      %v1082 = vpack.c.b16 %v1057, %v1056
      %v1083 = vpack.c.b16 %v1059, %v1058
      %v1084 = vpack.c.b16 %v1061, %v1060
      %v1085 = vpack.c.b16 %v1063, %v1062
      %v1086 = vpack.c.b16 %v1065, %v1064
      %v1087 = vpack.c.b16 %v1067, %v1066
      %v1088 = vpack.c.b16 %v1069, %v1068
      %v1089 = vpack.c.b16 %v1071, %v1070
      %v1090 = vpack.c.b16 %v1073, %v1072
      %v1091 = vpack.c.b16 %v1075, %v1074
      %v1093 = vsel %vm798, %v1076, 0
      %v1096 = vsel %vm798, %v1077, 0
      %v1099 = vsel %vm798, %v1078, 0
      %v1102 = vsel %vm798, %v1079, 0
      %v1105 = vsel %vm798, %v1080, 0
      %v1108 = vsel %vm798, %v1081, 0
      %v1111 = vsel %vm798, %v1082, 0
      %v1114 = vsel %vm798, %v1083, 0
      %v1117 = vsel %vm798, %v1084, 0
      %v1120 = vsel %vm798, %v1085, 0
      %v1123 = vsel %vm798, %v1086, 0
      %v1126 = vsel %vm798, %v1087, 0
      %v1129 = vsel %vm798, %v1088, 0
      %v1132 = vsel %vm798, %v1089, 0
      %v1135 = vsel %vm798, %v1090, 0
      %v1138 = vsel %vm798, %v1091, 0
      %v1141 = vsel %vm847, %v360, 0
      %1143 = vmatprep.subr.bf16.mxu0 0
      %1144 = vmatpush1.bf16.msra.mxu0 %v1141
      %1145 = vmatprep.subr.bf16.mxu0 0
      %1146 = vmatpush1.bf16.msra.mxu0 0
      %1147 = vmatprep.subr.bf16.mxu0 0
      %1148 = vmatpush1.bf16.msra.mxu0 0
      %1149 = vmatprep.subr.bf16.mxu0 0
      %1150 = vmatpush1.bf16.msra.mxu0 0
      %1151 = vmatprep.subr.bf16.mxu0 0
      %1152 = vmatpush1.bf16.msra.mxu0 0
      %1153 = vmatprep.subr.bf16.mxu0 0
      %1154 = vmatpush1.bf16.msra.mxu0 0
      %1155 = vmatprep.subr.bf16.mxu0 0
      %1156 = vmatpush1.bf16.msra.mxu0 0
      %1157 = vmatprep.subr.bf16.mxu0 0
      %1158 = vmatpush1.bf16.msra.mxu0 0
      %1159 = vmatprep.subr.bf16.mxu0 0
      %1160 = vmatpush1.bf16.msra.mxu0 0
      %1161 = vmatprep.subr.bf16.mxu0 0
      %1162 = vmatpush1.bf16.msra.mxu0 0
      %1163 = vmatprep.subr.bf16.mxu0 0
      %1164 = vmatpush1.bf16.msra.mxu0 0
      %1165 = vmatprep.subr.bf16.mxu0 0
      %1166 = vmatpush1.bf16.msra.mxu0 0
      %1167 = vmatprep.subr.bf16.mxu0 0
      %1168 = vmatpush1.bf16.msra.mxu0 0
      %1169 = vmatprep.subr.bf16.mxu0 0
      %1170 = vmatpush1.bf16.msra.mxu0 0
      %1171 = vmatprep.subr.bf16.mxu0 0
      %1172 = vmatpush1.bf16.msra.mxu0 0
      %1173 = vmatprep.subr.bf16.mxu0 0
      %1174 = vmatpush1.bf16.msra.mxu0 0
      %1175 = vmatprep.mubr.bf16.mxu0 0
      %1176 = vmatmul.mubr.bf16.gmra.mrb[0].mxu0 %v1093
      %v1177 = vpop.f32.mrb[0].mxu0
      %v1178 = vadd.f32 %v886, %v1177
      %v1179 = vpop.f32.mrb[0].mxu0
      %v1180 = vpop.f32.mrb[0].mxu0
      %v1181 = vadd.f32 %v889, %v1180
      %v1182 = vpop.f32.mrb[0].mxu0
      %1183 = vmatprep.mubr.bf16.mxu0 0
      %1184 = vmatmul.mubr.bf16.gmra.mrb[0].mxu0 %v1096
      %v1185 = vpop.f32.mrb[0].mxu0
      %v1186 = vadd.f32 %v894, %v1185
      %v1187 = vpop.f32.mrb[0].mxu0
      %v1188 = vpop.f32.mrb[0].mxu0
      %v1189 = vadd.f32 %v897, %v1188
      %v1190 = vpop.f32.mrb[0].mxu0
      %1191 = vmatprep.mubr.bf16.mxu0 0
      %1192 = vmatmul.mubr.bf16.gmra.mrb[0].mxu0 %v1099
      %v1193 = vpop.f32.mrb[0].mxu0
      %v1194 = vadd.f32 %v902, %v1193
      %v1195 = vpop.f32.mrb[0].mxu0
      %v1196 = vpop.f32.mrb[0].mxu0
      %v1197 = vadd.f32 %v905, %v1196
      %v1198 = vpop.f32.mrb[0].mxu0
      %1199 = vmatprep.mubr.bf16.mxu0 0
      %1200 = vmatmul.mubr.bf16.gmra.mrb[0].mxu0 %v1102
      %v1201 = vpop.f32.mrb[0].mxu0
      %v1202 = vadd.f32 %v910, %v1201
      %v1203 = vpop.f32.mrb[0].mxu0
      %v1204 = vpop.f32.mrb[0].mxu0
      %v1205 = vadd.f32 %v913, %v1204
      %v1206 = vpop.f32.mrb[0].mxu0
      %1207 = vmatprep.mubr.bf16.mxu0 0
      %1208 = vmatmul.mubr.bf16.gmra.mrb[0].mxu0 %v1105
      %v1209 = vpop.f32.mrb[0].mxu0
      %v1210 = vadd.f32 %v918, %v1209
      %v1211 = vpop.f32.mrb[0].mxu0
      %v1212 = vpop.f32.mrb[0].mxu0
      %v1213 = vadd.f32 %v921, %v1212
      %v1214 = vpop.f32.mrb[0].mxu0
      %1215 = vmatprep.mubr.bf16.mxu0 0
      %1216 = vmatmul.mubr.bf16.gmra.mrb[0].mxu0 %v1108
      %v1217 = vpop.f32.mrb[0].mxu0
      %v1218 = vadd.f32 %v926, %v1217
      %v1219 = vpop.f32.mrb[0].mxu0
      %v1220 = vpop.f32.mrb[0].mxu0
      %v1221 = vadd.f32 %v929, %v1220
      %v1222 = vpop.f32.mrb[0].mxu0
      %1223 = vmatprep.mubr.bf16.mxu0 0
      %1224 = vmatmul.mubr.bf16.gmra.mrb[0].mxu0 %v1111
      %v1225 = vpop.f32.mrb[0].mxu0
      %v1226 = vadd.f32 %v934, %v1225
      %v1227 = vpop.f32.mrb[0].mxu0
      %v1228 = vpop.f32.mrb[0].mxu0
      %v1229 = vadd.f32 %v937, %v1228
      %v1230 = vpop.f32.mrb[0].mxu0
      %1231 = vmatprep.mubr.bf16.mxu0 0
      %1232 = vmatmul.mubr.bf16.gmra.mrb[0].mxu0 %v1114
      %v1233 = vpop.f32.mrb[0].mxu0
      %v1234 = vadd.f32 %v942, %v1233
      %v1235 = vpop.f32.mrb[0].mxu0
      %v1236 = vpop.f32.mrb[0].mxu0
      %v1237 = vadd.f32 %v945, %v1236
      %v1238 = vpop.f32.mrb[0].mxu0
      %1239 = vmatprep.mubr.bf16.mxu0 0
      %1240 = vmatmul.mubr.bf16.gmra.mrb[0].mxu0 %v1117
      %v1241 = vpop.f32.mrb[0].mxu0
      %v1242 = vadd.f32 %v950, %v1241
      %v1243 = vpop.f32.mrb[0].mxu0
      %v1244 = vpop.f32.mrb[0].mxu0
      %v1245 = vadd.f32 %v953, %v1244
      %v1246 = vpop.f32.mrb[0].mxu0
      %1247 = vmatprep.mubr.bf16.mxu0 0
      %1248 = vmatmul.mubr.bf16.gmra.mrb[0].mxu0 %v1120
      %v1249 = vpop.f32.mrb[0].mxu0
      %v1250 = vadd.f32 %v958, %v1249
      %v1251 = vpop.f32.mrb[0].mxu0
      %v1252 = vpop.f32.mrb[0].mxu0
      %v1253 = vadd.f32 %v961, %v1252
      %v1254 = vpop.f32.mrb[0].mxu0
      %1255 = vmatprep.mubr.bf16.mxu0 0
      %1256 = vmatmul.mubr.bf16.gmra.mrb[0].mxu0 %v1123
      %v1257 = vpop.f32.mrb[0].mxu0
      %v1258 = vadd.f32 %v966, %v1257
      %v1259 = vpop.f32.mrb[0].mxu0
      %v1260 = vpop.f32.mrb[0].mxu0
      %v1261 = vadd.f32 %v969, %v1260
      %v1262 = vpop.f32.mrb[0].mxu0
      %1263 = vmatprep.mubr.bf16.mxu0 0
      %1264 = vmatmul.mubr.bf16.gmra.mrb[0].mxu0 %v1126
      %v1265 = vpop.f32.mrb[0].mxu0
      %v1266 = vadd.f32 %v974, %v1265
      %v1267 = vpop.f32.mrb[0].mxu0
      %v1268 = vpop.f32.mrb[0].mxu0
      %v1269 = vadd.f32 %v977, %v1268
      %v1270 = vpop.f32.mrb[0].mxu0
      %1271 = vmatprep.mubr.bf16.mxu0 0
      %1272 = vmatmul.mubr.bf16.gmra.mrb[0].mxu0 %v1129
      %v1273 = vpop.f32.mrb[0].mxu0
      %v1274 = vadd.f32 %v982, %v1273
      %v1275 = vpop.f32.mrb[0].mxu0
      %v1276 = vpop.f32.mrb[0].mxu0
      %v1277 = vadd.f32 %v985, %v1276
      %v1278 = vpop.f32.mrb[0].mxu0
      %1279 = vmatprep.mubr.bf16.mxu0 0
      %1280 = vmatmul.mubr.bf16.gmra.mrb[0].mxu0 %v1132
      %v1281 = vpop.f32.mrb[0].mxu0
      %v1282 = vadd.f32 %v990, %v1281
      %v1283 = vpop.f32.mrb[0].mxu0
      %v1284 = vpop.f32.mrb[0].mxu0
      %v1285 = vadd.f32 %v993, %v1284
      %v1286 = vpop.f32.mrb[0].mxu0
      %1287 = vmatprep.mubr.bf16.mxu0 0
      %1288 = vmatmul.mubr.bf16.gmra.mrb[0].mxu0 %v1135
      %v1289 = vpop.f32.mrb[0].mxu0
      %v1290 = vadd.f32 %v998, %v1289
      %v1291 = vpop.f32.mrb[0].mxu0
      %v1292 = vpop.f32.mrb[0].mxu0
      %v1293 = vadd.f32 %v1001, %v1292
      %v1294 = vpop.f32.mrb[0].mxu0
      %1295 = vmatprep.mubr.bf16.mxu0 0
      %1296 = vmatmul.mubr.bf16.gmra.mrb[0].mxu0 %v1138
      %v1297 = vpop.f32.mrb[0].mxu0
      %v1298 = vadd.f32 %v1006, %v1297
      %v1299 = vpop.f32.mrb[0].mxu0
      %v1300 = vpop.f32.mrb[0].mxu0
      %v1301 = vadd.f32 %v1009, %v1300
      %v1302 = vpop.f32.mrb[0].mxu0
      %1303 = vdwg.mxu0
      %vm1320 = vcmask 1042432
      %vm1321 = vcmask 1046532
      %vm1322 = vmor %vm1320, %vm1321
      %v1323 = vrot.slane %v306, 5
      %v1324 = vrot.slane %v1323, 4
      %v1325 = vrot.slane %v307, 5
      %v1326 = vsel %vm1322, %v1324, %v1325
      %v1327 = vrot.slane %v1325, 4
      %v1328 = vrot.slane %v308, 5
      %v1329 = vsel %vm1322, %v1327, %v1328
      %v1330 = vrot.slane %v309, 5
      %v1331 = vrot.slane %v1330, 4
      %v1332 = vrot.slane %v310, 5
      %v1333 = vsel %vm1322, %v1331, %v1332
      %v1334 = vrot.slane %v1332, 4
      %v1335 = vrot.slane %v311, 5
      %v1336 = vsel %vm1322, %v1334, %v1335
      %v1337 = vrot.slane %v312, 5
      %v1338 = vrot.slane %v1337, 4
      %v1339 = vrot.slane %v313, 5
      %v1340 = vsel %vm1322, %v1338, %v1339
      %v1341 = vrot.slane %v1339, 4
      %v1342 = vrot.slane %v314, 5
      %v1343 = vsel %vm1322, %v1341, %v1342
      %v1344 = vrot.slane %v315, 5
      %v1345 = vrot.slane %v1344, 4
      %v1346 = vrot.slane %v316, 5
      %v1347 = vsel %vm1322, %v1345, %v1346
      %v1348 = vrot.slane %v1346, 4
      %v1349 = vrot.slane %v317, 5
      %v1350 = vsel %vm1322, %v1348, %v1349
      %v1351 = vrot.slane %v318, 5
      %v1352 = vrot.slane %v1351, 4
      %v1353 = vrot.slane %v319, 5
      %v1354 = vsel %vm1322, %v1352, %v1353
      %v1355 = vrot.slane %v1353, 4
      %v1356 = vrot.slane %v320, 5
      %v1357 = vsel %vm1322, %v1355, %v1356
      %v1358 = vrot.slane %v321, 5
      %v1359 = vrot.slane %v1358, 4
      %v1360 = vrot.slane %v322, 5
      %v1361 = vsel %vm1322, %v1359, %v1360
      %v1362 = vrot.slane %v1360, 4
      %v1363 = vrot.slane %v323, 5
      %v1364 = vsel %vm1322, %v1362, %v1363
      %v1365 = vrot.slane %v324, 5
      %v1366 = vrot.slane %v1365, 4
      %v1367 = vrot.slane %v325, 5
      %v1368 = vsel %vm1322, %v1366, %v1367
      %v1369 = vrot.slane %v1367, 4
      %v1370 = vrot.slane %v326, 5
      %v1371 = vsel %vm1322, %v1369, %v1370
      %v1372 = vrot.slane %v327, 5
      %v1373 = vrot.slane %v1372, 4
      %v1374 = vrot.slane %v328, 5
      %v1375 = vsel %vm1322, %v1373, %v1374
      %v1376 = vrot.slane %v1374, 4
      %v1377 = vrot.slane %v329, 5
      %v1378 = vsel %vm1322, %v1376, %v1377
      %v1379 = vrot.slane %v330, 5
      %v1380 = vrot.slane %v1379, 4
      %v1381 = vrot.slane %v331, 5
      %v1382 = vsel %vm1322, %v1380, %v1381
      %v1383 = vrot.slane %v1381, 4
      %v1384 = vrot.slane %v332, 5
      %v1385 = vsel %vm1322, %v1383, %v1384
      %v1386 = vrot.slane %v333, 5
      %v1387 = vrot.slane %v1386, 4
      %v1388 = vrot.slane %v334, 5
      %v1389 = vsel %vm1322, %v1387, %v1388
      %v1390 = vrot.slane %v1388, 4
      %v1391 = vrot.slane %v335, 5
      %v1392 = vsel %vm1322, %v1390, %v1391
      %v1393 = vrot.slane %v336, 5
      %v1394 = vrot.slane %v1393, 4
      %v1395 = vrot.slane %v337, 5
      %v1396 = vsel %vm1322, %v1394, %v1395
      %v1397 = vrot.slane %v1395, 4
      %v1398 = vrot.slane %v338, 5
      %v1399 = vsel %vm1322, %v1397, %v1398
      %v1400 = vrot.slane %v339, 5
      %v1401 = vrot.slane %v1400, 4
      %v1402 = vrot.slane %v340, 5
      %v1403 = vsel %vm1322, %v1401, %v1402
      %v1404 = vrot.slane %v1402, 4
      %v1405 = vrot.slane %v341, 5
      %v1406 = vsel %vm1322, %v1404, %v1405
      %v1407 = vrot.slane %v342, 5
      %v1408 = vrot.slane %v1407, 4
      %v1409 = vrot.slane %v343, 5
      %v1410 = vsel %vm1322, %v1408, %v1409
      %v1411 = vrot.slane %v1409, 4
      %v1412 = vrot.slane %v344, 5
      %v1413 = vsel %vm1322, %v1411, %v1412
      %v1414 = vrot.slane %v345, 5
      %v1415 = vrot.slane %v1414, 4
      %v1416 = vrot.slane %v346, 5
      %v1417 = vsel %vm1322, %v1415, %v1416
      %v1418 = vrot.slane %v1416, 4
      %v1419 = vrot.slane %v347, 5
      %v1420 = vsel %vm1322, %v1418, %v1419
      %v1421 = vrot.slane %v348, 5
      %v1422 = vrot.slane %v1421, 4
      %v1423 = vrot.slane %v349, 5
      %v1424 = vsel %vm1322, %v1422, %v1423
      %v1425 = vrot.slane %v1423, 4
      %v1426 = vrot.slane %v350, 5
      %v1427 = vsel %vm1322, %v1425, %v1426
      %v1428 = vrot.slane %v351, 5
      %v1429 = vrot.slane %v1428, 4
      %v1430 = vrot.slane %v352, 5
      %v1431 = vsel %vm1322, %v1429, %v1430
      %v1432 = vrot.slane %v1430, 4
      %v1433 = vrot.slane %v353, 5
      %v1434 = vsel %vm1322, %v1432, %v1433
      %s1435 = scalar_lea.vmem %s1, 4
      %v1436 = vld [vmem:[%s1435] sm:$0x3]
      %v1437 = vunpack.c.l.b16 %v1326
      %v1438 = vunpack.c.l.b16 %v1329
      %v1439 = vunpack.c.l.b16 %v1333
      %v1440 = vunpack.c.l.b16 %v1336
      %v1441 = vunpack.c.l.b16 %v1340
      %v1442 = vunpack.c.l.b16 %v1343
      %v1443 = vunpack.c.l.b16 %v1347
      %v1444 = vunpack.c.l.b16 %v1350
      %v1445 = vunpack.c.l.b16 %v1354
      %v1446 = vunpack.c.l.b16 %v1357
      %v1447 = vunpack.c.l.b16 %v1361
      %v1448 = vunpack.c.l.b16 %v1364
      %v1449 = vunpack.c.l.b16 %v1368
      %v1450 = vunpack.c.l.b16 %v1371
      %v1451 = vunpack.c.l.b16 %v1375
      %v1452 = vunpack.c.l.b16 %v1378
      %v1453 = vunpack.c.l.b16 %v1382
      %v1454 = vunpack.c.l.b16 %v1385
      %v1455 = vunpack.c.l.b16 %v1389
      %v1456 = vunpack.c.l.b16 %v1392
      %v1457 = vunpack.c.l.b16 %v1396
      %v1458 = vunpack.c.l.b16 %v1399
      %v1459 = vunpack.c.l.b16 %v1403
      %v1460 = vunpack.c.l.b16 %v1406
      %v1461 = vunpack.c.l.b16 %v1410
      %v1462 = vunpack.c.l.b16 %v1413
      %v1463 = vunpack.c.l.b16 %v1417
      %v1464 = vunpack.c.l.b16 %v1420
      %v1465 = vunpack.c.l.b16 %v1424
      %v1466 = vunpack.c.l.b16 %v1427
      %v1467 = vunpack.c.l.b16 %v1431
      %v1468 = vunpack.c.l.b16 %v1434
      %v1469 = vpack.c.b16 %v1438, %v1437
      %v1470 = vpack.c.b16 %v1440, %v1439
      %v1471 = vpack.c.b16 %v1442, %v1441
      %v1472 = vpack.c.b16 %v1444, %v1443
      %v1473 = vpack.c.b16 %v1446, %v1445
      %v1474 = vpack.c.b16 %v1448, %v1447
      %v1475 = vpack.c.b16 %v1450, %v1449
      %v1476 = vpack.c.b16 %v1452, %v1451
      %v1477 = vpack.c.b16 %v1454, %v1453
      %v1478 = vpack.c.b16 %v1456, %v1455
      %v1479 = vpack.c.b16 %v1458, %v1457
      %v1480 = vpack.c.b16 %v1460, %v1459
      %v1481 = vpack.c.b16 %v1462, %v1461
      %v1482 = vpack.c.b16 %v1464, %v1463
      %v1483 = vpack.c.b16 %v1466, %v1465
      %v1484 = vpack.c.b16 %v1468, %v1467
      %v1486 = vsel %vm798, %v1469, 0
      %v1489 = vsel %vm798, %v1470, 0
      %v1492 = vsel %vm798, %v1471, 0
      %v1495 = vsel %vm798, %v1472, 0
      %v1498 = vsel %vm798, %v1473, 0
      %v1501 = vsel %vm798, %v1474, 0
      %v1504 = vsel %vm798, %v1475, 0
      %v1507 = vsel %vm798, %v1476, 0
      %v1510 = vsel %vm798, %v1477, 0
      %v1513 = vsel %vm798, %v1478, 0
      %v1516 = vsel %vm798, %v1479, 0
      %v1519 = vsel %vm798, %v1480, 0
      %v1522 = vsel %vm798, %v1481, 0
      %v1525 = vsel %vm798, %v1482, 0
      %v1528 = vsel %vm798, %v1483, 0
      %v1531 = vsel %vm798, %v1484, 0
      %v1534 = vsel %vm847, %v1436, 0
      %1536 = vmatprep.subr.bf16.mxu0 0
      %1537 = vmatpush1.bf16.msra.mxu0 %v1534
      %1538 = vmatprep.subr.bf16.mxu0 0
      %1539 = vmatpush1.bf16.msra.mxu0 0
      %1540 = vmatprep.subr.bf16.mxu0 0
      %1541 = vmatpush1.bf16.msra.mxu0 0
      %1542 = vmatprep.subr.bf16.mxu0 0
      %1543 = vmatpush1.bf16.msra.mxu0 0
      %1544 = vmatprep.subr.bf16.mxu0 0
      %1545 = vmatpush1.bf16.msra.mxu0 0
      %1546 = vmatprep.subr.bf16.mxu0 0
      %1547 = vmatpush1.bf16.msra.mxu0 0
      %1548 = vmatprep.subr.bf16.mxu0 0
      %1549 = vmatpush1.bf16.msra.mxu0 0
      %1550 = vmatprep.subr.bf16.mxu0 0
      %1551 = vmatpush1.bf16.msra.mxu0 0
      %1552 = vmatprep.subr.bf16.mxu0 0
      %1553 = vmatpush1.bf16.msra.mxu0 0
      %1554 = vmatprep.subr.bf16.mxu0 0
      %1555 = vmatpush1.bf16.msra.mxu0 0
      %1556 = vmatprep.subr.bf16.mxu0 0
      %1557 = vmatpush1.bf16.msra.mxu0 0
      %1558 = vmatprep.subr.bf16.mxu0 0
      %1559 = vmatpush1.bf16.msra.mxu0 0
      %1560 = vmatprep.subr.bf16.mxu0 0
      %1561 = vmatpush1.bf16.msra.mxu0 0
      %1562 = vmatprep.subr.bf16.mxu0 0
      %1563 = vmatpush1.bf16.msra.mxu0 0
      %1564 = vmatprep.subr.bf16.mxu0 0
      %1565 = vmatpush1.bf16.msra.mxu0 0
      %1566 = vmatprep.subr.bf16.mxu0 0
      %1567 = vmatpush1.bf16.msra.mxu0 0
      %1568 = vmatprep.mubr.bf16.mxu0 0
      %1569 = vmatmul.mubr.bf16.gmra.mrb[0].mxu0 %v1486
      %v1570 = vpop.f32.mrb[0].mxu0
      %v1571 = vadd.f32 0.0, %v1570
      %v1572 = vpop.f32.mrb[0].mxu0
      %v1573 = vpop.f32.mrb[0].mxu0
      %v1574 = vadd.f32 0.0, %v1573
      %v1575 = vpop.f32.mrb[0].mxu0
      %1576 = vmatprep.mubr.bf16.mxu0 0
      %1577 = vmatmul.mubr.bf16.gmra.mrb[0].mxu0 %v1489
      %v1578 = vpop.f32.mrb[0].mxu0
      %v1579 = vadd.f32 0.0, %v1578
      %v1580 = vpop.f32.mrb[0].mxu0
      %v1581 = vpop.f32.mrb[0].mxu0
      %v1582 = vadd.f32 0.0, %v1581
      %v1583 = vpop.f32.mrb[0].mxu0
      %1584 = vmatprep.mubr.bf16.mxu0 0
      %1585 = vmatmul.mubr.bf16.gmra.mrb[0].mxu0 %v1492
      %v1586 = vpop.f32.mrb[0].mxu0
      %v1587 = vadd.f32 0.0, %v1586
      %v1588 = vpop.f32.mrb[0].mxu0
      %v1589 = vpop.f32.mrb[0].mxu0
      %v1590 = vadd.f32 0.0, %v1589
      %v1591 = vpop.f32.mrb[0].mxu0
      %1592 = vmatprep.mubr.bf16.mxu0 0
      %1593 = vmatmul.mubr.bf16.gmra.mrb[0].mxu0 %v1495
      %v1594 = vpop.f32.mrb[0].mxu0
      %v1595 = vadd.f32 0.0, %v1594
      %v1596 = vpop.f32.mrb[0].mxu0
      %v1597 = vpop.f32.mrb[0].mxu0
      %v1598 = vadd.f32 0.0, %v1597
      %v1599 = vpop.f32.mrb[0].mxu0
      %1600 = vmatprep.mubr.bf16.mxu0 0
      %1601 = vmatmul.mubr.bf16.gmra.mrb[0].mxu0 %v1498
      %v1602 = vpop.f32.mrb[0].mxu0
      %v1603 = vadd.f32 0.0, %v1602
      %v1604 = vpop.f32.mrb[0].mxu0
      %v1605 = vpop.f32.mrb[0].mxu0
      %v1606 = vadd.f32 0.0, %v1605
      %v1607 = vpop.f32.mrb[0].mxu0
      %1608 = vmatprep.mubr.bf16.mxu0 0
      %1609 = vmatmul.mubr.bf16.gmra.mrb[0].mxu0 %v1501
      %v1610 = vpop.f32.mrb[0].mxu0
      %v1611 = vadd.f32 0.0, %v1610
      %v1612 = vpop.f32.mrb[0].mxu0
      %v1613 = vpop.f32.mrb[0].mxu0
      %v1614 = vadd.f32 0.0, %v1613
      %v1615 = vpop.f32.mrb[0].mxu0
      %1616 = vmatprep.mubr.bf16.mxu0 0
      %1617 = vmatmul.mubr.bf16.gmra.mrb[0].mxu0 %v1504
      %v1618 = vpop.f32.mrb[0].mxu0
      %v1619 = vadd.f32 0.0, %v1618
      %v1620 = vpop.f32.mrb[0].mxu0
      %v1621 = vpop.f32.mrb[0].mxu0
      %v1622 = vadd.f32 0.0, %v1621
      %v1623 = vpop.f32.mrb[0].mxu0
      %1624 = vmatprep.mubr.bf16.mxu0 0
      %1625 = vmatmul.mubr.bf16.gmra.mrb[0].mxu0 %v1507
      %v1626 = vpop.f32.mrb[0].mxu0
      %v1627 = vadd.f32 0.0, %v1626
      %v1628 = vpop.f32.mrb[0].mxu0
      %v1629 = vpop.f32.mrb[0].mxu0
      %v1630 = vadd.f32 0.0, %v1629
      %v1631 = vpop.f32.mrb[0].mxu0
      %1632 = vmatprep.mubr.bf16.mxu0 0
      %1633 = vmatmul.mubr.bf16.gmra.mrb[0].mxu0 %v1510
      %v1634 = vpop.f32.mrb[0].mxu0
      %v1635 = vadd.f32 0.0, %v1634
      %v1636 = vpop.f32.mrb[0].mxu0
      %v1637 = vpop.f32.mrb[0].mxu0
      %v1638 = vadd.f32 0.0, %v1637
      %v1639 = vpop.f32.mrb[0].mxu0
      %1640 = vmatprep.mubr.bf16.mxu0 0
      %1641 = vmatmul.mubr.bf16.gmra.mrb[0].mxu0 %v1513
      %v1642 = vpop.f32.mrb[0].mxu0
      %v1643 = vadd.f32 0.0, %v1642
      %v1644 = vpop.f32.mrb[0].mxu0
      %v1645 = vpop.f32.mrb[0].mxu0
      %v1646 = vadd.f32 0.0, %v1645
      %v1647 = vpop.f32.mrb[0].mxu0
      %1648 = vmatprep.mubr.bf16.mxu0 0
      %1649 = vmatmul.mubr.bf16.gmra.mrb[0].mxu0 %v1516
      %v1650 = vpop.f32.mrb[0].mxu0
      %v1651 = vadd.f32 0.0, %v1650
      %v1652 = vpop.f32.mrb[0].mxu0
      %v1653 = vpop.f32.mrb[0].mxu0
      %v1654 = vadd.f32 0.0, %v1653
      %v1655 = vpop.f32.mrb[0].mxu0
      %1656 = vmatprep.mubr.bf16.mxu0 0
      %1657 = vmatmul.mubr.bf16.gmra.mrb[0].mxu0 %v1519
      %v1658 = vpop.f32.mrb[0].mxu0
      %v1659 = vadd.f32 0.0, %v1658
      %v1660 = vpop.f32.mrb[0].mxu0
      %v1661 = vpop.f32.mrb[0].mxu0
      %v1662 = vadd.f32 0.0, %v1661
      %v1663 = vpop.f32.mrb[0].mxu0
      %1664 = vmatprep.mubr.bf16.mxu0 0
      %1665 = vmatmul.mubr.bf16.gmra.mrb[0].mxu0 %v1522
      %v1666 = vpop.f32.mrb[0].mxu0
      %v1667 = vadd.f32 0.0, %v1666
      %v1668 = vpop.f32.mrb[0].mxu0
      %v1669 = vpop.f32.mrb[0].mxu0
      %v1670 = vadd.f32 0.0, %v1669
      %v1671 = vpop.f32.mrb[0].mxu0
      %1672 = vmatprep.mubr.bf16.mxu0 0
      %1673 = vmatmul.mubr.bf16.gmra.mrb[0].mxu0 %v1525
      %v1674 = vpop.f32.mrb[0].mxu0
      %v1675 = vadd.f32 0.0, %v1674
      %v1676 = vpop.f32.mrb[0].mxu0
      %v1677 = vpop.f32.mrb[0].mxu0
      %v1678 = vadd.f32 0.0, %v1677
      %v1679 = vpop.f32.mrb[0].mxu0
      %1680 = vmatprep.mubr.bf16.mxu0 0
      %1681 = vmatmul.mubr.bf16.gmra.mrb[0].mxu0 %v1528
      %v1682 = vpop.f32.mrb[0].mxu0
      %v1683 = vadd.f32 0.0, %v1682
      %v1684 = vpop.f32.mrb[0].mxu0
      %v1685 = vpop.f32.mrb[0].mxu0
      %v1686 = vadd.f32 0.0, %v1685
      %v1687 = vpop.f32.mrb[0].mxu0
      %1688 = vmatprep.mubr.bf16.mxu0 0
      %1689 = vmatmul.mubr.bf16.gmra.mrb[0].mxu0 %v1531
      %v1690 = vpop.f32.mrb[0].mxu0
      %v1691 = vadd.f32 0.0, %v1690
      %v1692 = vpop.f32.mrb[0].mxu0
      %v1693 = vpop.f32.mrb[0].mxu0
      %v1694 = vadd.f32 0.0, %v1693
      %v1695 = vpop.f32.mrb[0].mxu0
      %1696 = vdwg.mxu0
      %v1697 = vadd.f32 %v1178, %v1571
      %v1698 = vadd.f32 %v1181, %v1574
      %v1699 = vadd.f32 %v1186, %v1579
      %v1700 = vadd.f32 %v1189, %v1582
      %v1701 = vadd.f32 %v1194, %v1587
      %v1702 = vadd.f32 %v1197, %v1590
      %v1703 = vadd.f32 %v1202, %v1595
      %v1704 = vadd.f32 %v1205, %v1598
      %v1705 = vadd.f32 %v1210, %v1603
      %v1706 = vadd.f32 %v1213, %v1606
      %v1707 = vadd.f32 %v1218, %v1611
      %v1708 = vadd.f32 %v1221, %v1614
      %v1709 = vadd.f32 %v1226, %v1619
      %v1710 = vadd.f32 %v1229, %v1622
      %v1711 = vadd.f32 %v1234, %v1627
      %v1712 = vadd.f32 %v1237, %v1630
      %v1713 = vadd.f32 %v1242, %v1635
      %v1714 = vadd.f32 %v1245, %v1638
      %v1715 = vadd.f32 %v1250, %v1643
      %v1716 = vadd.f32 %v1253, %v1646
      %v1717 = vadd.f32 %v1258, %v1651
      %v1718 = vadd.f32 %v1261, %v1654
      %v1719 = vadd.f32 %v1266, %v1659
      %v1720 = vadd.f32 %v1269, %v1662
      %v1721 = vadd.f32 %v1274, %v1667
      %v1722 = vadd.f32 %v1277, %v1670
      %v1723 = vadd.f32 %v1282, %v1675
      %v1724 = vadd.f32 %v1285, %v1678
      %v1725 = vadd.f32 %v1290, %v1683
      %v1726 = vadd.f32 %v1293, %v1686
      %v1727 = vadd.f32 %v1298, %v1691
      %v1728 = vadd.f32 %v1301, %v1694
      %s1729 = scalar_lea.vmem %s1, 6
      %v1730 = vld [vmem:[%s1729] sm:$0x3]
      %v1733 = vunpack.c.l.b16 %v354
      %v1734 = vunpack.c.l.b16 %v355
      %v1735 = vpack.c.b16 %v1734, %v1733
      %v1737 = vsel %vm798, %v1735, 0
      %v1740 = vsel %vm847, %v1730, 0
      %1742 = vmatprep.subr.bf16.mxu0 0
      %1743 = vmatpush1.bf16.msra.mxu0 %v1740
      %1744 = vmatprep.subr.bf16.mxu0 0
      %1745 = vmatpush1.bf16.msra.mxu0 0
      %1746 = vmatprep.subr.bf16.mxu0 0
      %1747 = vmatpush1.bf16.msra.mxu0 0
      %1748 = vmatprep.subr.bf16.mxu0 0
      %1749 = vmatpush1.bf16.msra.mxu0 0
      %1750 = vmatprep.subr.bf16.mxu0 0
      %1751 = vmatpush1.bf16.msra.mxu0 0
      %1752 = vmatprep.subr.bf16.mxu0 0
      %1753 = vmatpush1.bf16.msra.mxu0 0
      %1754 = vmatprep.subr.bf16.mxu0 0
      %1755 = vmatpush1.bf16.msra.mxu0 0
      %1756 = vmatprep.subr.bf16.mxu0 0
      %1757 = vmatpush1.bf16.msra.mxu0 0
      %1758 = vmatprep.subr.bf16.mxu0 0
      %1759 = vmatpush1.bf16.msra.mxu0 0
      %1760 = vmatprep.subr.bf16.mxu0 0
      %1761 = vmatpush1.bf16.msra.mxu0 0
      %1762 = vmatprep.subr.bf16.mxu0 0
      %1763 = vmatpush1.bf16.msra.mxu0 0
      %1764 = vmatprep.subr.bf16.mxu0 0
      %1765 = vmatpush1.bf16.msra.mxu0 0
      %1766 = vmatprep.subr.bf16.mxu0 0
      %1767 = vmatpush1.bf16.msra.mxu0 0
      %1768 = vmatprep.subr.bf16.mxu0 0
      %1769 = vmatpush1.bf16.msra.mxu0 0
      %1770 = vmatprep.subr.bf16.mxu0 0
      %1771 = vmatpush1.bf16.msra.mxu0 0
      %1772 = vmatprep.subr.bf16.mxu0 0
      %1773 = vmatpush1.bf16.msra.mxu0 0
      %1774 = vmatprep.mubr.bf16.mxu0 0
      %1775 = vmatmul.mubr.bf16.gmra.mrb[0].mxu0 %v1096
      %v1776 = vpop.f32.mrb[0].mxu0
      %v1777 = vadd.f32 0.0, %v1776
      %v1778 = vpop.f32.mrb[0].mxu0
      %v1779 = vpop.f32.mrb[0].mxu0
      %v1780 = vadd.f32 0.0, %v1779
      %v1781 = vpop.f32.mrb[0].mxu0
      %1782 = vmatprep.mubr.bf16.mxu0 0
      %1783 = vmatmul.mubr.bf16.gmra.mrb[0].mxu0 %v1099
      %v1784 = vpop.f32.mrb[0].mxu0
      %v1785 = vadd.f32 0.0, %v1784
      %v1786 = vpop.f32.mrb[0].mxu0
      %v1787 = vpop.f32.mrb[0].mxu0
      %v1788 = vadd.f32 0.0, %v1787
      %v1789 = vpop.f32.mrb[0].mxu0
      %1790 = vmatprep.mubr.bf16.mxu0 0
      %1791 = vmatmul.mubr.bf16.gmra.mrb[0].mxu0 %v1102
      %v1792 = vpop.f32.mrb[0].mxu0
      %v1793 = vadd.f32 0.0, %v1792
      %v1794 = vpop.f32.mrb[0].mxu0
      %v1795 = vpop.f32.mrb[0].mxu0
      %v1796 = vadd.f32 0.0, %v1795
      %v1797 = vpop.f32.mrb[0].mxu0
      %1798 = vmatprep.mubr.bf16.mxu0 0
      %1799 = vmatmul.mubr.bf16.gmra.mrb[0].mxu0 %v1105
      %v1800 = vpop.f32.mrb[0].mxu0
      %v1801 = vadd.f32 0.0, %v1800
      %v1802 = vpop.f32.mrb[0].mxu0
      %v1803 = vpop.f32.mrb[0].mxu0
      %v1804 = vadd.f32 0.0, %v1803
      %v1805 = vpop.f32.mrb[0].mxu0
      %1806 = vmatprep.mubr.bf16.mxu0 0
      %1807 = vmatmul.mubr.bf16.gmra.mrb[0].mxu0 %v1108
      %v1808 = vpop.f32.mrb[0].mxu0
      %v1809 = vadd.f32 0.0, %v1808
      %v1810 = vpop.f32.mrb[0].mxu0
      %v1811 = vpop.f32.mrb[0].mxu0
      %v1812 = vadd.f32 0.0, %v1811
      %v1813 = vpop.f32.mrb[0].mxu0
      %1814 = vmatprep.mubr.bf16.mxu0 0
      %1815 = vmatmul.mubr.bf16.gmra.mrb[0].mxu0 %v1111
      %v1816 = vpop.f32.mrb[0].mxu0
      %v1817 = vadd.f32 0.0, %v1816
      %v1818 = vpop.f32.mrb[0].mxu0
      %v1819 = vpop.f32.mrb[0].mxu0
      %v1820 = vadd.f32 0.0, %v1819
      %v1821 = vpop.f32.mrb[0].mxu0
      %1822 = vmatprep.mubr.bf16.mxu0 0
      %1823 = vmatmul.mubr.bf16.gmra.mrb[0].mxu0 %v1114
      %v1824 = vpop.f32.mrb[0].mxu0
      %v1825 = vadd.f32 0.0, %v1824
      %v1826 = vpop.f32.mrb[0].mxu0
      %v1827 = vpop.f32.mrb[0].mxu0
      %v1828 = vadd.f32 0.0, %v1827
      %v1829 = vpop.f32.mrb[0].mxu0
      %1830 = vmatprep.mubr.bf16.mxu0 0
      %1831 = vmatmul.mubr.bf16.gmra.mrb[0].mxu0 %v1117
      %v1832 = vpop.f32.mrb[0].mxu0
      %v1833 = vadd.f32 0.0, %v1832
      %v1834 = vpop.f32.mrb[0].mxu0
      %v1835 = vpop.f32.mrb[0].mxu0
      %v1836 = vadd.f32 0.0, %v1835
      %v1837 = vpop.f32.mrb[0].mxu0
      %1838 = vmatprep.mubr.bf16.mxu0 0
      %1839 = vmatmul.mubr.bf16.gmra.mrb[0].mxu0 %v1120
      %v1840 = vpop.f32.mrb[0].mxu0
      %v1841 = vadd.f32 0.0, %v1840
      %v1842 = vpop.f32.mrb[0].mxu0
      %v1843 = vpop.f32.mrb[0].mxu0
      %v1844 = vadd.f32 0.0, %v1843
      %v1845 = vpop.f32.mrb[0].mxu0
      %1846 = vmatprep.mubr.bf16.mxu0 0
      %1847 = vmatmul.mubr.bf16.gmra.mrb[0].mxu0 %v1123
      %v1848 = vpop.f32.mrb[0].mxu0
      %v1849 = vadd.f32 0.0, %v1848
      %v1850 = vpop.f32.mrb[0].mxu0
      %v1851 = vpop.f32.mrb[0].mxu0
      %v1852 = vadd.f32 0.0, %v1851
      %v1853 = vpop.f32.mrb[0].mxu0
      %1854 = vmatprep.mubr.bf16.mxu0 0
      %1855 = vmatmul.mubr.bf16.gmra.mrb[0].mxu0 %v1126
      %v1856 = vpop.f32.mrb[0].mxu0
      %v1857 = vadd.f32 0.0, %v1856
      %v1858 = vpop.f32.mrb[0].mxu0
      %v1859 = vpop.f32.mrb[0].mxu0
      %v1860 = vadd.f32 0.0, %v1859
      %v1861 = vpop.f32.mrb[0].mxu0
      %1862 = vmatprep.mubr.bf16.mxu0 0
      %1863 = vmatmul.mubr.bf16.gmra.mrb[0].mxu0 %v1129
      %v1864 = vpop.f32.mrb[0].mxu0
      %v1865 = vadd.f32 0.0, %v1864
      %v1866 = vpop.f32.mrb[0].mxu0
      %v1867 = vpop.f32.mrb[0].mxu0
      %v1868 = vadd.f32 0.0, %v1867
      %v1869 = vpop.f32.mrb[0].mxu0
      %1870 = vmatprep.mubr.bf16.mxu0 0
      %1871 = vmatmul.mubr.bf16.gmra.mrb[0].mxu0 %v1132
      %v1872 = vpop.f32.mrb[0].mxu0
      %v1873 = vadd.f32 0.0, %v1872
      %v1874 = vpop.f32.mrb[0].mxu0
      %v1875 = vpop.f32.mrb[0].mxu0
      %v1876 = vadd.f32 0.0, %v1875
      %v1877 = vpop.f32.mrb[0].mxu0
      %1878 = vmatprep.mubr.bf16.mxu0 0
      %1879 = vmatmul.mubr.bf16.gmra.mrb[0].mxu0 %v1135
      %v1880 = vpop.f32.mrb[0].mxu0
      %v1881 = vadd.f32 0.0, %v1880
      %v1882 = vpop.f32.mrb[0].mxu0
      %v1883 = vpop.f32.mrb[0].mxu0
      %v1884 = vadd.f32 0.0, %v1883
      %v1885 = vpop.f32.mrb[0].mxu0
      %1886 = vmatprep.mubr.bf16.mxu0 0
      %1887 = vmatmul.mubr.bf16.gmra.mrb[0].mxu0 %v1138
      %v1888 = vpop.f32.mrb[0].mxu0
      %v1889 = vadd.f32 0.0, %v1888
      %v1890 = vpop.f32.mrb[0].mxu0
      %v1891 = vpop.f32.mrb[0].mxu0
      %v1892 = vadd.f32 0.0, %v1891
      %v1893 = vpop.f32.mrb[0].mxu0
      %1894 = vmatprep.mubr.bf16.mxu0 0
      %1895 = vmatmul.mubr.bf16.gmra.mrb[0].mxu0 %v1737
      %v1896 = vpop.f32.mrb[0].mxu0
      %v1897 = vadd.f32 0.0, %v1896
      %v1898 = vpop.f32.mrb[0].mxu0
      %v1899 = vpop.f32.mrb[0].mxu0
      %v1900 = vadd.f32 0.0, %v1899
      %v1901 = vpop.f32.mrb[0].mxu0
      %1902 = vdwg.mxu0
      %v1903 = vadd.f32 %v1697, %v1777
      %v1904 = vadd.f32 %v1698, %v1780
      %v1905 = vadd.f32 %v1699, %v1785
      %v1906 = vadd.f32 %v1700, %v1788
      %v1907 = vadd.f32 %v1701, %v1793
      %v1908 = vadd.f32 %v1702, %v1796
      %v1909 = vadd.f32 %v1703, %v1801
      %v1910 = vadd.f32 %v1704, %v1804
      %v1911 = vadd.f32 %v1705, %v1809
      %v1912 = vadd.f32 %v1706, %v1812
      %v1913 = vadd.f32 %v1707, %v1817
      %v1914 = vadd.f32 %v1708, %v1820
      %v1915 = vadd.f32 %v1709, %v1825
      %v1916 = vadd.f32 %v1710, %v1828
      %v1917 = vadd.f32 %v1711, %v1833
      %v1918 = vadd.f32 %v1712, %v1836
      %v1919 = vadd.f32 %v1713, %v1841
      %v1920 = vadd.f32 %v1714, %v1844
      %v1921 = vadd.f32 %v1715, %v1849
      %v1922 = vadd.f32 %v1716, %v1852
      %v1923 = vadd.f32 %v1717, %v1857
      %v1924 = vadd.f32 %v1718, %v1860
      %v1925 = vadd.f32 %v1719, %v1865
      %v1926 = vadd.f32 %v1720, %v1868
      %v1927 = vadd.f32 %v1721, %v1873
      %v1928 = vadd.f32 %v1722, %v1876
      %v1929 = vadd.f32 %v1723, %v1881
      %v1930 = vadd.f32 %v1724, %v1884
      %v1931 = vadd.f32 %v1725, %v1889
      %v1932 = vadd.f32 %v1726, %v1892
      %v1933 = vadd.f32 %v1727, %v1897
      %v1934 = vadd.f32 %v1728, %v1900
      %v1936 = vshrl.u32 %v354, 16
      %v1938 = vrot.slane %v1936, 4
      %v1939 = vshll.u32 %v354, 16
      %v1941 = vrot.slane %v1939, 5
      %v1942 = vor.u32 %v1938, %v1941
      %v1943 = vrot.slane %v1942, 4
      %v1945 = vshll.u32 %v355, 16
      %v1947 = vrot.slane %v1945, 5
      %v1948 = vsel %vm363, %v1943, %v1947
      %v1949 = vshrl.u32 %v355, 16
      %v1951 = vrot.slane %v1949, 4
      %v1952 = vor.u32 %v1951, %v1947
      %v1953 = vrot.slane %v1952, 4
      %v1955 = vshll.u32 %v356, 16
      %v1957 = vrot.slane %v1955, 5
      %v1958 = vsel %vm363, %v1953, %v1957
      %s1959 = scalar_lea.vmem %s1, 8
      %v1960 = vld [vmem:[%s1959] sm:$0x3]
      %v1961 = vunpack.c.l.b16 %v1948
      %v1962 = vunpack.c.l.b16 %v1958
      %v1963 = vpack.c.b16 %v1962, %v1961
      %v1965 = vsel %vm798, %v1963, 0
      %v1968 = vsel %vm847, %v1960, 0
      %1970 = vmatprep.subr.bf16.mxu0 0
      %1971 = vmatpush1.bf16.msra.mxu0 %v1968
      %1972 = vmatprep.subr.bf16.mxu0 0
      %1973 = vmatpush1.bf16.msra.mxu0 0
      %1974 = vmatprep.subr.bf16.mxu0 0
      %1975 = vmatpush1.bf16.msra.mxu0 0
      %1976 = vmatprep.subr.bf16.mxu0 0
      %1977 = vmatpush1.bf16.msra.mxu0 0
      %1978 = vmatprep.subr.bf16.mxu0 0
      %1979 = vmatpush1.bf16.msra.mxu0 0
      %1980 = vmatprep.subr.bf16.mxu0 0
      %1981 = vmatpush1.bf16.msra.mxu0 0
      %1982 = vmatprep.subr.bf16.mxu0 0
      %1983 = vmatpush1.bf16.msra.mxu0 0
      %1984 = vmatprep.subr.bf16.mxu0 0
      %1985 = vmatpush1.bf16.msra.mxu0 0
      %1986 = vmatprep.subr.bf16.mxu0 0
      %1987 = vmatpush1.bf16.msra.mxu0 0
      %1988 = vmatprep.subr.bf16.mxu0 0
      %1989 = vmatpush1.bf16.msra.mxu0 0
      %1990 = vmatprep.subr.bf16.mxu0 0
      %1991 = vmatpush1.bf16.msra.mxu0 0
      %1992 = vmatprep.subr.bf16.mxu0 0
      %1993 = vmatpush1.bf16.msra.mxu0 0
      %1994 = vmatprep.subr.bf16.mxu0 0
      %1995 = vmatpush1.bf16.msra.mxu0 0
      %1996 = vmatprep.subr.bf16.mxu0 0
      %1997 = vmatpush1.bf16.msra.mxu0 0
      %1998 = vmatprep.subr.bf16.mxu0 0
      %1999 = vmatpush1.bf16.msra.mxu0 0
      %2000 = vmatprep.subr.bf16.mxu0 0
      %2001 = vmatpush1.bf16.msra.mxu0 0
      %2002 = vmatprep.mubr.bf16.mxu0 0
      %2003 = vmatmul.mubr.bf16.gmra.mrb[0].mxu0 %v803
      %v2004 = vpop.f32.mrb[0].mxu0
      %v2005 = vadd.f32 0.0, %v2004
      %v2006 = vpop.f32.mrb[0].mxu0
      %v2007 = vpop.f32.mrb[0].mxu0
      %v2008 = vadd.f32 0.0, %v2007
      %v2009 = vpop.f32.mrb[0].mxu0
      %2010 = vmatprep.mubr.bf16.mxu0 0
      %2011 = vmatmul.mubr.bf16.gmra.mrb[0].mxu0 %v806
      %v2012 = vpop.f32.mrb[0].mxu0
      %v2013 = vadd.f32 0.0, %v2012
      %v2014 = vpop.f32.mrb[0].mxu0
      %v2015 = vpop.f32.mrb[0].mxu0
      %v2016 = vadd.f32 0.0, %v2015
      %v2017 = vpop.f32.mrb[0].mxu0
      %2018 = vmatprep.mubr.bf16.mxu0 0
      %2019 = vmatmul.mubr.bf16.gmra.mrb[0].mxu0 %v809
      %v2020 = vpop.f32.mrb[0].mxu0
      %v2021 = vadd.f32 0.0, %v2020
      %v2022 = vpop.f32.mrb[0].mxu0
      %v2023 = vpop.f32.mrb[0].mxu0
      %v2024 = vadd.f32 0.0, %v2023
      %v2025 = vpop.f32.mrb[0].mxu0
      %2026 = vmatprep.mubr.bf16.mxu0 0
      %2027 = vmatmul.mubr.bf16.gmra.mrb[0].mxu0 %v812
      %v2028 = vpop.f32.mrb[0].mxu0
      %v2029 = vadd.f32 0.0, %v2028
      %v2030 = vpop.f32.mrb[0].mxu0
      %v2031 = vpop.f32.mrb[0].mxu0
      %v2032 = vadd.f32 0.0, %v2031
      %v2033 = vpop.f32.mrb[0].mxu0
      %2034 = vmatprep.mubr.bf16.mxu0 0
      %2035 = vmatmul.mubr.bf16.gmra.mrb[0].mxu0 %v815
      %v2036 = vpop.f32.mrb[0].mxu0
      %v2037 = vadd.f32 0.0, %v2036
      %v2038 = vpop.f32.mrb[0].mxu0
      %v2039 = vpop.f32.mrb[0].mxu0
      %v2040 = vadd.f32 0.0, %v2039
      %v2041 = vpop.f32.mrb[0].mxu0
      %2042 = vmatprep.mubr.bf16.mxu0 0
      %2043 = vmatmul.mubr.bf16.gmra.mrb[0].mxu0 %v818
      %v2044 = vpop.f32.mrb[0].mxu0
      %v2045 = vadd.f32 0.0, %v2044
      %v2046 = vpop.f32.mrb[0].mxu0
      %v2047 = vpop.f32.mrb[0].mxu0
      %v2048 = vadd.f32 0.0, %v2047
      %v2049 = vpop.f32.mrb[0].mxu0
      %2050 = vmatprep.mubr.bf16.mxu0 0
      %2051 = vmatmul.mubr.bf16.gmra.mrb[0].mxu0 %v821
      %v2052 = vpop.f32.mrb[0].mxu0
      %v2053 = vadd.f32 0.0, %v2052
      %v2054 = vpop.f32.mrb[0].mxu0
      %v2055 = vpop.f32.mrb[0].mxu0
      %v2056 = vadd.f32 0.0, %v2055
      %v2057 = vpop.f32.mrb[0].mxu0
      %2058 = vmatprep.mubr.bf16.mxu0 0
      %2059 = vmatmul.mubr.bf16.gmra.mrb[0].mxu0 %v824
      %v2060 = vpop.f32.mrb[0].mxu0
      %v2061 = vadd.f32 0.0, %v2060
      %v2062 = vpop.f32.mrb[0].mxu0
      %v2063 = vpop.f32.mrb[0].mxu0
      %v2064 = vadd.f32 0.0, %v2063
      %v2065 = vpop.f32.mrb[0].mxu0
      %2066 = vmatprep.mubr.bf16.mxu0 0
      %2067 = vmatmul.mubr.bf16.gmra.mrb[0].mxu0 %v827
      %v2068 = vpop.f32.mrb[0].mxu0
      %v2069 = vadd.f32 0.0, %v2068
      %v2070 = vpop.f32.mrb[0].mxu0
      %v2071 = vpop.f32.mrb[0].mxu0
      %v2072 = vadd.f32 0.0, %v2071
      %v2073 = vpop.f32.mrb[0].mxu0
      %2074 = vmatprep.mubr.bf16.mxu0 0
      %2075 = vmatmul.mubr.bf16.gmra.mrb[0].mxu0 %v830
      %v2076 = vpop.f32.mrb[0].mxu0
      %v2077 = vadd.f32 0.0, %v2076
      %v2078 = vpop.f32.mrb[0].mxu0
      %v2079 = vpop.f32.mrb[0].mxu0
      %v2080 = vadd.f32 0.0, %v2079
      %v2081 = vpop.f32.mrb[0].mxu0
      %2082 = vmatprep.mubr.bf16.mxu0 0
      %2083 = vmatmul.mubr.bf16.gmra.mrb[0].mxu0 %v833
      %v2084 = vpop.f32.mrb[0].mxu0
      %v2085 = vadd.f32 0.0, %v2084
      %v2086 = vpop.f32.mrb[0].mxu0
      %v2087 = vpop.f32.mrb[0].mxu0
      %v2088 = vadd.f32 0.0, %v2087
      %v2089 = vpop.f32.mrb[0].mxu0
      %2090 = vmatprep.mubr.bf16.mxu0 0
      %2091 = vmatmul.mubr.bf16.gmra.mrb[0].mxu0 %v836
      %v2092 = vpop.f32.mrb[0].mxu0
      %v2093 = vadd.f32 0.0, %v2092
      %v2094 = vpop.f32.mrb[0].mxu0
      %v2095 = vpop.f32.mrb[0].mxu0
      %v2096 = vadd.f32 0.0, %v2095
      %v2097 = vpop.f32.mrb[0].mxu0
      %2098 = vmatprep.mubr.bf16.mxu0 0
      %2099 = vmatmul.mubr.bf16.gmra.mrb[0].mxu0 %v839
      %v2100 = vpop.f32.mrb[0].mxu0
      %v2101 = vadd.f32 0.0, %v2100
      %v2102 = vpop.f32.mrb[0].mxu0
      %v2103 = vpop.f32.mrb[0].mxu0
      %v2104 = vadd.f32 0.0, %v2103
      %v2105 = vpop.f32.mrb[0].mxu0
      %2106 = vmatprep.mubr.bf16.mxu0 0
      %2107 = vmatmul.mubr.bf16.gmra.mrb[0].mxu0 %v842
      %v2108 = vpop.f32.mrb[0].mxu0
      %v2109 = vadd.f32 0.0, %v2108
      %v2110 = vpop.f32.mrb[0].mxu0
      %v2111 = vpop.f32.mrb[0].mxu0
      %v2112 = vadd.f32 0.0, %v2111
      %v2113 = vpop.f32.mrb[0].mxu0
      %2114 = vmatprep.mubr.bf16.mxu0 0
      %2115 = vmatmul.mubr.bf16.gmra.mrb[0].mxu0 %v845
      %v2116 = vpop.f32.mrb[0].mxu0
      %v2117 = vadd.f32 0.0, %v2116
      %v2118 = vpop.f32.mrb[0].mxu0
      %v2119 = vpop.f32.mrb[0].mxu0
      %v2120 = vadd.f32 0.0, %v2119
      %v2121 = vpop.f32.mrb[0].mxu0
      %2122 = vmatprep.mubr.bf16.mxu0 0
      %2123 = vmatmul.mubr.bf16.gmra.mrb[0].mxu0 %v1965
      %v2124 = vpop.f32.mrb[0].mxu0
      %v2125 = vadd.f32 0.0, %v2124
      %v2126 = vpop.f32.mrb[0].mxu0
      %v2127 = vpop.f32.mrb[0].mxu0
      %v2128 = vadd.f32 0.0, %v2127
      %v2129 = vpop.f32.mrb[0].mxu0
      %2130 = vdwg.mxu0
      %v2131 = vadd.f32 %v1903, %v2005
      %v2132 = vadd.f32 %v1904, %v2008
      %v2133 = vadd.f32 %v1905, %v2013
      %v2134 = vadd.f32 %v1906, %v2016
      %v2135 = vadd.f32 %v1907, %v2021
      %v2136 = vadd.f32 %v1908, %v2024
      %v2137 = vadd.f32 %v1909, %v2029
      %v2138 = vadd.f32 %v1910, %v2032
      %v2139 = vadd.f32 %v1911, %v2037
      %v2140 = vadd.f32 %v1912, %v2040
      %v2141 = vadd.f32 %v1913, %v2045
      %v2142 = vadd.f32 %v1914, %v2048
      %v2143 = vadd.f32 %v1915, %v2053
      %v2144 = vadd.f32 %v1916, %v2056
      %v2145 = vadd.f32 %v1917, %v2061
      %v2146 = vadd.f32 %v1918, %v2064
      %v2147 = vadd.f32 %v1919, %v2069
      %v2148 = vadd.f32 %v1920, %v2072
      %v2149 = vadd.f32 %v1921, %v2077
      %v2150 = vadd.f32 %v1922, %v2080
      %v2151 = vadd.f32 %v1923, %v2085
      %v2152 = vadd.f32 %v1924, %v2088
      %v2153 = vadd.f32 %v1925, %v2093
      %v2154 = vadd.f32 %v1926, %v2096
      %v2155 = vadd.f32 %v1927, %v2101
      %v2156 = vadd.f32 %v1928, %v2104
      %v2157 = vadd.f32 %v1929, %v2109
      %v2158 = vadd.f32 %v1930, %v2112
      %v2159 = vadd.f32 %v1931, %v2117
      %v2160 = vadd.f32 %v1932, %v2120
      %v2161 = vadd.f32 %v1933, %v2125
      %v2162 = vadd.f32 %v1934, %v2128
      %v2164 = vrot.slane %v354, 5
      %v2165 = vrot.slane %v2164, 4
      %v2166 = vrot.slane %v355, 5
      %v2167 = vsel %vm1322, %v2165, %v2166
      %v2168 = vrot.slane %v2166, 4
      %v2169 = vrot.slane %v356, 5
      %v2170 = vsel %vm1322, %v2168, %v2169
      %s2171 = scalar_lea.vmem %s1, 10
      %v2172 = vld [vmem:[%s2171] sm:$0x3]
      %v2173 = vunpack.c.l.b16 %v2167
      %v2174 = vunpack.c.l.b16 %v2170
      %v2175 = vpack.c.b16 %v2174, %v2173
      %v2177 = vsel %vm798, %v2175, 0
      %v2180 = vsel %vm847, %v2172, 0
      %2182 = vmatprep.subr.bf16.mxu0 0
      %2183 = vmatpush1.bf16.msra.mxu0 %v2180
      %2184 = vmatprep.subr.bf16.mxu0 0
      %2185 = vmatpush1.bf16.msra.mxu0 0
      %2186 = vmatprep.subr.bf16.mxu0 0
      %2187 = vmatpush1.bf16.msra.mxu0 0
      %2188 = vmatprep.subr.bf16.mxu0 0
      %2189 = vmatpush1.bf16.msra.mxu0 0
      %2190 = vmatprep.subr.bf16.mxu0 0
      %2191 = vmatpush1.bf16.msra.mxu0 0
      %2192 = vmatprep.subr.bf16.mxu0 0
      %2193 = vmatpush1.bf16.msra.mxu0 0
      %2194 = vmatprep.subr.bf16.mxu0 0
      %2195 = vmatpush1.bf16.msra.mxu0 0
      %2196 = vmatprep.subr.bf16.mxu0 0
      %2197 = vmatpush1.bf16.msra.mxu0 0
      %2198 = vmatprep.subr.bf16.mxu0 0
      %2199 = vmatpush1.bf16.msra.mxu0 0
      %2200 = vmatprep.subr.bf16.mxu0 0
      %2201 = vmatpush1.bf16.msra.mxu0 0
      %2202 = vmatprep.subr.bf16.mxu0 0
      %2203 = vmatpush1.bf16.msra.mxu0 0
      %2204 = vmatprep.subr.bf16.mxu0 0
      %2205 = vmatpush1.bf16.msra.mxu0 0
      %2206 = vmatprep.subr.bf16.mxu0 0
      %2207 = vmatpush1.bf16.msra.mxu0 0
      %2208 = vmatprep.subr.bf16.mxu0 0
      %2209 = vmatpush1.bf16.msra.mxu0 0
      %2210 = vmatprep.subr.bf16.mxu0 0
      %2211 = vmatpush1.bf16.msra.mxu0 0
      %2212 = vmatprep.subr.bf16.mxu0 0
      %2213 = vmatpush1.bf16.msra.mxu0 0
      %2214 = vmatprep.mubr.bf16.mxu0 0
      %2215 = vmatmul.mubr.bf16.gmra.mrb[0].mxu0 %v1489
      %v2216 = vpop.f32.mrb[0].mxu0
      %v2217 = vadd.f32 0.0, %v2216
      %v2218 = vpop.f32.mrb[0].mxu0
      %v2219 = vpop.f32.mrb[0].mxu0
      %v2220 = vadd.f32 0.0, %v2219
      %v2221 = vpop.f32.mrb[0].mxu0
      %2222 = vmatprep.mubr.bf16.mxu0 0
      %2223 = vmatmul.mubr.bf16.gmra.mrb[0].mxu0 %v1492
      %v2224 = vpop.f32.mrb[0].mxu0
      %v2225 = vadd.f32 0.0, %v2224
      %v2226 = vpop.f32.mrb[0].mxu0
      %v2227 = vpop.f32.mrb[0].mxu0
      %v2228 = vadd.f32 0.0, %v2227
      %v2229 = vpop.f32.mrb[0].mxu0
      %2230 = vmatprep.mubr.bf16.mxu0 0
      %2231 = vmatmul.mubr.bf16.gmra.mrb[0].mxu0 %v1495
      %v2232 = vpop.f32.mrb[0].mxu0
      %v2233 = vadd.f32 0.0, %v2232
      %v2234 = vpop.f32.mrb[0].mxu0
      %v2235 = vpop.f32.mrb[0].mxu0
      %v2236 = vadd.f32 0.0, %v2235
      %v2237 = vpop.f32.mrb[0].mxu0
      %2238 = vmatprep.mubr.bf16.mxu0 0
      %2239 = vmatmul.mubr.bf16.gmra.mrb[0].mxu0 %v1498
      %v2240 = vpop.f32.mrb[0].mxu0
      %v2241 = vadd.f32 0.0, %v2240
      %v2242 = vpop.f32.mrb[0].mxu0
      %v2243 = vpop.f32.mrb[0].mxu0
      %v2244 = vadd.f32 0.0, %v2243
      %v2245 = vpop.f32.mrb[0].mxu0
      %2246 = vmatprep.mubr.bf16.mxu0 0
      %2247 = vmatmul.mubr.bf16.gmra.mrb[0].mxu0 %v1501
      %v2248 = vpop.f32.mrb[0].mxu0
      %v2249 = vadd.f32 0.0, %v2248
      %v2250 = vpop.f32.mrb[0].mxu0
      %v2251 = vpop.f32.mrb[0].mxu0
      %v2252 = vadd.f32 0.0, %v2251
      %v2253 = vpop.f32.mrb[0].mxu0
      %2254 = vmatprep.mubr.bf16.mxu0 0
      %2255 = vmatmul.mubr.bf16.gmra.mrb[0].mxu0 %v1504
      %v2256 = vpop.f32.mrb[0].mxu0
      %v2257 = vadd.f32 0.0, %v2256
      %v2258 = vpop.f32.mrb[0].mxu0
      %v2259 = vpop.f32.mrb[0].mxu0
      %v2260 = vadd.f32 0.0, %v2259
      %v2261 = vpop.f32.mrb[0].mxu0
      %2262 = vmatprep.mubr.bf16.mxu0 0
      %2263 = vmatmul.mubr.bf16.gmra.mrb[0].mxu0 %v1507
      %v2264 = vpop.f32.mrb[0].mxu0
      %v2265 = vadd.f32 0.0, %v2264
      %v2266 = vpop.f32.mrb[0].mxu0
      %v2267 = vpop.f32.mrb[0].mxu0
      %v2268 = vadd.f32 0.0, %v2267
      %v2269 = vpop.f32.mrb[0].mxu0
      %2270 = vmatprep.mubr.bf16.mxu0 0
      %2271 = vmatmul.mubr.bf16.gmra.mrb[0].mxu0 %v1510
      %v2272 = vpop.f32.mrb[0].mxu0
      %v2273 = vadd.f32 0.0, %v2272
      %v2274 = vpop.f32.mrb[0].mxu0
      %v2275 = vpop.f32.mrb[0].mxu0
      %v2276 = vadd.f32 0.0, %v2275
      %v2277 = vpop.f32.mrb[0].mxu0
      %2278 = vmatprep.mubr.bf16.mxu0 0
      %2279 = vmatmul.mubr.bf16.gmra.mrb[0].mxu0 %v1513
      %v2280 = vpop.f32.mrb[0].mxu0
      %v2281 = vadd.f32 0.0, %v2280
      %v2282 = vpop.f32.mrb[0].mxu0
      %v2283 = vpop.f32.mrb[0].mxu0
      %v2284 = vadd.f32 0.0, %v2283
      %v2285 = vpop.f32.mrb[0].mxu0
      %2286 = vmatprep.mubr.bf16.mxu0 0
      %2287 = vmatmul.mubr.bf16.gmra.mrb[0].mxu0 %v1516
      %v2288 = vpop.f32.mrb[0].mxu0
      %v2289 = vadd.f32 0.0, %v2288
      %v2290 = vpop.f32.mrb[0].mxu0
      %v2291 = vpop.f32.mrb[0].mxu0
      %v2292 = vadd.f32 0.0, %v2291
      %v2293 = vpop.f32.mrb[0].mxu0
      %2294 = vmatprep.mubr.bf16.mxu0 0
      %2295 = vmatmul.mubr.bf16.gmra.mrb[0].mxu0 %v1519
      %v2296 = vpop.f32.mrb[0].mxu0
      %v2297 = vadd.f32 0.0, %v2296
      %v2298 = vpop.f32.mrb[0].mxu0
      %v2299 = vpop.f32.mrb[0].mxu0
      %v2300 = vadd.f32 0.0, %v2299
      %v2301 = vpop.f32.mrb[0].mxu0
      %2302 = vmatprep.mubr.bf16.mxu0 0
      %2303 = vmatmul.mubr.bf16.gmra.mrb[0].mxu0 %v1522
      %v2304 = vpop.f32.mrb[0].mxu0
      %v2305 = vadd.f32 0.0, %v2304
      %v2306 = vpop.f32.mrb[0].mxu0
      %v2307 = vpop.f32.mrb[0].mxu0
      %v2308 = vadd.f32 0.0, %v2307
      %v2309 = vpop.f32.mrb[0].mxu0
      %2310 = vmatprep.mubr.bf16.mxu0 0
      %2311 = vmatmul.mubr.bf16.gmra.mrb[0].mxu0 %v1525
      %v2312 = vpop.f32.mrb[0].mxu0
      %v2313 = vadd.f32 0.0, %v2312
      %v2314 = vpop.f32.mrb[0].mxu0
      %v2315 = vpop.f32.mrb[0].mxu0
      %v2316 = vadd.f32 0.0, %v2315
      %v2317 = vpop.f32.mrb[0].mxu0
      %2318 = vmatprep.mubr.bf16.mxu0 0
      %2319 = vmatmul.mubr.bf16.gmra.mrb[0].mxu0 %v1528
      %v2320 = vpop.f32.mrb[0].mxu0
      %v2321 = vadd.f32 0.0, %v2320
      %v2322 = vpop.f32.mrb[0].mxu0
      %v2323 = vpop.f32.mrb[0].mxu0
      %v2324 = vadd.f32 0.0, %v2323
      %v2325 = vpop.f32.mrb[0].mxu0
      %2326 = vmatprep.mubr.bf16.mxu0 0
      %2327 = vmatmul.mubr.bf16.gmra.mrb[0].mxu0 %v1531
      %v2328 = vpop.f32.mrb[0].mxu0
      %v2329 = vadd.f32 0.0, %v2328
      %v2330 = vpop.f32.mrb[0].mxu0
      %v2331 = vpop.f32.mrb[0].mxu0
      %v2332 = vadd.f32 0.0, %v2331
      %v2333 = vpop.f32.mrb[0].mxu0
      %2334 = vmatprep.mubr.bf16.mxu0 0
      %2335 = vmatmul.mubr.bf16.gmra.mrb[0].mxu0 %v2177
      %v2336 = vpop.f32.mrb[0].mxu0
      %v2337 = vadd.f32 0.0, %v2336
      %v2338 = vpop.f32.mrb[0].mxu0
      %v2339 = vpop.f32.mrb[0].mxu0
      %v2340 = vadd.f32 0.0, %v2339
      %v2341 = vpop.f32.mrb[0].mxu0
      %2342 = vdwg.mxu0
      %v2343 = vadd.f32 %v2131, %v2217
      %v2344 = vadd.f32 %v2132, %v2220
      %v2345 = vadd.f32 %v2133, %v2225
      %v2346 = vadd.f32 %v2134, %v2228
      %v2347 = vadd.f32 %v2135, %v2233
      %v2348 = vadd.f32 %v2136, %v2236
      %v2349 = vadd.f32 %v2137, %v2241
      %v2350 = vadd.f32 %v2138, %v2244
      %v2351 = vadd.f32 %v2139, %v2249
      %v2352 = vadd.f32 %v2140, %v2252
      %v2353 = vadd.f32 %v2141, %v2257
      %v2354 = vadd.f32 %v2142, %v2260
      %v2355 = vadd.f32 %v2143, %v2265
      %v2356 = vadd.f32 %v2144, %v2268
      %v2357 = vadd.f32 %v2145, %v2273
      %v2358 = vadd.f32 %v2146, %v2276
      %v2359 = vadd.f32 %v2147, %v2281
      %v2360 = vadd.f32 %v2148, %v2284
      %v2361 = vadd.f32 %v2149, %v2289
      %v2362 = vadd.f32 %v2150, %v2292
      %v2363 = vadd.f32 %v2151, %v2297
      %v2364 = vadd.f32 %v2152, %v2300
      %v2365 = vadd.f32 %v2153, %v2305
      %v2366 = vadd.f32 %v2154, %v2308
      %v2367 = vadd.f32 %v2155, %v2313
      %v2368 = vadd.f32 %v2156, %v2316
      %v2369 = vadd.f32 %v2157, %v2321
      %v2370 = vadd.f32 %v2158, %v2324
      %v2371 = vadd.f32 %v2159, %v2329
      %v2372 = vadd.f32 %v2160, %v2332
      %v2373 = vadd.f32 %v2161, %v2337
      %v2374 = vadd.f32 %v2162, %v2340
      %s2375 = scalar_lea.vmem %s1, 12
      %v2376 = vld [vmem:[%s2375] sm:$0x3]
      %v2379 = vunpack.c.l.b16 %v357
      %v2380 = vunpack.c.l.b16 %v358
      %v2381 = vpack.c.b16 %v2380, %v2379
      %v2383 = vsel %vm798, %v2381, 0
      %v2386 = vsel %vm847, %v2376, 0
      %2388 = vmatprep.subr.bf16.mxu0 0
      %2389 = vmatpush1.bf16.msra.mxu0 %v2386
      %2390 = vmatprep.subr.bf16.mxu0 0
      %2391 = vmatpush1.bf16.msra.mxu0 0
      %2392 = vmatprep.subr.bf16.mxu0 0
      %2393 = vmatpush1.bf16.msra.mxu0 0
      %2394 = vmatprep.subr.bf16.mxu0 0
      %2395 = vmatpush1.bf16.msra.mxu0 0
      %2396 = vmatprep.subr.bf16.mxu0 0
      %2397 = vmatpush1.bf16.msra.mxu0 0
      %2398 = vmatprep.subr.bf16.mxu0 0
      %2399 = vmatpush1.bf16.msra.mxu0 0
      %2400 = vmatprep.subr.bf16.mxu0 0
      %2401 = vmatpush1.bf16.msra.mxu0 0
      %2402 = vmatprep.subr.bf16.mxu0 0
      %2403 = vmatpush1.bf16.msra.mxu0 0
      %2404 = vmatprep.subr.bf16.mxu0 0
      %2405 = vmatpush1.bf16.msra.mxu0 0
      %2406 = vmatprep.subr.bf16.mxu0 0
      %2407 = vmatpush1.bf16.msra.mxu0 0
      %2408 = vmatprep.subr.bf16.mxu0 0
      %2409 = vmatpush1.bf16.msra.mxu0 0
      %2410 = vmatprep.subr.bf16.mxu0 0
      %2411 = vmatpush1.bf16.msra.mxu0 0
      %2412 = vmatprep.subr.bf16.mxu0 0
      %2413 = vmatpush1.bf16.msra.mxu0 0
      %2414 = vmatprep.subr.bf16.mxu0 0
      %2415 = vmatpush1.bf16.msra.mxu0 0
      %2416 = vmatprep.subr.bf16.mxu0 0
      %2417 = vmatpush1.bf16.msra.mxu0 0
      %2418 = vmatprep.subr.bf16.mxu0 0
      %2419 = vmatpush1.bf16.msra.mxu0 0
      %2420 = vmatprep.mubr.bf16.mxu0 0
      %2421 = vmatmul.mubr.bf16.gmra.mrb[0].mxu0 %v1099
      %v2422 = vpop.f32.mrb[0].mxu0
      %v2423 = vadd.f32 0.0, %v2422
      %v2424 = vpop.f32.mrb[0].mxu0
      %v2425 = vpop.f32.mrb[0].mxu0
      %v2426 = vadd.f32 0.0, %v2425
      %v2427 = vpop.f32.mrb[0].mxu0
      %2428 = vmatprep.mubr.bf16.mxu0 0
      %2429 = vmatmul.mubr.bf16.gmra.mrb[0].mxu0 %v1102
      %v2430 = vpop.f32.mrb[0].mxu0
      %v2431 = vadd.f32 0.0, %v2430
      %v2432 = vpop.f32.mrb[0].mxu0
      %v2433 = vpop.f32.mrb[0].mxu0
      %v2434 = vadd.f32 0.0, %v2433
      %v2435 = vpop.f32.mrb[0].mxu0
      %2436 = vmatprep.mubr.bf16.mxu0 0
      %2437 = vmatmul.mubr.bf16.gmra.mrb[0].mxu0 %v1105
      %v2438 = vpop.f32.mrb[0].mxu0
      %v2439 = vadd.f32 0.0, %v2438
      %v2440 = vpop.f32.mrb[0].mxu0
      %v2441 = vpop.f32.mrb[0].mxu0
      %v2442 = vadd.f32 0.0, %v2441
      %v2443 = vpop.f32.mrb[0].mxu0
      %2444 = vmatprep.mubr.bf16.mxu0 0
      %2445 = vmatmul.mubr.bf16.gmra.mrb[0].mxu0 %v1108
      %v2446 = vpop.f32.mrb[0].mxu0
      %v2447 = vadd.f32 0.0, %v2446
      %v2448 = vpop.f32.mrb[0].mxu0
      %v2449 = vpop.f32.mrb[0].mxu0
      %v2450 = vadd.f32 0.0, %v2449
      %v2451 = vpop.f32.mrb[0].mxu0
      %2452 = vmatprep.mubr.bf16.mxu0 0
      %2453 = vmatmul.mubr.bf16.gmra.mrb[0].mxu0 %v1111
      %v2454 = vpop.f32.mrb[0].mxu0
      %v2455 = vadd.f32 0.0, %v2454
      %v2456 = vpop.f32.mrb[0].mxu0
      %v2457 = vpop.f32.mrb[0].mxu0
      %v2458 = vadd.f32 0.0, %v2457
      %v2459 = vpop.f32.mrb[0].mxu0
      %2460 = vmatprep.mubr.bf16.mxu0 0
      %2461 = vmatmul.mubr.bf16.gmra.mrb[0].mxu0 %v1114
      %v2462 = vpop.f32.mrb[0].mxu0
      %v2463 = vadd.f32 0.0, %v2462
      %v2464 = vpop.f32.mrb[0].mxu0
      %v2465 = vpop.f32.mrb[0].mxu0
      %v2466 = vadd.f32 0.0, %v2465
      %v2467 = vpop.f32.mrb[0].mxu0
      %2468 = vmatprep.mubr.bf16.mxu0 0
      %2469 = vmatmul.mubr.bf16.gmra.mrb[0].mxu0 %v1117
      %v2470 = vpop.f32.mrb[0].mxu0
      %v2471 = vadd.f32 0.0, %v2470
      %v2472 = vpop.f32.mrb[0].mxu0
      %v2473 = vpop.f32.mrb[0].mxu0
      %v2474 = vadd.f32 0.0, %v2473
      %v2475 = vpop.f32.mrb[0].mxu0
      %2476 = vmatprep.mubr.bf16.mxu0 0
      %2477 = vmatmul.mubr.bf16.gmra.mrb[0].mxu0 %v1120
      %v2478 = vpop.f32.mrb[0].mxu0
      %v2479 = vadd.f32 0.0, %v2478
      %v2480 = vpop.f32.mrb[0].mxu0
      %v2481 = vpop.f32.mrb[0].mxu0
      %v2482 = vadd.f32 0.0, %v2481
      %v2483 = vpop.f32.mrb[0].mxu0
      %2484 = vmatprep.mubr.bf16.mxu0 0
      %2485 = vmatmul.mubr.bf16.gmra.mrb[0].mxu0 %v1123
      %v2486 = vpop.f32.mrb[0].mxu0
      %v2487 = vadd.f32 0.0, %v2486
      %v2488 = vpop.f32.mrb[0].mxu0
      %v2489 = vpop.f32.mrb[0].mxu0
      %v2490 = vadd.f32 0.0, %v2489
      %v2491 = vpop.f32.mrb[0].mxu0
      %2492 = vmatprep.mubr.bf16.mxu0 0
      %2493 = vmatmul.mubr.bf16.gmra.mrb[0].mxu0 %v1126
      %v2494 = vpop.f32.mrb[0].mxu0
      %v2495 = vadd.f32 0.0, %v2494
      %v2496 = vpop.f32.mrb[0].mxu0
      %v2497 = vpop.f32.mrb[0].mxu0
      %v2498 = vadd.f32 0.0, %v2497
      %v2499 = vpop.f32.mrb[0].mxu0
      %2500 = vmatprep.mubr.bf16.mxu0 0
      %2501 = vmatmul.mubr.bf16.gmra.mrb[0].mxu0 %v1129
      %v2502 = vpop.f32.mrb[0].mxu0
      %v2503 = vadd.f32 0.0, %v2502
      %v2504 = vpop.f32.mrb[0].mxu0
      %v2505 = vpop.f32.mrb[0].mxu0
      %v2506 = vadd.f32 0.0, %v2505
      %v2507 = vpop.f32.mrb[0].mxu0
      %2508 = vmatprep.mubr.bf16.mxu0 0
      %2509 = vmatmul.mubr.bf16.gmra.mrb[0].mxu0 %v1132
      %v2510 = vpop.f32.mrb[0].mxu0
      %v2511 = vadd.f32 0.0, %v2510
      %v2512 = vpop.f32.mrb[0].mxu0
      %v2513 = vpop.f32.mrb[0].mxu0
      %v2514 = vadd.f32 0.0, %v2513
      %v2515 = vpop.f32.mrb[0].mxu0
      %2516 = vmatprep.mubr.bf16.mxu0 0
      %2517 = vmatmul.mubr.bf16.gmra.mrb[0].mxu0 %v1135
      %v2518 = vpop.f32.mrb[0].mxu0
      %v2519 = vadd.f32 0.0, %v2518
      %v2520 = vpop.f32.mrb[0].mxu0
      %v2521 = vpop.f32.mrb[0].mxu0
      %v2522 = vadd.f32 0.0, %v2521
      %v2523 = vpop.f32.mrb[0].mxu0
      %2524 = vmatprep.mubr.bf16.mxu0 0
      %2525 = vmatmul.mubr.bf16.gmra.mrb[0].mxu0 %v1138
      %v2526 = vpop.f32.mrb[0].mxu0
      %v2527 = vadd.f32 0.0, %v2526
      %v2528 = vpop.f32.mrb[0].mxu0
      %v2529 = vpop.f32.mrb[0].mxu0
      %v2530 = vadd.f32 0.0, %v2529
      %v2531 = vpop.f32.mrb[0].mxu0
      %2532 = vmatprep.mubr.bf16.mxu0 0
      %2533 = vmatmul.mubr.bf16.gmra.mrb[0].mxu0 %v1737
      %v2534 = vpop.f32.mrb[0].mxu0
      %v2535 = vadd.f32 0.0, %v2534
      %v2536 = vpop.f32.mrb[0].mxu0
      %v2537 = vpop.f32.mrb[0].mxu0
      %v2538 = vadd.f32 0.0, %v2537
      %v2539 = vpop.f32.mrb[0].mxu0
      %2540 = vmatprep.mubr.bf16.mxu0 0
      %2541 = vmatmul.mubr.bf16.gmra.mrb[0].mxu0 %v2383
      %v2542 = vpop.f32.mrb[0].mxu0
      %v2543 = vadd.f32 0.0, %v2542
      %v2544 = vpop.f32.mrb[0].mxu0
      %v2545 = vpop.f32.mrb[0].mxu0
      %v2546 = vadd.f32 0.0, %v2545
      %v2547 = vpop.f32.mrb[0].mxu0
      %2548 = vdwg.mxu0
      %v2549 = vadd.f32 %v2343, %v2423
      %v2550 = vadd.f32 %v2344, %v2426
      %v2551 = vadd.f32 %v2345, %v2431
      %v2552 = vadd.f32 %v2346, %v2434
      %v2553 = vadd.f32 %v2347, %v2439
      %v2554 = vadd.f32 %v2348, %v2442
      %v2555 = vadd.f32 %v2349, %v2447
      %v2556 = vadd.f32 %v2350, %v2450
      %v2557 = vadd.f32 %v2351, %v2455
      %v2558 = vadd.f32 %v2352, %v2458
      %v2559 = vadd.f32 %v2353, %v2463
      %v2560 = vadd.f32 %v2354, %v2466
      %v2561 = vadd.f32 %v2355, %v2471
      %v2562 = vadd.f32 %v2356, %v2474
      %v2563 = vadd.f32 %v2357, %v2479
      %v2564 = vadd.f32 %v2358, %v2482
      %v2565 = vadd.f32 %v2359, %v2487
      %v2566 = vadd.f32 %v2360, %v2490
      %v2567 = vadd.f32 %v2361, %v2495
      %v2568 = vadd.f32 %v2362, %v2498
      %v2569 = vadd.f32 %v2363, %v2503
      %v2570 = vadd.f32 %v2364, %v2506
      %v2571 = vadd.f32 %v2365, %v2511
      %v2572 = vadd.f32 %v2366, %v2514
      %v2573 = vadd.f32 %v2367, %v2519
      %v2574 = vadd.f32 %v2368, %v2522
      %v2575 = vadd.f32 %v2369, %v2527
      %v2576 = vadd.f32 %v2370, %v2530
      %v2577 = vadd.f32 %v2371, %v2535
      %v2578 = vadd.f32 %v2372, %v2538
      %v2579 = vadd.f32 %v2373, %v2543
      %v2580 = vadd.f32 %v2374, %v2546
      %v2582 = vshrl.u32 %v357, 16
      %v2584 = vrot.slane %v2582, 4
      %v2585 = vshll.u32 %v357, 16
      %v2587 = vrot.slane %v2585, 5
      %v2588 = vor.u32 %v2584, %v2587
      %v2589 = vrot.slane %v2588, 4
      %v2591 = vshll.u32 %v358, 16
      %v2593 = vrot.slane %v2591, 5
      %v2594 = vsel %vm363, %v2589, %v2593
      %v2595 = vshrl.u32 %v358, 16
      %v2597 = vrot.slane %v2595, 4
      %v2598 = vor.u32 %v2597, %v2593
      %v2599 = vrot.slane %v2598, 4
      %v2601 = vshll.u32 %v359, 16
      %v2603 = vrot.slane %v2601, 5
      %v2604 = vsel %vm363, %v2599, %v2603
      %s2605 = scalar_lea.vmem %s1, 14
      %v2606 = vld [vmem:[%s2605] sm:$0x3]
      %v2607 = vunpack.c.l.b16 %v2594
      %v2608 = vunpack.c.l.b16 %v2604
      %v2609 = vpack.c.b16 %v2608, %v2607
      %v2611 = vsel %vm798, %v2609, 0
      %v2614 = vsel %vm847, %v2606, 0
      %2616 = vmatprep.subr.bf16.mxu0 0
      %2617 = vmatpush1.bf16.msra.mxu0 %v2614
      %2618 = vmatprep.subr.bf16.mxu0 0
      %2619 = vmatpush1.bf16.msra.mxu0 0
      %2620 = vmatprep.subr.bf16.mxu0 0
      %2621 = vmatpush1.bf16.msra.mxu0 0
      %2622 = vmatprep.subr.bf16.mxu0 0
      %2623 = vmatpush1.bf16.msra.mxu0 0
      %2624 = vmatprep.subr.bf16.mxu0 0
      %2625 = vmatpush1.bf16.msra.mxu0 0
      %2626 = vmatprep.subr.bf16.mxu0 0
      %2627 = vmatpush1.bf16.msra.mxu0 0
      %2628 = vmatprep.subr.bf16.mxu0 0
      %2629 = vmatpush1.bf16.msra.mxu0 0
      %2630 = vmatprep.subr.bf16.mxu0 0
      %2631 = vmatpush1.bf16.msra.mxu0 0
      %2632 = vmatprep.subr.bf16.mxu0 0
      %2633 = vmatpush1.bf16.msra.mxu0 0
      %2634 = vmatprep.subr.bf16.mxu0 0
      %2635 = vmatpush1.bf16.msra.mxu0 0
      %2636 = vmatprep.subr.bf16.mxu0 0
      %2637 = vmatpush1.bf16.msra.mxu0 0
      %2638 = vmatprep.subr.bf16.mxu0 0
      %2639 = vmatpush1.bf16.msra.mxu0 0
      %2640 = vmatprep.subr.bf16.mxu0 0
      %2641 = vmatpush1.bf16.msra.mxu0 0
      %2642 = vmatprep.subr.bf16.mxu0 0
      %2643 = vmatpush1.bf16.msra.mxu0 0
      %2644 = vmatprep.subr.bf16.mxu0 0
      %2645 = vmatpush1.bf16.msra.mxu0 0
      %2646 = vmatprep.subr.bf16.mxu0 0
      %2647 = vmatpush1.bf16.msra.mxu0 0
      %2648 = vmatprep.mubr.bf16.mxu0 0
      %2649 = vmatmul.mubr.bf16.gmra.mrb[0].mxu0 %v806
      %v2650 = vpop.f32.mrb[0].mxu0
      %v2651 = vadd.f32 0.0, %v2650
      %v2652 = vpop.f32.mrb[0].mxu0
      %v2653 = vpop.f32.mrb[0].mxu0
      %v2654 = vadd.f32 0.0, %v2653
      %v2655 = vpop.f32.mrb[0].mxu0
      %2656 = vmatprep.mubr.bf16.mxu0 0
      %2657 = vmatmul.mubr.bf16.gmra.mrb[0].mxu0 %v809
      %v2658 = vpop.f32.mrb[0].mxu0
      %v2659 = vadd.f32 0.0, %v2658
      %v2660 = vpop.f32.mrb[0].mxu0
      %v2661 = vpop.f32.mrb[0].mxu0
      %v2662 = vadd.f32 0.0, %v2661
      %v2663 = vpop.f32.mrb[0].mxu0
      %2664 = vmatprep.mubr.bf16.mxu0 0
      %2665 = vmatmul.mubr.bf16.gmra.mrb[0].mxu0 %v812
      %v2666 = vpop.f32.mrb[0].mxu0
      %v2667 = vadd.f32 0.0, %v2666
      %v2668 = vpop.f32.mrb[0].mxu0
      %v2669 = vpop.f32.mrb[0].mxu0
      %v2670 = vadd.f32 0.0, %v2669
      %v2671 = vpop.f32.mrb[0].mxu0
      %2672 = vmatprep.mubr.bf16.mxu0 0
      %2673 = vmatmul.mubr.bf16.gmra.mrb[0].mxu0 %v815
      %v2674 = vpop.f32.mrb[0].mxu0
      %v2675 = vadd.f32 0.0, %v2674
      %v2676 = vpop.f32.mrb[0].mxu0
      %v2677 = vpop.f32.mrb[0].mxu0
      %v2678 = vadd.f32 0.0, %v2677
      %v2679 = vpop.f32.mrb[0].mxu0
      %2680 = vmatprep.mubr.bf16.mxu0 0
      %2681 = vmatmul.mubr.bf16.gmra.mrb[0].mxu0 %v818
      %v2682 = vpop.f32.mrb[0].mxu0
      %v2683 = vadd.f32 0.0, %v2682
      %v2684 = vpop.f32.mrb[0].mxu0
      %v2685 = vpop.f32.mrb[0].mxu0
      %v2686 = vadd.f32 0.0, %v2685
      %v2687 = vpop.f32.mrb[0].mxu0
      %2688 = vmatprep.mubr.bf16.mxu0 0
      %2689 = vmatmul.mubr.bf16.gmra.mrb[0].mxu0 %v821
      %v2690 = vpop.f32.mrb[0].mxu0
      %v2691 = vadd.f32 0.0, %v2690
      %v2692 = vpop.f32.mrb[0].mxu0
      %v2693 = vpop.f32.mrb[0].mxu0
      %v2694 = vadd.f32 0.0, %v2693
      %v2695 = vpop.f32.mrb[0].mxu0
      %2696 = vmatprep.mubr.bf16.mxu0 0
      %2697 = vmatmul.mubr.bf16.gmra.mrb[0].mxu0 %v824
      %v2698 = vpop.f32.mrb[0].mxu0
      %v2699 = vadd.f32 0.0, %v2698
      %v2700 = vpop.f32.mrb[0].mxu0
      %v2701 = vpop.f32.mrb[0].mxu0
      %v2702 = vadd.f32 0.0, %v2701
      %v2703 = vpop.f32.mrb[0].mxu0
      %2704 = vmatprep.mubr.bf16.mxu0 0
      %2705 = vmatmul.mubr.bf16.gmra.mrb[0].mxu0 %v827
      %v2706 = vpop.f32.mrb[0].mxu0
      %v2707 = vadd.f32 0.0, %v2706
      %v2708 = vpop.f32.mrb[0].mxu0
      %v2709 = vpop.f32.mrb[0].mxu0
      %v2710 = vadd.f32 0.0, %v2709
      %v2711 = vpop.f32.mrb[0].mxu0
      %2712 = vmatprep.mubr.bf16.mxu0 0
      %2713 = vmatmul.mubr.bf16.gmra.mrb[0].mxu0 %v830
      %v2714 = vpop.f32.mrb[0].mxu0
      %v2715 = vadd.f32 0.0, %v2714
      %v2716 = vpop.f32.mrb[0].mxu0
      %v2717 = vpop.f32.mrb[0].mxu0
      %v2718 = vadd.f32 0.0, %v2717
      %v2719 = vpop.f32.mrb[0].mxu0
      %2720 = vmatprep.mubr.bf16.mxu0 0
      %2721 = vmatmul.mubr.bf16.gmra.mrb[0].mxu0 %v833
      %v2722 = vpop.f32.mrb[0].mxu0
      %v2723 = vadd.f32 0.0, %v2722
      %v2724 = vpop.f32.mrb[0].mxu0
      %v2725 = vpop.f32.mrb[0].mxu0
      %v2726 = vadd.f32 0.0, %v2725
      %v2727 = vpop.f32.mrb[0].mxu0
      %2728 = vmatprep.mubr.bf16.mxu0 0
      %2729 = vmatmul.mubr.bf16.gmra.mrb[0].mxu0 %v836
      %v2730 = vpop.f32.mrb[0].mxu0
      %v2731 = vadd.f32 0.0, %v2730
      %v2732 = vpop.f32.mrb[0].mxu0
      %v2733 = vpop.f32.mrb[0].mxu0
      %v2734 = vadd.f32 0.0, %v2733
      %v2735 = vpop.f32.mrb[0].mxu0
      %2736 = vmatprep.mubr.bf16.mxu0 0
      %2737 = vmatmul.mubr.bf16.gmra.mrb[0].mxu0 %v839
      %v2738 = vpop.f32.mrb[0].mxu0
      %v2739 = vadd.f32 0.0, %v2738
      %v2740 = vpop.f32.mrb[0].mxu0
      %v2741 = vpop.f32.mrb[0].mxu0
      %v2742 = vadd.f32 0.0, %v2741
      %v2743 = vpop.f32.mrb[0].mxu0
      %2744 = vmatprep.mubr.bf16.mxu0 0
      %2745 = vmatmul.mubr.bf16.gmra.mrb[0].mxu0 %v842
      %v2746 = vpop.f32.mrb[0].mxu0
      %v2747 = vadd.f32 0.0, %v2746
      %v2748 = vpop.f32.mrb[0].mxu0
      %v2749 = vpop.f32.mrb[0].mxu0
      %v2750 = vadd.f32 0.0, %v2749
      %v2751 = vpop.f32.mrb[0].mxu0
      %2752 = vmatprep.mubr.bf16.mxu0 0
      %2753 = vmatmul.mubr.bf16.gmra.mrb[0].mxu0 %v845
      %v2754 = vpop.f32.mrb[0].mxu0
      %v2755 = vadd.f32 0.0, %v2754
      %v2756 = vpop.f32.mrb[0].mxu0
      %v2757 = vpop.f32.mrb[0].mxu0
      %v2758 = vadd.f32 0.0, %v2757
      %v2759 = vpop.f32.mrb[0].mxu0
      %2760 = vmatprep.mubr.bf16.mxu0 0
      %2761 = vmatmul.mubr.bf16.gmra.mrb[0].mxu0 %v1965
      %v2762 = vpop.f32.mrb[0].mxu0
      %v2763 = vadd.f32 0.0, %v2762
      %v2764 = vpop.f32.mrb[0].mxu0
      %v2765 = vpop.f32.mrb[0].mxu0
      %v2766 = vadd.f32 0.0, %v2765
      %v2767 = vpop.f32.mrb[0].mxu0
      %2768 = vmatprep.mubr.bf16.mxu0 0
      %2769 = vmatmul.mubr.bf16.gmra.mrb[0].mxu0 %v2611
      %v2770 = vpop.f32.mrb[0].mxu0
      %v2771 = vadd.f32 0.0, %v2770
      %v2772 = vpop.f32.mrb[0].mxu0
      %v2773 = vpop.f32.mrb[0].mxu0
      %v2774 = vadd.f32 0.0, %v2773
      %v2775 = vpop.f32.mrb[0].mxu0
      %2776 = vdwg.mxu0
      %v2777 = vadd.f32 %v2549, %v2651
      %v2778 = vadd.f32 %v2550, %v2654
      %v2779 = vadd.f32 %v2551, %v2659
      %v2780 = vadd.f32 %v2552, %v2662
      %v2781 = vadd.f32 %v2553, %v2667
      %v2782 = vadd.f32 %v2554, %v2670
      %v2783 = vadd.f32 %v2555, %v2675
      %v2784 = vadd.f32 %v2556, %v2678
      %v2785 = vadd.f32 %v2557, %v2683
      %v2786 = vadd.f32 %v2558, %v2686
      %v2787 = vadd.f32 %v2559, %v2691
      %v2788 = vadd.f32 %v2560, %v2694
      %v2789 = vadd.f32 %v2561, %v2699
      %v2790 = vadd.f32 %v2562, %v2702
      %v2791 = vadd.f32 %v2563, %v2707
      %v2792 = vadd.f32 %v2564, %v2710
      %v2793 = vadd.f32 %v2565, %v2715
      %v2794 = vadd.f32 %v2566, %v2718
      %v2795 = vadd.f32 %v2567, %v2723
      %v2796 = vadd.f32 %v2568, %v2726
      %v2797 = vadd.f32 %v2569, %v2731
      %v2798 = vadd.f32 %v2570, %v2734
      %v2799 = vadd.f32 %v2571, %v2739
      %v2800 = vadd.f32 %v2572, %v2742
      %v2801 = vadd.f32 %v2573, %v2747
      %v2802 = vadd.f32 %v2574, %v2750
      %v2803 = vadd.f32 %v2575, %v2755
      %v2804 = vadd.f32 %v2576, %v2758
      %v2805 = vadd.f32 %v2577, %v2763
      %v2806 = vadd.f32 %v2578, %v2766
      %v2807 = vadd.f32 %v2579, %v2771
      %v2808 = vadd.f32 %v2580, %v2774
      %v2810 = vrot.slane %v357, 5
      %v2811 = vrot.slane %v2810, 4
      %v2812 = vrot.slane %v358, 5
      %v2813 = vsel %vm1322, %v2811, %v2812
      %v2814 = vrot.slane %v2812, 4
      %v2815 = vrot.slane %v359, 5
      %v2816 = vsel %vm1322, %v2814, %v2815
      %s2817 = scalar_lea.vmem %s1, 16
      %v2818 = vld [vmem:[%s2817] sm:$0x3]
      %v2819 = vunpack.c.l.b16 %v2813
      %v2820 = vunpack.c.l.b16 %v2816
      %v2821 = vpack.c.b16 %v2820, %v2819
      %v2823 = vsel %vm798, %v2821, 0
      %v2826 = vsel %vm847, %v2818, 0
      %2828 = vmatprep.subr.bf16.mxu0 0
      %2829 = vmatpush1.bf16.msra.mxu0 %v2826
      %2830 = vmatprep.subr.bf16.mxu0 0
      %2831 = vmatpush1.bf16.msra.mxu0 0
      %2832 = vmatprep.subr.bf16.mxu0 0
      %2833 = vmatpush1.bf16.msra.mxu0 0
      %2834 = vmatprep.subr.bf16.mxu0 0
      %2835 = vmatpush1.bf16.msra.mxu0 0
      %2836 = vmatprep.subr.bf16.mxu0 0
      %2837 = vmatpush1.bf16.msra.mxu0 0
      %2838 = vmatprep.subr.bf16.mxu0 0
      %2839 = vmatpush1.bf16.msra.mxu0 0
      %2840 = vmatprep.subr.bf16.mxu0 0
      %2841 = vmatpush1.bf16.msra.mxu0 0
      %2842 = vmatprep.subr.bf16.mxu0 0
      %2843 = vmatpush1.bf16.msra.mxu0 0
      %2844 = vmatprep.subr.bf16.mxu0 0
      %2845 = vmatpush1.bf16.msra.mxu0 0
      %2846 = vmatprep.subr.bf16.mxu0 0
      %2847 = vmatpush1.bf16.msra.mxu0 0
      %2848 = vmatprep.subr.bf16.mxu0 0
      %2849 = vmatpush1.bf16.msra.mxu0 0
      %2850 = vmatprep.subr.bf16.mxu0 0
      %2851 = vmatpush1.bf16.msra.mxu0 0
      %2852 = vmatprep.subr.bf16.mxu0 0
      %2853 = vmatpush1.bf16.msra.mxu0 0
      %2854 = vmatprep.subr.bf16.mxu0 0
      %2855 = vmatpush1.bf16.msra.mxu0 0
      %2856 = vmatprep.subr.bf16.mxu0 0
      %2857 = vmatpush1.bf16.msra.mxu0 0
      %2858 = vmatprep.subr.bf16.mxu0 0
      %2859 = vmatpush1.bf16.msra.mxu0 0
      %2860 = vmatprep.mubr.bf16.mxu0 0
      %2861 = vmatmul.mubr.bf16.gmra.mrb[0].mxu0 %v1492
      %v2862 = vpop.f32.mrb[0].mxu0
      %v2863 = vadd.f32 0.0, %v2862
      %v2864 = vpop.f32.mrb[0].mxu0
      %v2865 = vpop.f32.mrb[0].mxu0
      %v2866 = vadd.f32 0.0, %v2865
      %v2867 = vpop.f32.mrb[0].mxu0
      %2868 = vmatprep.mubr.bf16.mxu0 0
      %2869 = vmatmul.mubr.bf16.gmra.mrb[0].mxu0 %v1495
      %v2870 = vpop.f32.mrb[0].mxu0
      %v2871 = vadd.f32 0.0, %v2870
      %v2872 = vpop.f32.mrb[0].mxu0
      %v2873 = vpop.f32.mrb[0].mxu0
      %v2874 = vadd.f32 0.0, %v2873
      %v2875 = vpop.f32.mrb[0].mxu0
      %2876 = vmatprep.mubr.bf16.mxu0 0
      %2877 = vmatmul.mubr.bf16.gmra.mrb[0].mxu0 %v1498
      %v2878 = vpop.f32.mrb[0].mxu0
      %v2879 = vadd.f32 0.0, %v2878
      %v2880 = vpop.f32.mrb[0].mxu0
      %v2881 = vpop.f32.mrb[0].mxu0
      %v2882 = vadd.f32 0.0, %v2881
      %v2883 = vpop.f32.mrb[0].mxu0
      %2884 = vmatprep.mubr.bf16.mxu0 0
      %2885 = vmatmul.mubr.bf16.gmra.mrb[0].mxu0 %v1501
      %v2886 = vpop.f32.mrb[0].mxu0
      %v2887 = vadd.f32 0.0, %v2886
      %v2888 = vpop.f32.mrb[0].mxu0
      %v2889 = vpop.f32.mrb[0].mxu0
      %v2890 = vadd.f32 0.0, %v2889
      %v2891 = vpop.f32.mrb[0].mxu0
      %2892 = vmatprep.mubr.bf16.mxu0 0
      %2893 = vmatmul.mubr.bf16.gmra.mrb[0].mxu0 %v1504
      %v2894 = vpop.f32.mrb[0].mxu0
      %v2895 = vadd.f32 0.0, %v2894
      %v2896 = vpop.f32.mrb[0].mxu0
      %v2897 = vpop.f32.mrb[0].mxu0
      %v2898 = vadd.f32 0.0, %v2897
      %v2899 = vpop.f32.mrb[0].mxu0
      %2900 = vmatprep.mubr.bf16.mxu0 0
      %2901 = vmatmul.mubr.bf16.gmra.mrb[0].mxu0 %v1507
      %v2902 = vpop.f32.mrb[0].mxu0
      %v2903 = vadd.f32 0.0, %v2902
      %v2904 = vpop.f32.mrb[0].mxu0
      %v2905 = vpop.f32.mrb[0].mxu0
      %v2906 = vadd.f32 0.0, %v2905
      %v2907 = vpop.f32.mrb[0].mxu0
      %2908 = vmatprep.mubr.bf16.mxu0 0
      %2909 = vmatmul.mubr.bf16.gmra.mrb[0].mxu0 %v1510
      %v2910 = vpop.f32.mrb[0].mxu0
      %v2911 = vadd.f32 0.0, %v2910
      %v2912 = vpop.f32.mrb[0].mxu0
      %v2913 = vpop.f32.mrb[0].mxu0
      %v2914 = vadd.f32 0.0, %v2913
      %v2915 = vpop.f32.mrb[0].mxu0
      %2916 = vmatprep.mubr.bf16.mxu0 0
      %2917 = vmatmul.mubr.bf16.gmra.mrb[0].mxu0 %v1513
      %v2918 = vpop.f32.mrb[0].mxu0
      %v2919 = vadd.f32 0.0, %v2918
      %v2920 = vpop.f32.mrb[0].mxu0
      %v2921 = vpop.f32.mrb[0].mxu0
      %v2922 = vadd.f32 0.0, %v2921
      %v2923 = vpop.f32.mrb[0].mxu0
      %2924 = vmatprep.mubr.bf16.mxu0 0
      %2925 = vmatmul.mubr.bf16.gmra.mrb[0].mxu0 %v1516
      %v2926 = vpop.f32.mrb[0].mxu0
      %v2927 = vadd.f32 0.0, %v2926
      %v2928 = vpop.f32.mrb[0].mxu0
      %v2929 = vpop.f32.mrb[0].mxu0
      %v2930 = vadd.f32 0.0, %v2929
      %v2931 = vpop.f32.mrb[0].mxu0
      %2932 = vmatprep.mubr.bf16.mxu0 0
      %2933 = vmatmul.mubr.bf16.gmra.mrb[0].mxu0 %v1519
      %v2934 = vpop.f32.mrb[0].mxu0
      %v2935 = vadd.f32 0.0, %v2934
      %v2936 = vpop.f32.mrb[0].mxu0
      %v2937 = vpop.f32.mrb[0].mxu0
      %v2938 = vadd.f32 0.0, %v2937
      %v2939 = vpop.f32.mrb[0].mxu0
      %2940 = vmatprep.mubr.bf16.mxu0 0
      %2941 = vmatmul.mubr.bf16.gmra.mrb[0].mxu0 %v1522
      %v2942 = vpop.f32.mrb[0].mxu0
      %v2943 = vadd.f32 0.0, %v2942
      %v2944 = vpop.f32.mrb[0].mxu0
      %v2945 = vpop.f32.mrb[0].mxu0
      %v2946 = vadd.f32 0.0, %v2945
      %v2947 = vpop.f32.mrb[0].mxu0
      %2948 = vmatprep.mubr.bf16.mxu0 0
      %2949 = vmatmul.mubr.bf16.gmra.mrb[0].mxu0 %v1525
      %v2950 = vpop.f32.mrb[0].mxu0
      %v2951 = vadd.f32 0.0, %v2950
      %v2952 = vpop.f32.mrb[0].mxu0
      %v2953 = vpop.f32.mrb[0].mxu0
      %v2954 = vadd.f32 0.0, %v2953
      %v2955 = vpop.f32.mrb[0].mxu0
      %2956 = vmatprep.mubr.bf16.mxu0 0
      %2957 = vmatmul.mubr.bf16.gmra.mrb[0].mxu0 %v1528
      %v2958 = vpop.f32.mrb[0].mxu0
      %v2959 = vadd.f32 0.0, %v2958
      %v2960 = vpop.f32.mrb[0].mxu0
      %v2961 = vpop.f32.mrb[0].mxu0
      %v2962 = vadd.f32 0.0, %v2961
      %v2963 = vpop.f32.mrb[0].mxu0
      %2964 = vmatprep.mubr.bf16.mxu0 0
      %2965 = vmatmul.mubr.bf16.gmra.mrb[0].mxu0 %v1531
      %v2966 = vpop.f32.mrb[0].mxu0
      %v2967 = vadd.f32 0.0, %v2966
      %v2968 = vpop.f32.mrb[0].mxu0
      %v2969 = vpop.f32.mrb[0].mxu0
      %v2970 = vadd.f32 0.0, %v2969
      %v2971 = vpop.f32.mrb[0].mxu0
      %2972 = vmatprep.mubr.bf16.mxu0 0
      %2973 = vmatmul.mubr.bf16.gmra.mrb[0].mxu0 %v2177
      %v2974 = vpop.f32.mrb[0].mxu0
      %v2975 = vadd.f32 0.0, %v2974
      %v2976 = vpop.f32.mrb[0].mxu0
      %v2977 = vpop.f32.mrb[0].mxu0
      %v2978 = vadd.f32 0.0, %v2977
      %v2979 = vpop.f32.mrb[0].mxu0
      %2980 = vmatprep.mubr.bf16.mxu0 0
      %2981 = vmatmul.mubr.bf16.gmra.mrb[0].mxu0 %v2823
      %v2982 = vpop.f32.mrb[0].mxu0
      %v2983 = vadd.f32 0.0, %v2982
      %v2984 = vpop.f32.mrb[0].mxu0
      %v2985 = vpop.f32.mrb[0].mxu0
      %v2986 = vadd.f32 0.0, %v2985
      %v2987 = vpop.f32.mrb[0].mxu0
      %2988 = vdwg.mxu0
      %v2989 = vadd.f32 %v2777, %v2863
      %v2990 = vadd.f32 %v2778, %v2866
      %v2991 = vadd.f32 %v2779, %v2871
      %v2992 = vadd.f32 %v2780, %v2874
      %v2993 = vadd.f32 %v2781, %v2879
      %v2994 = vadd.f32 %v2782, %v2882
      %v2995 = vadd.f32 %v2783, %v2887
      %v2996 = vadd.f32 %v2784, %v2890
      %v2997 = vadd.f32 %v2785, %v2895
      %v2998 = vadd.f32 %v2786, %v2898
      %v2999 = vadd.f32 %v2787, %v2903
      %v3000 = vadd.f32 %v2788, %v2906
      %v3001 = vadd.f32 %v2789, %v2911
      %v3002 = vadd.f32 %v2790, %v2914
      %v3003 = vadd.f32 %v2791, %v2919
      %v3004 = vadd.f32 %v2792, %v2922
      %v3005 = vadd.f32 %v2793, %v2927
      %v3006 = vadd.f32 %v2794, %v2930
      %v3007 = vadd.f32 %v2795, %v2935
      %v3008 = vadd.f32 %v2796, %v2938
      %v3009 = vadd.f32 %v2797, %v2943
      %v3010 = vadd.f32 %v2798, %v2946
      %v3011 = vadd.f32 %v2799, %v2951
      %v3012 = vadd.f32 %v2800, %v2954
      %v3013 = vadd.f32 %v2801, %v2959
      %v3014 = vadd.f32 %v2802, %v2962
      %v3015 = vadd.f32 %v2803, %v2967
      %v3016 = vadd.f32 %v2804, %v2970
      %v3017 = vadd.f32 %v2805, %v2975
      %v3018 = vadd.f32 %v2806, %v2978
      %v3019 = vadd.f32 %v2807, %v2983
      %v3020 = vadd.f32 %v2808, %v2986
      %v3021 = vld [vmem:[%s2] sm:$0x1]
      %v3023 = vlaneseq
      %v3024 = vshrl.u32 %v3023, 7
      %v3025 = vsub.s32 0, %v3024
      %v3026 = vrot.slane %v3021, %v3025
      %v3028 = vadd.f32 %v2989, %v3026
      %v3029 = vadd.f32 %v2990, %v3026
      %v3030 = vadd.f32 %v2991, %v3026
      %v3031 = vadd.f32 %v2992, %v3026
      %v3032 = vadd.f32 %v2993, %v3026
      %v3033 = vadd.f32 %v2994, %v3026
      %v3034 = vadd.f32 %v2995, %v3026
      %v3035 = vadd.f32 %v2996, %v3026
      %v3036 = vadd.f32 %v2997, %v3026
      %v3037 = vadd.f32 %v2998, %v3026
      %v3038 = vadd.f32 %v2999, %v3026
      %v3039 = vadd.f32 %v3000, %v3026
      %v3040 = vadd.f32 %v3001, %v3026
      %v3041 = vadd.f32 %v3002, %v3026
      %v3042 = vadd.f32 %v3003, %v3026
      %v3043 = vadd.f32 %v3004, %v3026
      %v3044 = vadd.f32 %v3005, %v3026
      %v3045 = vadd.f32 %v3006, %v3026
      %v3046 = vadd.f32 %v3007, %v3026
      %v3047 = vadd.f32 %v3008, %v3026
      %v3048 = vadd.f32 %v3009, %v3026
      %v3049 = vadd.f32 %v3010, %v3026
      %v3050 = vadd.f32 %v3011, %v3026
      %v3051 = vadd.f32 %v3012, %v3026
      %v3052 = vadd.f32 %v3013, %v3026
      %v3053 = vadd.f32 %v3014, %v3026
      %v3054 = vadd.f32 %v3015, %v3026
      %v3055 = vadd.f32 %v3016, %v3026
      %v3056 = vadd.f32 %v3017, %v3026
      %v3057 = vadd.f32 %v3018, %v3026
      %v3058 = vadd.f32 %v3019, %v3026
      %v3059 = vadd.f32 %v3020, %v3026
      %v3060 = vmax.f32 %v3028, 0.0
      %v3061 = vmax.f32 %v3029, 0.0
      %v3062 = vmax.f32 %v3030, 0.0
      %v3063 = vmax.f32 %v3031, 0.0
      %v3064 = vmax.f32 %v3032, 0.0
      %v3065 = vmax.f32 %v3033, 0.0
      %v3066 = vmax.f32 %v3034, 0.0
      %v3067 = vmax.f32 %v3035, 0.0
      %v3068 = vmax.f32 %v3036, 0.0
      %v3069 = vmax.f32 %v3037, 0.0
      %v3070 = vmax.f32 %v3038, 0.0
      %v3071 = vmax.f32 %v3039, 0.0
      %v3072 = vmax.f32 %v3040, 0.0
      %v3073 = vmax.f32 %v3041, 0.0
      %v3074 = vmax.f32 %v3042, 0.0
      %v3075 = vmax.f32 %v3043, 0.0
      %v3076 = vmax.f32 %v3044, 0.0
      %v3077 = vmax.f32 %v3045, 0.0
      %v3078 = vmax.f32 %v3046, 0.0
      %v3079 = vmax.f32 %v3047, 0.0
      %v3080 = vmax.f32 %v3048, 0.0
      %v3081 = vmax.f32 %v3049, 0.0
      %v3082 = vmax.f32 %v3050, 0.0
      %v3083 = vmax.f32 %v3051, 0.0
      %v3084 = vmax.f32 %v3052, 0.0
      %v3085 = vmax.f32 %v3053, 0.0
      %v3086 = vmax.f32 %v3054, 0.0
      %v3087 = vmax.f32 %v3055, 0.0
      %v3088 = vmax.f32 %v3056, 0.0
      %v3089 = vmax.f32 %v3057, 0.0
      %v3090 = vmax.f32 %v3058, 0.0
      %v3091 = vmax.f32 %v3059, 0.0
      %v3092 = vadd.f32 %v3060, %v3061
      %v3093 = vadd.f32 %v3092, %v3062
      %v3094 = vadd.f32 %v3093, %v3063
      %v3095 = vadd.f32 %v3094, %v3064
      %v3096 = vadd.f32 %v3095, %v3065
      %v3097 = vadd.f32 %v3096, %v3066
      %v3098 = vadd.f32 %v3097, %v3067
      %v3099 = vadd.f32 %v3098, %v3068
      %v3100 = vadd.f32 %v3099, %v3069
      %v3101 = vadd.f32 %v3100, %v3070
      %v3102 = vadd.f32 %v3101, %v3071
      %v3103 = vadd.f32 %v3102, %v3072
      %v3104 = vadd.f32 %v3103, %v3073
      %v3105 = vadd.f32 %v3104, %v3074
      %v3106 = vadd.f32 %v3105, %v3075
      %v3107 = vadd.f32 %v3106, %v3076
      %v3108 = vadd.f32 %v3107, %v3077
      %v3109 = vadd.f32 %v3108, %v3078
      %v3110 = vadd.f32 %v3109, %v3079
      %v3111 = vadd.f32 %v3110, %v3080
      %v3112 = vadd.f32 %v3111, %v3081
      %v3113 = vadd.f32 %v3112, %v3082
      %v3114 = vadd.f32 %v3113, %v3083
      %v3115 = vadd.f32 %v3114, %v3084
      %v3116 = vadd.f32 %v3115, %v3085
      %v3117 = vadd.f32 %v3116, %v3086
      %v3118 = vadd.f32 %v3117, %v3087
      %v3119 = vadd.f32 %v3118, %v3088
      %v3120 = vadd.f32 %v3119, %v3089
      %v3121 = vadd.f32 %v3120, %v3090
      %v3122 = vadd.f32 %v3121, %v3091
      %v3123 = vrot.slane %v3122, 4
      %v3124 = vadd.f32 %v3122, %v3123
      %v3125 = vrot.slane %v3124, 2
      %v3126 = vadd.f32 %v3124, %v3125
      %v3127 = vrot.slane %v3126, 1
      %v3128 = vadd.f32 %v3126, %v3127
      %v3129 = vmul.f32 %v3128, 0.00390625
      %v3130 = vld [vmem:[%s3] sm:$0xff]
      %v3131 = vld [vmem:[%s3 + $0x8] sm:$0xff]
      %v3132 = vld [vmem:[%s3 + $0x10] sm:$0xff]
      %v3133 = vld [vmem:[%s3 + $0x18] sm:$0xff]
      %v3134 = vld [vmem:[%s3 + $0x20] sm:$0xff]
      %v3135 = vld [vmem:[%s3 + $0x28] sm:$0xff]
      %v3136 = vld [vmem:[%s3 + $0x30] sm:$0xff]
      %v3137 = vld [vmem:[%s3 + $0x38] sm:$0xff]
      %v3138 = vld [vmem:[%s3 + $0x40] sm:$0xff]
      %v3139 = vld [vmem:[%s3 + $0x48] sm:$0xff]
      %v3140 = vld [vmem:[%s3 + $0x50] sm:$0xff]
      %v3141 = vld [vmem:[%s3 + $0x58] sm:$0xff]
      %v3142 = vld [vmem:[%s3 + $0x60] sm:$0xff]
      %v3143 = vld [vmem:[%s3 + $0x68] sm:$0xff]
      %v3144 = vld [vmem:[%s3 + $0x70] sm:$0xff]
      %v3145 = vld [vmem:[%s3 + $0x78] sm:$0xff]
      %v3146 = vld [vmem:[%s4] sm:$0x1]
      %3147 = vmatprep.subr.mxu0 0.0
      %3148 = vmatpush1.msra.mxu0 %v3130
      %3149 = vmatprep.subr.mxu0 0.0
      %3150 = vmatpush1.msra.mxu0 %v3131
      %3151 = vmatprep.subr.mxu0 0.0
      %3152 = vmatpush1.msra.mxu0 %v3132
      %3153 = vmatprep.subr.mxu0 0.0
      %3154 = vmatpush1.msra.mxu0 %v3133
      %3155 = vmatprep.subr.mxu0 0.0
      %3156 = vmatpush1.msra.mxu0 %v3134
      %3157 = vmatprep.subr.mxu0 0.0
      %3158 = vmatpush1.msra.mxu0 %v3135
      %3159 = vmatprep.subr.mxu0 0.0
      %3160 = vmatpush1.msra.mxu0 %v3136
      %3161 = vmatprep.subr.mxu0 0.0
      %3162 = vmatpush1.msra.mxu0 %v3137
      %3163 = vmatprep.subr.mxu0 0.0
      %3164 = vmatpush1.msra.mxu0 %v3138
      %3165 = vmatprep.subr.mxu0 0.0
      %3166 = vmatpush1.msra.mxu0 %v3139
      %3167 = vmatprep.subr.mxu0 0.0
      %3168 = vmatpush1.msra.mxu0 %v3140
      %3169 = vmatprep.subr.mxu0 0.0
      %3170 = vmatpush1.msra.mxu0 %v3141
      %3171 = vmatprep.subr.mxu0 0.0
      %3172 = vmatpush1.msra.mxu0 %v3142
      %3173 = vmatprep.subr.mxu0 0.0
      %3174 = vmatpush1.msra.mxu0 %v3143
      %3175 = vmatprep.subr.mxu0 0.0
      %3176 = vmatpush1.msra.mxu0 %v3144
      %3177 = vmatprep.subr.mxu0 0.0
      %3178 = vmatpush1.msra.mxu0 %v3145
      %3179 = vmatprep.subr.mxu0 0.0
      %3180 = vmatpush1.msra.mxu0 0.0
      %3181 = vmatprep.subr.mxu0 0.0
      %3182 = vmatpush1.msra.mxu0 0.0
      %3183 = vmatprep.subr.mxu0 0.0
      %3184 = vmatpush1.msra.mxu0 0.0
      %3185 = vmatprep.subr.mxu0 0.0
      %3186 = vmatpush1.msra.mxu0 0.0
      %3187 = vmatprep.subr.mxu0 0.0
      %3188 = vmatpush1.msra.mxu0 0.0
      %3189 = vmatprep.subr.mxu0 0.0
      %3190 = vmatpush1.msra.mxu0 0.0
      %3191 = vmatprep.subr.mxu0 0.0
      %3192 = vmatpush1.msra.mxu0 0.0
      %3193 = vmatprep.subr.mxu0 0.0
      %3194 = vmatpush1.msra.mxu0 0.0
      %3195 = vmatprep.subr.mxu0 0.0
      %3196 = vmatpush1.msra.mxu0 0.0
      %3197 = vmatprep.subr.mxu0 0.0
      %3198 = vmatpush1.msra.mxu0 0.0
      %3199 = vmatprep.subr.mxu0 0.0
      %3200 = vmatpush1.msra.mxu0 0.0
      %3201 = vmatprep.subr.mxu0 0.0
      %3202 = vmatpush1.msra.mxu0 0.0
      %3203 = vmatprep.subr.mxu0 0.0
      %3204 = vmatpush1.msra.mxu0 0.0
      %3205 = vmatprep.subr.mxu0 0.0
      %3206 = vmatpush1.msra.mxu0 0.0
      %3207 = vmatprep.subr.mxu0 0.0
      %3208 = vmatpush1.msra.mxu0 0.0
      %3209 = vmatprep.subr.mxu0 0.0
      %3210 = vmatpush1.msra.mxu0 0.0
      %3211 = vmatprep.mubr.f32.mxu0 0.0
      %3212 = vmatmul.mubr.f32.gmra.mrb[0].mxu0 %v3129
      %v3213 = vpop.f32.mrb[0].mxu0
      %v3214 = vadd.f32 %v3146, %v3213
      %v3215 = vpop.f32.mrb[0].mxu0
      %3216 = vdwg.mxu0
      %s3217 = sld [smem:[#allocation2]]
      %vm3218 = vcmp.ge.f32.partialorder %v3214, 0.0
      %v3219 = vstv %s3217
      %v3220 = vmul.f32 %v3219, %v3214
      %v3221 = vsel %vm3218, %v3214, %v3220
      %v3222 = vld [vmem:[%s5] sm:$0xff]
      %v3223 = vld [vmem:[%s5 + $0x8] sm:$0xff]
      %v3224 = vld [vmem:[%s5 + $0x10] sm:$0xff]
      %v3225 = vld [vmem:[%s5 + $0x18] sm:$0xff]
      %v3226 = vld [vmem:[%s5 + $0x20] sm:$0xff]
      %v3227 = vld [vmem:[%s5 + $0x28] sm:$0xff]
      %v3228 = vld [vmem:[%s5 + $0x30] sm:$0xff]
      %v3229 = vld [vmem:[%s5 + $0x38] sm:$0xff]
      %v3230 = vld [vmem:[%s5 + $0x40] sm:$0xff]
      %v3231 = vld [vmem:[%s5 + $0x48] sm:$0xff]
      %v3232 = vld [vmem:[%s5 + $0x50] sm:$0xff]
      %v3233 = vld [vmem:[%s5 + $0x58] sm:$0xff]
      %v3234 = vld [vmem:[%s5 + $0x60] sm:$0xff]
      %v3235 = vld [vmem:[%s5 + $0x68] sm:$0xff]
      %v3236 = vld [vmem:[%s5 + $0x70] sm:$0xff]
      %v3237 = vld [vmem:[%s5 + $0x78] sm:$0xff]
      %v3238 = vld [vmem:[%s6] sm:$0x1]
      %3239 = vmatprep.subr.mxu0 0.0
      %3240 = vmatpush1.msra.mxu0 %v3222
      %3241 = vmatprep.subr.mxu0 0.0
      %3242 = vmatpush1.msra.mxu0 %v3223
      %3243 = vmatprep.subr.mxu0 0.0
      %3244 = vmatpush1.msra.mxu0 %v3224
      %3245 = vmatprep.subr.mxu0 0.0
      %3246 = vmatpush1.msra.mxu0 %v3225
      %3247 = vmatprep.subr.mxu0 0.0
      %3248 = vmatpush1.msra.mxu0 %v3226
      %3249 = vmatprep.subr.mxu0 0.0
      %3250 = vmatpush1.msra.mxu0 %v3227
      %3251 = vmatprep.subr.mxu0 0.0
      %3252 = vmatpush1.msra.mxu0 %v3228
      %3253 = vmatprep.subr.mxu0 0.0
      %3254 = vmatpush1.msra.mxu0 %v3229
      %3255 = vmatprep.subr.mxu0 0.0
      %3256 = vmatpush1.msra.mxu0 %v3230
      %3257 = vmatprep.subr.mxu0 0.0
      %3258 = vmatpush1.msra.mxu0 %v3231
      %3259 = vmatprep.subr.mxu0 0.0
      %3260 = vmatpush1.msra.mxu0 %v3232
      %3261 = vmatprep.subr.mxu0 0.0
      %3262 = vmatpush1.msra.mxu0 %v3233
      %3263 = vmatprep.subr.mxu0 0.0
      %3264 = vmatpush1.msra.mxu0 %v3234
      %3265 = vmatprep.subr.mxu0 0.0
      %3266 = vmatpush1.msra.mxu0 %v3235
      %3267 = vmatprep.subr.mxu0 0.0
      %3268 = vmatpush1.msra.mxu0 %v3236
      %3269 = vmatprep.subr.mxu0 0.0
      %3270 = vmatpush1.msra.mxu0 %v3237
      %3271 = vmatprep.subr.mxu0 0.0
      %3272 = vmatpush1.msra.mxu0 0.0
      %3273 = vmatprep.subr.mxu0 0.0
      %3274 = vmatpush1.msra.mxu0 0.0
      %3275 = vmatprep.subr.mxu0 0.0
      %3276 = vmatpush1.msra.mxu0 0.0
      %3277 = vmatprep.subr.mxu0 0.0
      %3278 = vmatpush1.msra.mxu0 0.0
      %3279 = vmatprep.subr.mxu0 0.0
      %3280 = vmatpush1.msra.mxu0 0.0
      %3281 = vmatprep.subr.mxu0 0.0
      %3282 = vmatpush1.msra.mxu0 0.0
      %3283 = vmatprep.subr.mxu0 0.0
      %3284 = vmatpush1.msra.mxu0 0.0
      %3285 = vmatprep.subr.mxu0 0.0
      %3286 = vmatpush1.msra.mxu0 0.0
      %3287 = vmatprep.subr.mxu0 0.0
      %3288 = vmatpush1.msra.mxu0 0.0
      %3289 = vmatprep.subr.mxu0 0.0
      %3290 = vmatpush1.msra.mxu0 0.0
      %3291 = vmatprep.subr.mxu0 0.0
      %3292 = vmatpush1.msra.mxu0 0.0
      %3293 = vmatprep.subr.mxu0 0.0
      %3294 = vmatpush1.msra.mxu0 0.0
      %3295 = vmatprep.subr.mxu0 0.0
      %3296 = vmatpush1.msra.mxu0 0.0
      %3297 = vmatprep.subr.mxu0 0.0
      %3298 = vmatpush1.msra.mxu0 0.0
      %3299 = vmatprep.subr.mxu0 0.0
      %3300 = vmatpush1.msra.mxu0 0.0
      %3301 = vmatprep.subr.mxu0 0.0
      %3302 = vmatpush1.msra.mxu0 0.0
      %3303 = vmatprep.mubr.f32.mxu0 0.0
      %3304 = vmatmul.mubr.f32.gmra.mrb[0].mxu0 %v3221
      %v3305 = vpop.f32.mrb[0].mxu0
      %v3306 = vadd.f32 %v3238, %v3305
      %v3307 = vpop.f32.mrb[0].mxu0
      %3308 = vdwg.mxu0
      %v3309 = vlaneseq
      %v3310 = vshrl.u32 %v3309, 7
      %v3311 = vsub.s32 0, %v3310
      %v3312 = vrot.slane %v3306, %v3311
      %vm3313 = vcmask 64512
      %3314 = vst.msk [vmem:[%s304] sm:$0xff] %vm3313, %v3312
      %p3315 = scmp.lt.s32.totalorder %s20, 1
      %s3316 = scalar_select %p3315, %s20, 1
      %s3317 = smul.addr %s3316, 8
      %s3318 = scalar_lea.vmem %s8, %s3317
      // Predicated region
      $region53: #{image_cnn_forward.1} parent=51 // pred_check
        %p3319 = pneg %p211
      $region54: #{image_cnn_forward.1} parent=51 // pred_check_branch
        %3321 = sbr.rel (%p3319) target = $region56
      $region55: #{image_cnn_forward.1} parent=51 // pred_region
        _
      $region56: #{image_cnn_forward.1} parent=51 // pred_fallthru
        _
    $region52: #{image_cnn_forward.1} parent=5 // pred_fallthru
      _
    %p3322 = scmp.le.s32.totalorder 2, %s15
    // Predicated region
    $region57: #{image_cnn_forward.1} parent=5 // pred_check
      %p3323 = pneg %p3322
    $region58: #{image_cnn_forward.1} parent=5 // pred_check_branch
      %3325 = sbr.rel (%p3323) target = $region60
    $region59: #{image_cnn_forward.1} parent=5 // pred_region
      %s3326 = ssub.s32 %s15, 2
      // Predicated region
      $region61: #{image_cnn_forward.1} parent=59 // pred_check
        %p3327 = pneg %p217
      $region62: #{image_cnn_forward.1} parent=59 // pred_check_branch
        %3329 = sbr.rel (%p3327) target = $region64
      $region63: #{image_cnn_forward.1} parent=59 // pred_region
        %p3330 = scmp.lt.s32.totalorder %s21, 1
        %s3331 = scalar_select %p3330, %s21, 1
        %s3332 = smul.addr %s3331, 8
        %s3333 = scalar_lea.vmem %s8, %s3332
      $region64: #{image_cnn_forward.1} parent=59 // pred_fallthru
        _
    $region60: #{image_cnn_forward.1} parent=5 // pred_fallthru
      _
  $region6: #{image_cnn_forward.1} parent=0 // loop_footer
    %s19 = sadd.s32 1, %s15
  $region7: #{image_cnn_forward.1} parent=0 // loop_footer_branch
    %14 = sbr.rel target = $region3
  $region8: #{image_cnn_forward.1} parent=0 // loop_exit
    _

</llo_original>
